<compile_context>
chip_gen: v5e
topology: v5e:2x2
jax: 0.10.0
libtpu: 0.0.40
codegen_flags: <defaults>
</compile_context>

<pallas_src>
import numpy as np
import jax
import jax.numpy as jnp
from jax import lax
from jax.experimental import pallas as pl
from jax.experimental.pallas import tpu as pltpu

PRIMITIVES = ['none', 'skip_connect', 'avg_pool_3x3', 'max_pool_3x3', 'conv_3x3']

_BN_EPS = 1e-5
# Single grid point: BN epilogues need full-row statistics and all activations here are tiny
# (<= 128 rows), so one VMEM-resident block per call is the right tiling at this scale.
_CPARAMS = pltpu.CompilerParams(dimension_semantics=("arbitrary",))


# ----------------------------- fused Pallas kernels ------------------------

def _make_conv_bn_kernel(with_relu, with_bn):
    # ReLU(patches) @ W  -> (train-mode, affine=False) BN over rows -> * arch-weight scale.
    # TODO(synk): operands kept f32 (bf16 MXU cast gives no benefit at K<=72, Cout<=16 and
    # avoids odd-shape packing edge cases).
    def kernel(scale_ref, a_ref, w_ref, o_ref):
        a = a_ref[...]
        if with_relu:
            a = jnp.maximum(a, 0.0)
        y = jnp.dot(a, w_ref[...], preferred_element_type=jnp.float32)
        if with_bn:
            mean = jnp.mean(y, axis=0, keepdims=True)
            var = jnp.mean((y - mean) * (y - mean), axis=0, keepdims=True)
            y = (y - mean) * lax.rsqrt(var + _BN_EPS)
        o_ref[...] = y * scale_ref[...]
    return kernel


def fused_conv_bn(patches, w, scale, *, with_relu, with_bn=True):
    M, K = patches.shape
    Cout = w.shape[1]
    scale_row = jnp.broadcast_to(jnp.asarray(scale, jnp.float32), (1, Cout))
    return pl.pallas_call(
        _make_conv_bn_kernel(with_relu, with_bn),
        out_shape=jax.ShapeDtypeStruct((M, Cout), jnp.float32),
        grid=(1,),
        in_specs=[pl.BlockSpec((1, Cout), lambda i: (0, 0)),
                  pl.BlockSpec((M, K), lambda i: (0, 0)),
                  pl.BlockSpec((K, Cout), lambda i: (0, 0))],
        out_specs=pl.BlockSpec((M, Cout), lambda i: (0, 0)),
        compiler_params=_CPARAMS,
    )(scale_row, patches, w)


def _make_pool_kernel(kk, mode, with_bn, with_div):
    # Lane-dense pooling: reduce the k*k window taps (leading axis) on (kk, M, C) -> (M, C),
    # optional count_include_pad=False divide, BN over rows, arch-weight scale.
    def kernel(*refs):
        scale_ref, p_ref = refs[0], refs[1]
        if with_div:
            invc_ref, o_ref = refs[2], refs[3]
        else:
            o_ref = refs[2]
        red = p_ref[0]
        for t in range(1, kk):
            nxt = p_ref[t]
            red = jnp.maximum(red, nxt) if mode == 'max' else red + nxt
        if with_div:
            red = red * invc_ref[...]
        if with_bn:
            mean = jnp.mean(red, axis=0, keepdims=True)
            var = jnp.mean((red - mean) * (red - mean), axis=0, keepdims=True)
            red = (red - mean) * lax.rsqrt(var + _BN_EPS)
        o_ref[...] = red * scale_ref[...]
    return kernel


def pool2d(x, k, stride, padding, mode, scale=1.0, with_bn=False):
    N, H, W, C = x.shape
    pad_val = -1e30 if mode == 'max' else 0.0
    xp = jnp.pad(x, ((0, 0), (padding, padding), (padding, padding), (0, 0)),
                 constant_values=pad_val)
    Ho = (H + 2 * padding - k) // stride + 1
    Wo = (W + 2 * padding - k) // stride + 1
    taps = []
    for i in range(k):
        for j in range(k):
            taps.append(xp[:, i:i + stride * (Ho - 1) + 1:stride,
                              j:j + stride * (Wo - 1) + 1:stride, :])
    M = N * Ho * Wo
    patches = jnp.stack(taps, axis=0).reshape(k * k, M, C)

    with_div = (mode == 'avg')
    scale_row = jnp.broadcast_to(jnp.asarray(scale, jnp.float32), (1, C))
    args = [scale_row, patches]
    in_specs = [pl.BlockSpec((1, C), lambda i: (0, 0)),
                pl.BlockSpec((k * k, M, C), lambda i: (0, 0, 0))]
    if with_div:
        # count_include_pad=False divisor (static, computed in numpy at trace time).
        cnt = np.zeros((Ho, Wo), np.float32)
        for i in range(k):
            for j in range(k):
                oh = np.arange(Ho) * stride + i - padding
                ow = np.arange(Wo) * stride + j - padding
                cnt += (((oh >= 0) & (oh < H)).astype(np.float32)[:, None] *
                        ((ow >= 0) & (ow < W)).astype(np.float32)[None, :])
        inv = np.broadcast_to((1.0 / cnt).reshape(1, Ho * Wo, 1), (N, Ho * Wo, C))
        args.append(jnp.asarray(inv.reshape(M, C), jnp.float32))
        in_specs.append(pl.BlockSpec((M, C), lambda i: (0, 0)))

    out = pl.pallas_call(
        _make_pool_kernel(k * k, mode, with_bn, with_div),
        out_shape=jax.ShapeDtypeStruct((M, C), jnp.float32),
        grid=(1,),
        in_specs=in_specs,
        out_specs=pl.BlockSpec((M, C), lambda i: (0, 0)),
        compiler_params=_CPARAMS,
    )(*args)
    return out.reshape(N, Ho, Wo, C)


def _gap_fc_kernel(x_ref, w_ref, b_ref, o_ref):
    # Global average pool over H*W (lane-dense: C stays on the lane axis) fused with the
    # Linear classifier.
    pooled = jnp.mean(x_ref[...], axis=1)                       # (N, C)
    o_ref[...] = jnp.dot(pooled, w_ref[...],
                         preferred_element_type=jnp.float32) + b_ref[...]


def gap_classifier(x_nhwc, w, b):
    N, H, W, C = x_nhwc.shape
    nc = w.shape[1]
    x3 = x_nhwc.reshape(N, H * W, C)
    return pl.pallas_call(
        _gap_fc_kernel,
        out_shape=jax.ShapeDtypeStruct((N, nc), jnp.float32),
        grid=(1,),
        in_specs=[pl.BlockSpec((N, H * W, C), lambda i: (0, 0, 0)),
                  pl.BlockSpec((C, nc), lambda i: (0, 0)),
                  pl.BlockSpec((1, nc), lambda i: (0, 0))],
        out_specs=pl.BlockSpec((N, nc), lambda i: (0, 0)),
        compiler_params=_CPARAMS,
    )(x3, w, b.reshape(1, nc))


# ----------------------------- glue (im2col / shuffle) ---------------------

def _im2col(x, kh, kw, stride, padding):
    # TODO(synk): patches are still materialized by XLA (kh*kw x extra HBM traffic); an
    # in-kernel shifted-slice K-loop would remove it, but launch count / fusion dominates here.
    N, H, W, C = x.shape
    xp = jnp.pad(x, ((0, 0), (padding, padding), (padding, padding), (0, 0)))
    Ho = (H + 2 * padding - kh) // stride + 1
    Wo = (W + 2 * padding - kw) // stride + 1
    cols = []
    for i in range(kh):
        for j in range(kw):
            cols.append(xp[:, i:i + stride * (Ho - 1) + 1:stride,
                              j:j + stride * (Wo - 1) + 1:stride, :])
    patches = jnp.stack(cols, axis=3)                            # (N, Ho, Wo, kh*kw, C)
    return patches.reshape(N * Ho * Wo, kh * kw * C), Ho, Wo


def relu_conv_bn_apply(x, w2d, k, stride, padding, scale, with_relu=True, with_bn=True):
    # ReLU(pad(x)) == pad(ReLU(x)) since ReLU(0)=0, so ReLU is applied to the patches in-kernel.
    N = x.shape[0]
    Cout = w2d.shape[1]
    cols, Ho, Wo = _im2col(x, k, k, stride, padding)
    out = fused_conv_bn(cols, w2d, scale, with_relu=with_relu, with_bn=with_bn)
    return out.reshape(N, Ho, Wo, Cout)


def channel_shuffle_nhwc(x, groups):
    # TODO(synk): kept as an XLA reshape/transpose; folding it into the next kernel's load
    # indexing is possible but the tensors here are tiny.
    N, H, W, C = x.shape
    x = x.reshape(N, H, W, groups, C // groups)
    x = jnp.swapaxes(x, 3, 4)
    return x.reshape(N, H, W, C)


# ----------------------------- parameter factory ---------------------------

class ParamGen:
    def __init__(self, key):
        self._key = key

    def normal(self, shape, scale=0.1):
        self._key, sub = jax.random.split(self._key)
        return scale * jax.random.normal(sub, shape, dtype=jnp.float32)


# ----------------------------- DARTS building blocks -----------------------

def make_relu_conv_bn(pg, C_in, C_out, kernel, stride, padding):
    w = pg.normal((kernel * kernel * C_in, C_out))

    def apply(x, scale=1.0):
        return relu_conv_bn_apply(x, w, kernel, stride, padding, scale)
    return apply


def make_factorized_reduce(pg, C_in, C_out):
    # concat(conv1(x[::2, ::2]), conv2(x[1::2, 1::2])) == [a1 a2] @ blockdiag(w1, w2),
    # and BN is per-channel, so the whole op reuses the fused relu-matmul-BN kernel.
    half = C_out // 2
    w1 = pg.normal((C_in, half))
    w2 = pg.normal((C_in, C_out - half))
    wb = jnp.zeros((2 * C_in, C_out), jnp.float32)
    wb = wb.at[:C_in, :half].set(w1).at[C_in:, half:].set(w2)

    def apply(x, scale=1.0):
        N, H, W, C = x.shape
        a1 = x[:, ::2, ::2, :]
        a2 = x[:, 1::2, 1::2, :]
        Ho, Wo = a1.shape[1], a1.shape[2]
        a = jnp.concatenate([a1, a2], axis=-1).reshape(N * Ho * Wo, 2 * C)
        out = fused_conv_bn(a, wb, scale, with_relu=True, with_bn=True)
        return out.reshape(N, Ho, Wo, C_out)
    return apply


def make_op(pg, primitive, C_in, stride):
    if primitive == 'none':
        return None                      # exact-zero contribution: dropped at trace time
    if primitive == 'skip_connect':
        if stride == 1:
            return lambda x, w: w * x
        return make_factorized_reduce(pg, C_in, C_in)
    if primitive == 'avg_pool_3x3':
        return lambda x, w: pool2d(x, 3, stride, 1, 'avg', scale=w, with_bn=True)
    if primitive == 'max_pool_3x3':
        return lambda x, w: pool2d(x, 3, stride, 1, 'max', scale=w, with_bn=True)
    if primitive == 'conv_3x3':
        f = make_relu_conv_bn(pg, C_in, C_in, 3, stride, 1)
        return lambda x, w: f(x, w)
    raise ValueError(primitive)


def make_mixed_op(pg, C, stride):
    k = 2
    C_in = k if C < k else C // k
    ops = [(i, make_op(pg, prim, C_in, stride)) for i, prim in enumerate(PRIMITIVES)]

    def apply(x, weights):
        dim2 = x.shape[-1]
        if dim2 < k:  # PC-DARTS corner case (not reached with this config)
            out = None
            for i, op in ops:
                if op is None:
                    continue
                y = op(x, weights[i])
                out = y if out is None else out + y
            return out
        xtemp = x[..., :dim2 // k]
        xtemp2 = x[..., dim2 // k:]
        temp1 = None
        for i, op in ops:
            if op is None:
                continue
            y = op(xtemp, weights[i])       # arch weight fused into the op's kernel epilogue
            temp1 = y if temp1 is None else temp1 + y
        if temp1.shape[1] == x.shape[1]:
            ans = jnp.concatenate([temp1, xtemp2], axis=-1)
        else:
            ans = jnp.concatenate([temp1, pool2d(xtemp2, 2, 2, 0, 'max')], axis=-1)
        return channel_shuffle_nhwc(ans, k)
    return apply


def make_cell(pg, C_prev_prev, C_prev, C_curr, reduction, reduction_prev, input_dim, nodes):
    C_curr_cell = C_curr * 2 if reduction else C_curr
    if reduction_prev:
        pre0 = make_factorized_reduce(pg, C_prev_prev, C_curr_cell)
    else:
        pre0 = make_relu_conv_bn(pg, C_prev_prev, C_curr_cell, 1, 1, 0)
    pre1 = make_relu_conv_bn(pg, C_prev, C_curr_cell, 1, 1, 0)

    in_index = [list(range(2 + n)) for n in range(nodes)]
    ops, edge_map = [], {}
    for cur, in_nodes in enumerate(in_index):
        edge_map[cur] = {}
        for in_node in in_nodes:
            stride = 2 if (reduction and in_node < 2) else 1
            ops.append(make_mixed_op(pg, C_curr_cell, stride))
            edge_map[cur][in_node] = len(ops) - 1

    betas_mask = np.full((nodes, nodes + 2), -np.inf, dtype=np.float32)
    for cur, in_nodes in enumerate(in_index):
        for in_node in in_nodes:
            betas_mask[cur, in_node] = 0.0

    def apply(s0, s1, weights1, weights2):
        s0 = pre0(s0)
        s1 = pre1(s1)
        states = [s0, s1]
        for cur, in_nodes in enumerate(in_index):
            s = None
            for in_node in in_nodes:
                edge_id = edge_map[cur][in_node]
                h = states[in_node]
                y = weights2[edge_id] * ops[edge_id](h, weights1[edge_id])
                s = y if s is None else s + y
            states.append(s)
        return jnp.concatenate(states[2:], axis=-1)

    return dict(apply=apply, reduction=reduction, C_prev=C_prev,
                C_out=nodes * C_curr_cell, C_curr=C_curr_cell,
                output_dim=input_dim // 2 if reduction else input_dim,
                num_edges=len(ops), betas_mask=betas_mask)


# ----------------------------- Network -------------------------------------

def make_network(key, C=4, num_classes=2, layers=3, input_dim=8, nodes=2, stem_multiplier=2):
    pg = ParamGen(key)
    shrink = [layers // 3, 2 * layers // 3]
    C_stem = stem_multiplier * C
    stem_w = pg.normal((3 * 3 * 1, C_stem))  # Conv2d(1, C_stem, 3, pad=1, bias=False)

    cells = []
    C_pp, C_p, C_c, red_prev, dim = C_stem, C_stem, C, False, input_dim
    for i in range(layers):
        reduction = i in shrink
        cell = make_cell(pg, C_pp, C_p, C_c, reduction, red_prev, dim, nodes)
        cells.append(cell)
        C_pp, C_p, C_c, red_prev, dim = (cell['C_prev'], cell['C_out'],
                                         cell['C_curr'], reduction, cell['output_dim'])

    num_ops = len(PRIMITIVES)
    num_edges = cells[0]['num_edges']
    # arch parameters: 0.001 * randn (deterministic)
    alphas_normal = pg.normal((num_edges, num_ops), scale=0.001)
    betas_normal = pg.normal((nodes, nodes + 2), scale=0.001)
    alphas_reduce = pg.normal((num_edges, num_ops), scale=0.001)
    betas_reduce = pg.normal((nodes, nodes + 2), scale=0.001)
    clf_w = pg.normal((C_p, num_classes))
    clf_b = jnp.zeros((num_classes,), dtype=jnp.float32)

    def forward(x_nchw):
        x = jnp.transpose(x_nchw, (0, 2, 3, 1)).astype(jnp.float32)   # NCHW -> NHWC
        # stem: conv3x3 (no relu) + BN, single fused kernel
        s = relu_conv_bn_apply(x, stem_w, 3, 1, 1, 1.0, with_relu=False, with_bn=True)
        s0 = s1 = s
        for cell in cells:
            if cell['reduction']:
                a, b = alphas_reduce, betas_reduce
            else:
                a, b = alphas_normal, betas_normal
            # alphas_mask is all-zero here (every candidate op is present on every edge)
            weights1 = jax.nn.softmax(a, axis=-1)
            w2_full = jax.nn.softmax(b + cell['betas_mask'], axis=-1)
            rows, cols_ = np.nonzero(cell['betas_mask'] == 0)          # static positions
            weights2 = w2_full[rows, cols_]                            # edge order
            s0, s1 = s1, cell['apply'](s0, s1, weights1, weights2)
        return gap_classifier(s1, clf_w, clf_b)                        # fused GAP + Linear

    return jax.jit(forward)


if __name__ == "__main__":
    key = jax.random.PRNGKey(0)
    k_param, k_in = jax.random.split(key)
    net = make_network(k_param, C=4, num_classes=2, layers=3, input_dim=8,
                       nodes=2, stem_multiplier=2)
    # Network's stem expects a single input channel (Conv2d(1, ...)).
    x = jax.random.normal(k_in, (2, 1, 8, 8), dtype=jnp.float32)  # NCHW
    logits = net(x)
    logits = jax.block_until_ready(logits)
    assert logits.shape == (2, 2)
    print("KERNEL_OK")
</pallas_src>

<mosaic_0001>
module attributes {stable_mosaic.version = 11 : i64} {
  func.func @kernel(%arg0: i32, %arg1: memref<1x8xf32, #tpu.memory_space<vmem>>, %arg2: memref<128x9xf32, #tpu.memory_space<vmem>>, %arg3: memref<9x8xf32, #tpu.memory_space<vmem>>, %arg4: memref<128x8xf32, #tpu.memory_space<vmem>>) attributes {dimension_semantics = [#tpu.dimension_semantics<arbitrary>], iteration_bounds = array<i64: 1>, scalar_prefetch = 0 : i64, scratch_operands = 0 : i64, tpu.core_type = #tpu.core_type<tc>, window_params = [{pipeline_mode = #tpu.pipeline_mode<synchronous>, transform_indices = @transform_0, window_bounds = array<i64: 1, 8>}, {pipeline_mode = #tpu.pipeline_mode<synchronous>, transform_indices = @transform_1, window_bounds = array<i64: 128, 9>}, {pipeline_mode = #tpu.pipeline_mode<synchronous>, transform_indices = @transform_2, window_bounds = array<i64: 9, 8>}, {pipeline_mode = #tpu.pipeline_mode<synchronous>, transform_indices = @transform_3, window_bounds = array<i64: 128, 8>}]} {
    %c0 = arith.constant 0 : index
    %c0_0 = arith.constant 0 : index
    %0 = vector.load %arg2[%c0, %c0_0] : memref<128x9xf32, #tpu.memory_space<vmem>>, vector<128x9xf32>
    %c0_1 = arith.constant 0 : index
    %c0_2 = arith.constant 0 : index
    %1 = vector.load %arg3[%c0_1, %c0_2] : memref<9x8xf32, #tpu.memory_space<vmem>>, vector<9x8xf32>
    %cst = arith.constant dense<0.000000e+00> : vector<128x8xf32>
    %2 = tpu.matmul %0, %1, %cst {dimension_numbers = #tpu.dot_dimension_numbers<[1], [0], [0], [1], [0, 0, 1, 1], [], []>} : vector<128x9xf32>, vector<9x8xf32>, vector<128x8xf32> -> vector<128x8xf32>
    %cst_3 = arith.constant dense<0.000000e+00> : vector<8xf32>
    %3 = vector.multi_reduction <add>, %2, %cst_3 [0] : vector<128x8xf32> to vector<8xf32>
    %4 = vector.shape_cast %3 : vector<8xf32> to vector<1x8xf32>
    %cst_4 = arith.constant 1.280000e+02 : f32
    %5 = vector.broadcast %cst_4 : f32 to vector<1x8xf32>
    %6 = arith.divf %4, %5 : vector<1x8xf32>
    %7 = vector.broadcast %6 : vector<1x8xf32> to vector<128x8xf32>
    %8 = arith.subf %2, %7 : vector<128x8xf32>
    %9 = vector.broadcast %6 : vector<1x8xf32> to vector<128x8xf32>
    %10 = arith.subf %2, %9 : vector<128x8xf32>
    %11 = arith.mulf %8, %10 : vector<128x8xf32>
    %cst_5 = arith.constant dense<0.000000e+00> : vector<8xf32>
    %12 = vector.multi_reduction <add>, %11, %cst_5 [0] : vector<128x8xf32> to vector<8xf32>
    %13 = vector.shape_cast %12 : vector<8xf32> to vector<1x8xf32>
    %cst_6 = arith.constant 1.280000e+02 : f32
    %14 = vector.broadcast %cst_6 : f32 to vector<1x8xf32>
    %15 = arith.divf %13, %14 : vector<1x8xf32>
    %16 = vector.broadcast %6 : vector<1x8xf32> to vector<128x8xf32>
    %17 = arith.subf %2, %16 : vector<128x8xf32>
    %cst_7 = arith.constant 9.99999974E-6 : f32
    %18 = vector.broadcast %cst_7 : f32 to vector<1x8xf32>
    %19 = arith.addf %15, %18 : vector<1x8xf32>
    %20 = math.rsqrt %19 : vector<1x8xf32>
    %21 = vector.broadcast %20 : vector<1x8xf32> to vector<128x8xf32>
    %22 = arith.mulf %17, %21 : vector<128x8xf32>
    %c0_8 = arith.constant 0 : index
    %c0_9 = arith.constant 0 : index
    %23 = vector.load %arg1[%c0_8, %c0_9] : memref<1x8xf32, #tpu.memory_space<vmem>>, vector<1x8xf32>
    %24 = vector.broadcast %23 : vector<1x8xf32> to vector<128x8xf32>
    %25 = arith.mulf %22, %24 : vector<128x8xf32>
    %c0_10 = arith.constant 0 : index
    %c0_11 = arith.constant 0 : index
    %26 = vector.load %arg4[%c0_10, %c0_11] : memref<128x8xf32, #tpu.memory_space<vmem>>, vector<128x8xf32>
    tpu.vector_store %arg4[%c0_10, %c0_11], %25 {strides = array<i32>} : memref<128x8xf32, #tpu.memory_space<vmem>>, vector<128x8xf32>,
    return
  }
  func.func @transform_0(%arg0: i32) -> (i32, i32) {
    %c0_i32 = arith.constant 0 : i32
    %c0_i32_0 = arith.constant 0 : i32
    %c0_i32_1 = arith.constant 0 : i32
    return %c0_i32, %c0_i32_0 : i32, i32
  }
  func.func @transform_1(%arg0: i32) -> (i32, i32) {
    %c0_i32 = arith.constant 0 : i32
    %c0_i32_0 = arith.constant 0 : i32
    %c0_i32_1 = arith.constant 0 : i32
    return %c0_i32, %c0_i32_0 : i32, i32
  }
  func.func @transform_2(%arg0: i32) -> (i32, i32) {
    %c0_i32 = arith.constant 0 : i32
    %c0_i32_0 = arith.constant 0 : i32
    %c0_i32_1 = arith.constant 0 : i32
    return %c0_i32, %c0_i32_0 : i32, i32
  }
  func.func @transform_3(%arg0: i32) -> (i32, i32) {
    %c0_i32 = arith.constant 0 : i32
    %c0_i32_0 = arith.constant 0 : i32
    %c0_i32_1 = arith.constant 0 : i32
    return %c0_i32, %c0_i32_0 : i32, i32
  }
}

module attributes {stable_mosaic.version = 11 : i64} {
  func.func @kernel(%arg0: i32, %arg1: memref<1x4xf32, #tpu.memory_space<vmem>>, %arg2: memref<128x8xf32, #tpu.memory_space<vmem>>, %arg3: memref<8x4xf32, #tpu.memory_space<vmem>>, %arg4: memref<128x4xf32, #tpu.memory_space<vmem>>) attributes {dimension_semantics = [#tpu.dimension_semantics<arbitrary>], iteration_bounds = array<i64: 1>, scalar_prefetch = 0 : i64, scratch_operands = 0 : i64, tpu.core_type = #tpu.core_type<tc>, window_params = [{pipeline_mode = #tpu.pipeline_mode<synchronous>, transform_indices = @transform_0, window_bounds = array<i64: 1, 4>}, {pipeline_mode = #tpu.pipeline_mode<synchronous>, transform_indices = @transform_1, window_bounds = array<i64: 128, 8>}, {pipeline_mode = #tpu.pipeline_mode<synchronous>, transform_indices = @transform_2, window_bounds = array<i64: 8, 4>}, {pipeline_mode = #tpu.pipeline_mode<synchronous>, transform_indices = @transform_3, window_bounds = array<i64: 128, 4>}]} {
    %c0 = arith.constant 0 : index
    %c0_0 = arith.constant 0 : index
    %0 = vector.load %arg2[%c0, %c0_0] : memref<128x8xf32, #tpu.memory_space<vmem>>, vector<128x8xf32>
    %cst = arith.constant 0.000000e+00 : f32
    %1 = vector.broadcast %cst : f32 to vector<128x8xf32>
    %2 = arith.maximumf %0, %1 : vector<128x8xf32>
    %c0_1 = arith.constant 0 : index
    %c0_2 = arith.constant 0 : index
    %3 = vector.load %arg3[%c0_1, %c0_2] : memref<8x4xf32, #tpu.memory_space<vmem>>, vector<8x4xf32>
    %cst_3 = arith.constant dense<0.000000e+00> : vector<128x4xf32>
    %4 = tpu.matmul %2, %3, %cst_3 {dimension_numbers = #tpu.dot_dimension_numbers<[1], [0], [0], [1], [0, 0, 1, 1], [], []>} : vector<128x8xf32>, vector<8x4xf32>, vector<128x4xf32> -> vector<128x4xf32>
    %cst_4 = arith.constant dense<0.000000e+00> : vector<4xf32>
    %5 = vector.multi_reduction <add>, %4, %cst_4 [0] : vector<128x4xf32> to vector<4xf32>
    %6 = vector.shape_cast %5 : vector<4xf32> to vector<1x4xf32>
    %cst_5 = arith.constant 1.280000e+02 : f32
    %7 = vector.broadcast %cst_5 : f32 to vector<1x4xf32>
    %8 = arith.divf %6, %7 : vector<1x4xf32>
    %9 = vector.broadcast %8 : vector<1x4xf32> to vector<128x4xf32>
    %10 = arith.subf %4, %9 : vector<128x4xf32>
    %11 = vector.broadcast %8 : vector<1x4xf32> to vector<128x4xf32>
    %12 = arith.subf %4, %11 : vector<128x4xf32>
    %13 = arith.mulf %10, %12 : vector<128x4xf32>
    %cst_6 = arith.constant dense<0.000000e+00> : vector<4xf32>
    %14 = vector.multi_reduction <add>, %13, %cst_6 [0] : vector<128x4xf32> to vector<4xf32>
    %15 = vector.shape_cast %14 : vector<4xf32> to vector<1x4xf32>
    %cst_7 = arith.constant 1.280000e+02 : f32
    %16 = vector.broadcast %cst_7 : f32 to vector<1x4xf32>
    %17 = arith.divf %15, %16 : vector<1x4xf32>
    %18 = vector.broadcast %8 : vector<1x4xf32> to vector<128x4xf32>
    %19 = arith.subf %4, %18 : vector<128x4xf32>
    %cst_8 = arith.constant 9.99999974E-6 : f32
    %20 = vector.broadcast %cst_8 : f32 to vector<1x4xf32>
    %21 = arith.addf %17, %20 : vector<1x4xf32>
    %22 = math.rsqrt %21 : vector<1x4xf32>
    %23 = vector.broadcast %22 : vector<1x4xf32> to vector<128x4xf32>
    %24 = arith.mulf %19, %23 : vector<128x4xf32>
    %c0_9 = arith.constant 0 : index
    %c0_10 = arith.constant 0 : index
    %25 = vector.load %arg1[%c0_9, %c0_10] : memref<1x4xf32, #tpu.memory_space<vmem>>, vector<1x4xf32>
    %26 = vector.broadcast %25 : vector<1x4xf32> to vector<128x4xf32>
    %27 = arith.mulf %24, %26 : vector<128x4xf32>
    %c0_11 = arith.constant 0 : index
    %c0_12 = arith.constant 0 : index
    %28 = vector.load %arg4[%c0_11, %c0_12] : memref<128x4xf32, #tpu.memory_space<vmem>>, vector<128x4xf32>
    tpu.vector_store %arg4[%c0_11, %c0_12], %27 {strides = array<i32>} : memref<128x4xf32, #tpu.memory_space<vmem>>, vector<128x4xf32>,
    return
  }
  func.func @transform_0(%arg0: i32) -> (i32, i32) {
    %c0_i32 = arith.constant 0 : i32
    %c0_i32_0 = arith.constant 0 : i32
    %c0_i32_1 = arith.constant 0 : i32
    return %c0_i32, %c0_i32_0 : i32, i32
  }
  func.func @transform_1(%arg0: i32) -> (i32, i32) {
    %c0_i32 = arith.constant 0 : i32
    %c0_i32_0 = arith.constant 0 : i32
    %c0_i32_1 = arith.constant 0 : i32
    return %c0_i32, %c0_i32_0 : i32, i32
  }
  func.func @transform_2(%arg0: i32) -> (i32, i32) {
    %c0_i32 = arith.constant 0 : i32
    %c0_i32_0 = arith.constant 0 : i32
    %c0_i32_1 = arith.constant 0 : i32
    return %c0_i32, %c0_i32_0 : i32, i32
  }
  func.func @transform_3(%arg0: i32) -> (i32, i32) {
    %c0_i32 = arith.constant 0 : i32
    %c0_i32_0 = arith.constant 0 : i32
    %c0_i32_1 = arith.constant 0 : i32
    return %c0_i32, %c0_i32_0 : i32, i32
  }
}

module attributes {stable_mosaic.version = 11 : i64} {
  func.func @kernel(%arg0: i32, %arg1: memref<1x8xf32, #tpu.memory_space<vmem>>, %arg2: memref<128x8xf32, #tpu.memory_space<vmem>>, %arg3: memref<8x8xf32, #tpu.memory_space<vmem>>, %arg4: memref<128x8xf32, #tpu.memory_space<vmem>>) attributes {dimension_semantics = [#tpu.dimension_semantics<arbitrary>], iteration_bounds = array<i64: 1>, scalar_prefetch = 0 : i64, scratch_operands = 0 : i64, tpu.core_type = #tpu.core_type<tc>, window_params = [{pipeline_mode = #tpu.pipeline_mode<synchronous>, transform_indices = @transform_0, window_bounds = array<i64: 1, 8>}, {pipeline_mode = #tpu.pipeline_mode<synchronous>, transform_indices = @transform_1, window_bounds = array<i64: 128, 8>}, {pipeline_mode = #tpu.pipeline_mode<synchronous>, transform_indices = @transform_2, window_bounds = array<i64: 8, 8>}, {pipeline_mode = #tpu.pipeline_mode<synchronous>, transform_indices = @transform_3, window_bounds = array<i64: 128, 8>}]} {
    %c0 = arith.constant 0 : index
    %c0_0 = arith.constant 0 : index
    %0 = vector.load %arg2[%c0, %c0_0] : memref<128x8xf32, #tpu.memory_space<vmem>>, vector<128x8xf32>
    %cst = arith.constant 0.000000e+00 : f32
    %1 = vector.broadcast %cst : f32 to vector<128x8xf32>
    %2 = arith.maximumf %0, %1 : vector<128x8xf32>
    %c0_1 = arith.constant 0 : index
    %c0_2 = arith.constant 0 : index
    %3 = vector.load %arg3[%c0_1, %c0_2] : memref<8x8xf32, #tpu.memory_space<vmem>>, vector<8x8xf32>
    %cst_3 = arith.constant dense<0.000000e+00> : vector<128x8xf32>
    %4 = tpu.matmul %2, %3, %cst_3 {dimension_numbers = #tpu.dot_dimension_numbers<[1], [0], [0], [1], [0, 0, 1, 1], [], []>} : vector<128x8xf32>, vector<8x8xf32>, vector<128x8xf32> -> vector<128x8xf32>
    %cst_4 = arith.constant dense<0.000000e+00> : vector<8xf32>
    %5 = vector.multi_reduction <add>, %4, %cst_4 [0] : vector<128x8xf32> to vector<8xf32>
    %6 = vector.shape_cast %5 : vector<8xf32> to vector<1x8xf32>
    %cst_5 = arith.constant 1.280000e+02 : f32
    %7 = vector.broadcast %cst_5 : f32 to vector<1x8xf32>
    %8 = arith.divf %6, %7 : vector<1x8xf32>
    %9 = vector.broadcast %8 : vector<1x8xf32> to vector<128x8xf32>
    %10 = arith.subf %4, %9 : vector<128x8xf32>
    %11 = vector.broadcast %8 : vector<1x8xf32> to vector<128x8xf32>
    %12 = arith.subf %4, %11 : vector<128x8xf32>
    %13 = arith.mulf %10, %12 : vector<128x8xf32>
    %cst_6 = arith.constant dense<0.000000e+00> : vector<8xf32>
    %14 = vector.multi_reduction <add>, %13, %cst_6 [0] : vector<128x8xf32> to vector<8xf32>
    %15 = vector.shape_cast %14 : vector<8xf32> to vector<1x8xf32>
    %cst_7 = arith.constant 1.280000e+02 : f32
    %16 = vector.broadcast %cst_7 : f32 to vector<1x8xf32>
    %17 = arith.divf %15, %16 : vector<1x8xf32>
    %18 = vector.broadcast %8 : vector<1x8xf32> to vector<128x8xf32>
    %19 = arith.subf %4, %18 : vector<128x8xf32>
    %cst_8 = arith.constant 9.99999974E-6 : f32
    %20 = vector.broadcast %cst_8 : f32 to vector<1x8xf32>
    %21 = arith.addf %17, %20 : vector<1x8xf32>
    %22 = math.rsqrt %21 : vector<1x8xf32>
    %23 = vector.broadcast %22 : vector<1x8xf32> to vector<128x8xf32>
    %24 = arith.mulf %19, %23 : vector<128x8xf32>
    %c0_9 = arith.constant 0 : index
    %c0_10 = arith.constant 0 : index
    %25 = vector.load %arg1[%c0_9, %c0_10] : memref<1x8xf32, #tpu.memory_space<vmem>>, vector<1x8xf32>
    %26 = vector.broadcast %25 : vector<1x8xf32> to vector<128x8xf32>
    %27 = arith.mulf %24, %26 : vector<128x8xf32>
    %c0_11 = arith.constant 0 : index
    %c0_12 = arith.constant 0 : index
    %28 = vector.load %arg4[%c0_11, %c0_12] : memref<128x8xf32, #tpu.memory_space<vmem>>, vector<128x8xf32>
    tpu.vector_store %arg4[%c0_11, %c0_12], %27 {strides = array<i32>} : memref<128x8xf32, #tpu.memory_space<vmem>>, vector<128x8xf32>,
    return
  }
  func.func @transform_0(%arg0: i32) -> (i32, i32) {
    %c0_i32 = arith.constant 0 : i32
    %c0_i32_0 = arith.constant 0 : i32
    %c0_i32_1 = arith.constant 0 : i32
    return %c0_i32, %c0_i32_0 : i32, i32
  }
  func.func @transform_1(%arg0: i32) -> (i32, i32) {
    %c0_i32 = arith.constant 0 : i32
    %c0_i32_0 = arith.constant 0 : i32
    %c0_i32_1 = arith.constant 0 : i32
    return %c0_i32, %c0_i32_0 : i32, i32
  }
  func.func @transform_2(%arg0: i32) -> (i32, i32) {
    %c0_i32 = arith.constant 0 : i32
    %c0_i32_0 = arith.constant 0 : i32
    %c0_i32_1 = arith.constant 0 : i32
    return %c0_i32, %c0_i32_0 : i32, i32
  }
  func.func @transform_3(%arg0: i32) -> (i32, i32) {
    %c0_i32 = arith.constant 0 : i32
    %c0_i32_0 = arith.constant 0 : i32
    %c0_i32_1 = arith.constant 0 : i32
    return %c0_i32, %c0_i32_0 : i32, i32
  }
}

module attributes {stable_mosaic.version = 11 : i64} {
  func.func @kernel(%arg0: i32, %arg1: memref<1x4xf32, #tpu.memory_space<vmem>>, %arg2: memref<4x32x4xf32, #tpu.memory_space<vmem>>, %arg3: memref<32x4xf32, #tpu.memory_space<vmem>>) attributes {dimension_semantics = [#tpu.dimension_semantics<arbitrary>], iteration_bounds = array<i64: 1>, scalar_prefetch = 0 : i64, scratch_operands = 0 : i64, tpu.core_type = #tpu.core_type<tc>, window_params = [{pipeline_mode = #tpu.pipeline_mode<synchronous>, transform_indices = @transform_0, window_bounds = array<i64: 1, 4>}, {pipeline_mode = #tpu.pipeline_mode<synchronous>, transform_indices = @transform_1, window_bounds = array<i64: 4, 32, 4>}, {pipeline_mode = #tpu.pipeline_mode<synchronous>, transform_indices = @transform_2, window_bounds = array<i64: 32, 4>}]} {
    %c0 = arith.constant 0 : index
    %c0_0 = arith.constant 0 : index
    %c0_1 = arith.constant 0 : index
    %0 = vector.load %arg2[%c0, %c0_0, %c0_1] : memref<4x32x4xf32, #tpu.memory_space<vmem>>, vector<1x32x4xf32>
    %1 = vector.shape_cast %0 : vector<1x32x4xf32> to vector<32x4xf32>
    %c1 = arith.constant 1 : index
    %c0_2 = arith.constant 0 : index
    %c0_3 = arith.constant 0 : index
    %2 = vector.load %arg2[%c1, %c0_2, %c0_3] : memref<4x32x4xf32, #tpu.memory_space<vmem>>, vector<1x32x4xf32>
    %3 = vector.shape_cast %2 : vector<1x32x4xf32> to vector<32x4xf32>
    %4 = arith.maximumf %1, %3 : vector<32x4xf32>
    %c2 = arith.constant 2 : index
    %c0_4 = arith.constant 0 : index
    %c0_5 = arith.constant 0 : index
    %5 = vector.load %arg2[%c2, %c0_4, %c0_5] : memref<4x32x4xf32, #tpu.memory_space<vmem>>, vector<1x32x4xf32>
    %6 = vector.shape_cast %5 : vector<1x32x4xf32> to vector<32x4xf32>
    %7 = arith.maximumf %4, %6 : vector<32x4xf32>
    %c3 = arith.constant 3 : index
    %c0_6 = arith.constant 0 : index
    %c0_7 = arith.constant 0 : index
    %8 = vector.load %arg2[%c3, %c0_6, %c0_7] : memref<4x32x4xf32, #tpu.memory_space<vmem>>, vector<1x32x4xf32>
    %9 = vector.shape_cast %8 : vector<1x32x4xf32> to vector<32x4xf32>
    %10 = arith.maximumf %7, %9 : vector<32x4xf32>
    %c0_8 = arith.constant 0 : index
    %c0_9 = arith.constant 0 : index
    %11 = vector.load %arg1[%c0_8, %c0_9] : memref<1x4xf32, #tpu.memory_space<vmem>>, vector<1x4xf32>
    %12 = vector.broadcast %11 : vector<1x4xf32> to vector<32x4xf32>
    %13 = arith.mulf %10, %12 : vector<32x4xf32>
    %c0_10 = arith.constant 0 : index
    %c0_11 = arith.constant 0 : index
    %14 = vector.load %arg3[%c0_10, %c0_11] : memref<32x4xf32, #tpu.memory_space<vmem>>, vector<32x4xf32>
    tpu.vector_store %arg3[%c0_10, %c0_11], %13 {strides = array<i32>} : memref<32x4xf32, #tpu.memory_space<vmem>>, vector<32x4xf32>,
    return
  }
  func.func @transform_0(%arg0: i32) -> (i32, i32) {
    %c0_i32 = arith.constant 0 : i32
    %c0_i32_0 = arith.constant 0 : i32
    %c0_i32_1 = arith.constant 0 : i32
    return %c0_i32, %c0_i32_0 : i32, i32
  }
  func.func @transform_1(%arg0: i32) -> (i32, i32, i32) {
    %c0_i32 = arith.constant 0 : i32
    %c0_i32_0 = arith.constant 0 : i32
    %c0_i32_1 = arith.constant 0 : i32
    %c0_i32_2 = arith.constant 0 : i32
    return %c0_i32, %c0_i32_0, %c0_i32_1 : i32, i32, i32
  }
  func.func @transform_2(%arg0: i32) -> (i32, i32) {
    %c0_i32 = arith.constant 0 : i32
    %c0_i32_0 = arith.constant 0 : i32
    %c0_i32_1 = arith.constant 0 : i32
    return %c0_i32, %c0_i32_0 : i32, i32
  }
}

module attributes {stable_mosaic.version = 11 : i64} {
  func.func @kernel(%arg0: i32, %arg1: memref<1x4xf32, #tpu.memory_space<vmem>>, %arg2: memref<32x8xf32, #tpu.memory_space<vmem>>, %arg3: memref<8x4xf32, #tpu.memory_space<vmem>>, %arg4: memref<32x4xf32, #tpu.memory_space<vmem>>) attributes {dimension_semantics = [#tpu.dimension_semantics<arbitrary>], iteration_bounds = array<i64: 1>, scalar_prefetch = 0 : i64, scratch_operands = 0 : i64, tpu.core_type = #tpu.core_type<tc>, window_params = [{pipeline_mode = #tpu.pipeline_mode<synchronous>, transform_indices = @transform_0, window_bounds = array<i64: 1, 4>}, {pipeline_mode = #tpu.pipeline_mode<synchronous>, transform_indices = @transform_1, window_bounds = array<i64: 32, 8>}, {pipeline_mode = #tpu.pipeline_mode<synchronous>, transform_indices = @transform_2, window_bounds = array<i64: 8, 4>}, {pipeline_mode = #tpu.pipeline_mode<synchronous>, transform_indices = @transform_3, window_bounds = array<i64: 32, 4>}]} {
    %c0 = arith.constant 0 : index
    %c0_0 = arith.constant 0 : index
    %0 = vector.load %arg2[%c0, %c0_0] : memref<32x8xf32, #tpu.memory_space<vmem>>, vector<32x8xf32>
    %cst = arith.constant 0.000000e+00 : f32
    %1 = vector.broadcast %cst : f32 to vector<32x8xf32>
    %2 = arith.maximumf %0, %1 : vector<32x8xf32>
    %c0_1 = arith.constant 0 : index
    %c0_2 = arith.constant 0 : index
    %3 = vector.load %arg3[%c0_1, %c0_2] : memref<8x4xf32, #tpu.memory_space<vmem>>, vector<8x4xf32>
    %cst_3 = arith.constant dense<0.000000e+00> : vector<32x4xf32>
    %4 = tpu.matmul %2, %3, %cst_3 {dimension_numbers = #tpu.dot_dimension_numbers<[1], [0], [0], [1], [0, 0, 1, 1], [], []>} : vector<32x8xf32>, vector<8x4xf32>, vector<32x4xf32> -> vector<32x4xf32>
    %cst_4 = arith.constant dense<0.000000e+00> : vector<4xf32>
    %5 = vector.multi_reduction <add>, %4, %cst_4 [0] : vector<32x4xf32> to vector<4xf32>
    %6 = vector.shape_cast %5 : vector<4xf32> to vector<1x4xf32>
    %cst_5 = arith.constant 3.200000e+01 : f32
    %7 = vector.broadcast %cst_5 : f32 to vector<1x4xf32>
    %8 = arith.divf %6, %7 : vector<1x4xf32>
    %9 = vector.broadcast %8 : vector<1x4xf32> to vector<32x4xf32>
    %10 = arith.subf %4, %9 : vector<32x4xf32>
    %11 = vector.broadcast %8 : vector<1x4xf32> to vector<32x4xf32>
    %12 = arith.subf %4, %11 : vector<32x4xf32>
    %13 = arith.mulf %10, %12 : vector<32x4xf32>
    %cst_6 = arith.constant dense<0.000000e+00> : vector<4xf32>
    %14 = vector.multi_reduction <add>, %13, %cst_6 [0] : vector<32x4xf32> to vector<4xf32>
    %15 = vector.shape_cast %14 : vector<4xf32> to vector<1x4xf32>
    %cst_7 = arith.constant 3.200000e+01 : f32
    %16 = vector.broadcast %cst_7 : f32 to vector<1x4xf32>
    %17 = arith.divf %15, %16 : vector<1x4xf32>
    %18 = vector.broadcast %8 : vector<1x4xf32> to vector<32x4xf32>
    %19 = arith.subf %4, %18 : vector<32x4xf32>
    %cst_8 = arith.constant 9.99999974E-6 : f32
    %20 = vector.broadcast %cst_8 : f32 to vector<1x4xf32>
    %21 = arith.addf %17, %20 : vector<1x4xf32>
    %22 = math.rsqrt %21 : vector<1x4xf32>
    %23 = vector.broadcast %22 : vector<1x4xf32> to vector<32x4xf32>
    %24 = arith.mulf %19, %23 : vector<32x4xf32>
    %c0_9 = arith.constant 0 : index
    %c0_10 = arith.constant 0 : index
    %25 = vector.load %arg1[%c0_9, %c0_10] : memref<1x4xf32, #tpu.memory_space<vmem>>, vector<1x4xf32>
    %26 = vector.broadcast %25 : vector<1x4xf32> to vector<32x4xf32>
    %27 = arith.mulf %24, %26 : vector<32x4xf32>
    %c0_11 = arith.constant 0 : index
    %c0_12 = arith.constant 0 : index
    %28 = vector.load %arg4[%c0_11, %c0_12] : memref<32x4xf32, #tpu.memory_space<vmem>>, vector<32x4xf32>
    tpu.vector_store %arg4[%c0_11, %c0_12], %27 {strides = array<i32>} : memref<32x4xf32, #tpu.memory_space<vmem>>, vector<32x4xf32>,
    return
  }
  func.func @transform_0(%arg0: i32) -> (i32, i32) {
    %c0_i32 = arith.constant 0 : i32
    %c0_i32_0 = arith.constant 0 : i32
    %c0_i32_1 = arith.constant 0 : i32
    return %c0_i32, %c0_i32_0 : i32, i32
  }
  func.func @transform_1(%arg0: i32) -> (i32, i32) {
    %c0_i32 = arith.constant 0 : i32
    %c0_i32_0 = arith.constant 0 : i32
    %c0_i32_1 = arith.constant 0 : i32
    return %c0_i32, %c0_i32_0 : i32, i32
  }
  func.func @transform_2(%arg0: i32) -> (i32, i32) {
    %c0_i32 = arith.constant 0 : i32
    %c0_i32_0 = arith.constant 0 : i32
    %c0_i32_1 = arith.constant 0 : i32
    return %c0_i32, %c0_i32_0 : i32, i32
  }
  func.func @transform_3(%arg0: i32) -> (i32, i32) {
    %c0_i32 = arith.constant 0 : i32
    %c0_i32_0 = arith.constant 0 : i32
    %c0_i32_1 = arith.constant 0 : i32
    return %c0_i32, %c0_i32_0 : i32, i32
  }
}

module attributes {stable_mosaic.version = 11 : i64} {
  func.func @kernel(%arg0: i32, %arg1: memref<1x2xf32, #tpu.memory_space<vmem>>, %arg2: memref<128x18xf32, #tpu.memory_space<vmem>>, %arg3: memref<18x2xf32, #tpu.memory_space<vmem>>, %arg4: memref<128x2xf32, #tpu.memory_space<vmem>>) attributes {dimension_semantics = [#tpu.dimension_semantics<arbitrary>], iteration_bounds = array<i64: 1>, scalar_prefetch = 0 : i64, scratch_operands = 0 : i64, tpu.core_type = #tpu.core_type<tc>, window_params = [{pipeline_mode = #tpu.pipeline_mode<synchronous>, transform_indices = @transform_0, window_bounds = array<i64: 1, 2>}, {pipeline_mode = #tpu.pipeline_mode<synchronous>, transform_indices = @transform_1, window_bounds = array<i64: 128, 18>}, {pipeline_mode = #tpu.pipeline_mode<synchronous>, transform_indices = @transform_2, window_bounds = array<i64: 18, 2>}, {pipeline_mode = #tpu.pipeline_mode<synchronous>, transform_indices = @transform_3, window_bounds = array<i64: 128, 2>}]} {
    %c0 = arith.constant 0 : index
    %c0_0 = arith.constant 0 : index
    %0 = vector.load %arg2[%c0, %c0_0] : memref<128x18xf32, #tpu.memory_space<vmem>>, vector<128x18xf32>
    %cst = arith.constant 0.000000e+00 : f32
    %1 = vector.broadcast %cst : f32 to vector<128x18xf32>
    %2 = arith.maximumf %0, %1 : vector<128x18xf32>
    %c0_1 = arith.constant 0 : index
    %c0_2 = arith.constant 0 : index
    %3 = vector.load %arg3[%c0_1, %c0_2] : memref<18x2xf32, #tpu.memory_space<vmem>>, vector<18x2xf32>
    %cst_3 = arith.constant dense<0.000000e+00> : vector<128x2xf32>
    %4 = tpu.matmul %2, %3, %cst_3 {dimension_numbers = #tpu.dot_dimension_numbers<[1], [0], [0], [1], [0, 0, 1, 1], [], []>} : vector<128x18xf32>, vector<18x2xf32>, vector<128x2xf32> -> vector<128x2xf32>
    %cst_4 = arith.constant dense<0.000000e+00> : vector<2xf32>
    %5 = vector.multi_reduction <add>, %4, %cst_4 [0] : vector<128x2xf32> to vector<2xf32>
    %6 = vector.shape_cast %5 : vector<2xf32> to vector<1x2xf32>
    %cst_5 = arith.constant 1.280000e+02 : f32
    %7 = vector.broadcast %cst_5 : f32 to vector<1x2xf32>
    %8 = arith.divf %6, %7 : vector<1x2xf32>
    %9 = vector.broadcast %8 : vector<1x2xf32> to vector<128x2xf32>
    %10 = arith.subf %4, %9 : vector<128x2xf32>
    %11 = vector.broadcast %8 : vector<1x2xf32> to vector<128x2xf32>
    %12 = arith.subf %4, %11 : vector<128x2xf32>
    %13 = arith.mulf %10, %12 : vector<128x2xf32>
    %cst_6 = arith.constant dense<0.000000e+00> : vector<2xf32>
    %14 = vector.multi_reduction <add>, %13, %cst_6 [0] : vector<128x2xf32> to vector<2xf32>
    %15 = vector.shape_cast %14 : vector<2xf32> to vector<1x2xf32>
    %cst_7 = arith.constant 1.280000e+02 : f32
    %16 = vector.broadcast %cst_7 : f32 to vector<1x2xf32>
    %17 = arith.divf %15, %16 : vector<1x2xf32>
    %18 = vector.broadcast %8 : vector<1x2xf32> to vector<128x2xf32>
    %19 = arith.subf %4, %18 : vector<128x2xf32>
    %cst_8 = arith.constant 9.99999974E-6 : f32
    %20 = vector.broadcast %cst_8 : f32 to vector<1x2xf32>
    %21 = arith.addf %17, %20 : vector<1x2xf32>
    %22 = math.rsqrt %21 : vector<1x2xf32>
    %23 = vector.broadcast %22 : vector<1x2xf32> to vector<128x2xf32>
    %24 = arith.mulf %19, %23 : vector<128x2xf32>
    %c0_9 = arith.constant 0 : index
    %c0_10 = arith.constant 0 : index
    %25 = vector.load %arg1[%c0_9, %c0_10] : memref<1x2xf32, #tpu.memory_space<vmem>>, vector<1x2xf32>
    %26 = vector.broadcast %25 : vector<1x2xf32> to vector<128x2xf32>
    %27 = arith.mulf %24, %26 : vector<128x2xf32>
    %c0_11 = arith.constant 0 : index
    %c0_12 = arith.constant 0 : index
    %28 = vector.load %arg4[%c0_11, %c0_12] : memref<128x2xf32, #tpu.memory_space<vmem>>, vector<128x2xf32>
    tpu.vector_store %arg4[%c0_11, %c0_12], %27 {strides = array<i32>} : memref<128x2xf32, #tpu.memory_space<vmem>>, vector<128x2xf32>,
    return
  }
  func.func @transform_0(%arg0: i32) -> (i32, i32) {
    %c0_i32 = arith.constant 0 : i32
    %c0_i32_0 = arith.constant 0 : i32
    %c0_i32_1 = arith.constant 0 : i32
    return %c0_i32, %c0_i32_0 : i32, i32
  }
  func.func @transform_1(%arg0: i32) -> (i32, i32) {
    %c0_i32 = arith.constant 0 : i32
    %c0_i32_0 = arith.constant 0 : i32
    %c0_i32_1 = arith.constant 0 : i32
    return %c0_i32, %c0_i32_0 : i32, i32
  }
  func.func @transform_2(%arg0: i32) -> (i32, i32) {
    %c0_i32 = arith.constant 0 : i32
    %c0_i32_0 = arith.constant 0 : i32
    %c0_i32_1 = arith.constant 0 : i32
    return %c0_i32, %c0_i32_0 : i32, i32
  }
  func.func @transform_3(%arg0: i32) -> (i32, i32) {
    %c0_i32 = arith.constant 0 : i32
    %c0_i32_0 = arith.constant 0 : i32
    %c0_i32_1 = arith.constant 0 : i32
    return %c0_i32, %c0_i32_0 : i32, i32
  }
}

module attributes {stable_mosaic.version = 11 : i64} {
  func.func @kernel(%arg0: i32, %arg1: memref<1x4xf32, #tpu.memory_space<vmem>>, %arg2: memref<9x32x4xf32, #tpu.memory_space<vmem>>, %arg3: memref<32x4xf32, #tpu.memory_space<vmem>>) attributes {dimension_semantics = [#tpu.dimension_semantics<arbitrary>], iteration_bounds = array<i64: 1>, scalar_prefetch = 0 : i64, scratch_operands = 0 : i64, tpu.core_type = #tpu.core_type<tc>, window_params = [{pipeline_mode = #tpu.pipeline_mode<synchronous>, transform_indices = @transform_0, window_bounds = array<i64: 1, 4>}, {pipeline_mode = #tpu.pipeline_mode<synchronous>, transform_indices = @transform_1, window_bounds = array<i64: 9, 32, 4>}, {pipeline_mode = #tpu.pipeline_mode<synchronous>, transform_indices = @transform_2, window_bounds = array<i64: 32, 4>}]} {
    %c0 = arith.constant 0 : index
    %c0_0 = arith.constant 0 : index
    %c0_1 = arith.constant 0 : index
    %0 = vector.load %arg2[%c0, %c0_0, %c0_1] : memref<9x32x4xf32, #tpu.memory_space<vmem>>, vector<1x32x4xf32>
    %1 = vector.shape_cast %0 : vector<1x32x4xf32> to vector<32x4xf32>
    %c1 = arith.constant 1 : index
    %c0_2 = arith.constant 0 : index
    %c0_3 = arith.constant 0 : index
    %2 = vector.load %arg2[%c1, %c0_2, %c0_3] : memref<9x32x4xf32, #tpu.memory_space<vmem>>, vector<1x32x4xf32>
    %3 = vector.shape_cast %2 : vector<1x32x4xf32> to vector<32x4xf32>
    %4 = arith.maximumf %1, %3 : vector<32x4xf32>
    %c2 = arith.constant 2 : index
    %c0_4 = arith.constant 0 : index
    %c0_5 = arith.constant 0 : index
    %5 = vector.load %arg2[%c2, %c0_4, %c0_5] : memref<9x32x4xf32, #tpu.memory_space<vmem>>, vector<1x32x4xf32>
    %6 = vector.shape_cast %5 : vector<1x32x4xf32> to vector<32x4xf32>
    %7 = arith.maximumf %4, %6 : vector<32x4xf32>
    %c3 = arith.constant 3 : index
    %c0_6 = arith.constant 0 : index
    %c0_7 = arith.constant 0 : index
    %8 = vector.load %arg2[%c3, %c0_6, %c0_7] : memref<9x32x4xf32, #tpu.memory_space<vmem>>, vector<1x32x4xf32>
    %9 = vector.shape_cast %8 : vector<1x32x4xf32> to vector<32x4xf32>
    %10 = arith.maximumf %7, %9 : vector<32x4xf32>
    %c4 = arith.constant 4 : index
    %c0_8 = arith.constant 0 : index
    %c0_9 = arith.constant 0 : index
    %11 = vector.load %arg2[%c4, %c0_8, %c0_9] : memref<9x32x4xf32, #tpu.memory_space<vmem>>, vector<1x32x4xf32>
    %12 = vector.shape_cast %11 : vector<1x32x4xf32> to vector<32x4xf32>
    %13 = arith.maximumf %10, %12 : vector<32x4xf32>
    %c5 = arith.constant 5 : index
    %c0_10 = arith.constant 0 : index
    %c0_11 = arith.constant 0 : index
    %14 = vector.load %arg2[%c5, %c0_10, %c0_11] : memref<9x32x4xf32, #tpu.memory_space<vmem>>, vector<1x32x4xf32>
    %15 = vector.shape_cast %14 : vector<1x32x4xf32> to vector<32x4xf32>
    %16 = arith.maximumf %13, %15 : vector<32x4xf32>
    %c6 = arith.constant 6 : index
    %c0_12 = arith.constant 0 : index
    %c0_13 = arith.constant 0 : index
    %17 = vector.load %arg2[%c6, %c0_12, %c0_13] : memref<9x32x4xf32, #tpu.memory_space<vmem>>, vector<1x32x4xf32>
    %18 = vector.shape_cast %17 : vector<1x32x4xf32> to vector<32x4xf32>
    %19 = arith.maximumf %16, %18 : vector<32x4xf32>
    %c7 = arith.constant 7 : index
    %c0_14 = arith.constant 0 : index
    %c0_15 = arith.constant 0 : index
    %20 = vector.load %arg2[%c7, %c0_14, %c0_15] : memref<9x32x4xf32, #tpu.memory_space<vmem>>, vector<1x32x4xf32>
    %21 = vector.shape_cast %20 : vector<1x32x4xf32> to vector<32x4xf32>
    %22 = arith.maximumf %19, %21 : vector<32x4xf32>
    %c8 = arith.constant 8 : index
    %c0_16 = arith.constant 0 : index
    %c0_17 = arith.constant 0 : index
    %23 = vector.load %arg2[%c8, %c0_16, %c0_17] : memref<9x32x4xf32, #tpu.memory_space<vmem>>, vector<1x32x4xf32>
    %24 = vector.shape_cast %23 : vector<1x32x4xf32> to vector<32x4xf32>
    %25 = arith.maximumf %22, %24 : vector<32x4xf32>
    %cst = arith.constant dense<0.000000e+00> : vector<4xf32>
    %26 = vector.multi_reduction <add>, %25, %cst [0] : vector<32x4xf32> to vector<4xf32>
    %27 = vector.shape_cast %26 : vector<4xf32> to vector<1x4xf32>
    %cst_18 = arith.constant 3.200000e+01 : f32
    %28 = vector.broadcast %cst_18 : f32 to vector<1x4xf32>
    %29 = arith.divf %27, %28 : vector<1x4xf32>
    %30 = vector.broadcast %29 : vector<1x4xf32> to vector<32x4xf32>
    %31 = arith.subf %25, %30 : vector<32x4xf32>
    %32 = vector.broadcast %29 : vector<1x4xf32> to vector<32x4xf32>
    %33 = arith.subf %25, %32 : vector<32x4xf32>
    %34 = arith.mulf %31, %33 : vector<32x4xf32>
    %cst_19 = arith.constant dense<0.000000e+00> : vector<4xf32>
    %35 = vector.multi_reduction <add>, %34, %cst_19 [0] : vector<32x4xf32> to vector<4xf32>
    %36 = vector.shape_cast %35 : vector<4xf32> to vector<1x4xf32>
    %cst_20 = arith.constant 3.200000e+01 : f32
    %37 = vector.broadcast %cst_20 : f32 to vector<1x4xf32>
    %38 = arith.divf %36, %37 : vector<1x4xf32>
    %39 = vector.broadcast %29 : vector<1x4xf32> to vector<32x4xf32>
    %40 = arith.subf %25, %39 : vector<32x4xf32>
    %cst_21 = arith.constant 9.99999974E-6 : f32
    %41 = vector.broadcast %cst_21 : f32 to vector<1x4xf32>
    %42 = arith.addf %38, %41 : vector<1x4xf32>
    %43 = math.rsqrt %42 : vector<1x4xf32>
    %44 = vector.broadcast %43 : vector<1x4xf32> to vector<32x4xf32>
    %45 = arith.mulf %40, %44 : vector<32x4xf32>
    %c0_22 = arith.constant 0 : index
    %c0_23 = arith.constant 0 : index
    %46 = vector.load %arg1[%c0_22, %c0_23] : memref<1x4xf32, #tpu.memory_space<vmem>>, vector<1x4xf32>
    %47 = vector.broadcast %46 : vector<1x4xf32> to vector<32x4xf32>
    %48 = arith.mulf %45, %47 : vector<32x4xf32>
    %c0_24 = arith.constant 0 : index
    %c0_25 = arith.constant 0 : index
    %49 = vector.load %arg3[%c0_24, %c0_25] : memref<32x4xf32, #tpu.memory_space<vmem>>, vector<32x4xf32>
    tpu.vector_store %arg3[%c0_24, %c0_25], %48 {strides = array<i32>} : memref<32x4xf32, #tpu.memory_space<vmem>>, vector<32x4xf32>,
    return
  }
  func.func @transform_0(%arg0: i32) -> (i32, i32) {
    %c0_i32 = arith.constant 0 : i32
    %c0_i32_0 = arith.constant 0 : i32
    %c0_i32_1 = arith.constant 0 : i32
    return %c0_i32, %c0_i32_0 : i32, i32
  }
  func.func @transform_1(%arg0: i32) -> (i32, i32, i32) {
    %c0_i32 = arith.constant 0 : i32
    %c0_i32_0 = arith.constant 0 : i32
    %c0_i32_1 = arith.constant 0 : i32
    %c0_i32_2 = arith.constant 0 : i32
    return %c0_i32, %c0_i32_0, %c0_i32_1 : i32, i32, i32
  }
  func.func @transform_2(%arg0: i32) -> (i32, i32) {
    %c0_i32 = arith.constant 0 : i32
    %c0_i32_0 = arith.constant 0 : i32
    %c0_i32_1 = arith.constant 0 : i32
    return %c0_i32, %c0_i32_0 : i32, i32
  }
}

module attributes {stable_mosaic.version = 11 : i64} {
  func.func @kernel(%arg0: i32, %arg1: memref<1x4xf32, #tpu.memory_space<vmem>>, %arg2: memref<9x32x4xf32, #tpu.memory_space<vmem>>, %arg3: memref<32x4xf32, #tpu.memory_space<vmem>>, %arg4: memref<32x4xf32, #tpu.memory_space<vmem>>) attributes {dimension_semantics = [#tpu.dimension_semantics<arbitrary>], iteration_bounds = array<i64: 1>, scalar_prefetch = 0 : i64, scratch_operands = 0 : i64, tpu.core_type = #tpu.core_type<tc>, window_params = [{pipeline_mode = #tpu.pipeline_mode<synchronous>, transform_indices = @transform_0, window_bounds = array<i64: 1, 4>}, {pipeline_mode = #tpu.pipeline_mode<synchronous>, transform_indices = @transform_1, window_bounds = array<i64: 9, 32, 4>}, {pipeline_mode = #tpu.pipeline_mode<synchronous>, transform_indices = @transform_2, window_bounds = array<i64: 32, 4>}, {pipeline_mode = #tpu.pipeline_mode<synchronous>, transform_indices = @transform_3, window_bounds = array<i64: 32, 4>}]} {
    %c0 = arith.constant 0 : index
    %c0_0 = arith.constant 0 : index
    %c0_1 = arith.constant 0 : index
    %0 = vector.load %arg2[%c0, %c0_0, %c0_1] : memref<9x32x4xf32, #tpu.memory_space<vmem>>, vector<1x32x4xf32>
    %1 = vector.shape_cast %0 : vector<1x32x4xf32> to vector<32x4xf32>
    %c1 = arith.constant 1 : index
    %c0_2 = arith.constant 0 : index
    %c0_3 = arith.constant 0 : index
    %2 = vector.load %arg2[%c1, %c0_2, %c0_3] : memref<9x32x4xf32, #tpu.memory_space<vmem>>, vector<1x32x4xf32>
    %3 = vector.shape_cast %2 : vector<1x32x4xf32> to vector<32x4xf32>
    %4 = arith.addf %1, %3 : vector<32x4xf32>
    %c2 = arith.constant 2 : index
    %c0_4 = arith.constant 0 : index
    %c0_5 = arith.constant 0 : index
    %5 = vector.load %arg2[%c2, %c0_4, %c0_5] : memref<9x32x4xf32, #tpu.memory_space<vmem>>, vector<1x32x4xf32>
    %6 = vector.shape_cast %5 : vector<1x32x4xf32> to vector<32x4xf32>
    %7 = arith.addf %4, %6 : vector<32x4xf32>
    %c3 = arith.constant 3 : index
    %c0_6 = arith.constant 0 : index
    %c0_7 = arith.constant 0 : index
    %8 = vector.load %arg2[%c3, %c0_6, %c0_7] : memref<9x32x4xf32, #tpu.memory_space<vmem>>, vector<1x32x4xf32>
    %9 = vector.shape_cast %8 : vector<1x32x4xf32> to vector<32x4xf32>
    %10 = arith.addf %7, %9 : vector<32x4xf32>
    %c4 = arith.constant 4 : index
    %c0_8 = arith.constant 0 : index
    %c0_9 = arith.constant 0 : index
    %11 = vector.load %arg2[%c4, %c0_8, %c0_9] : memref<9x32x4xf32, #tpu.memory_space<vmem>>, vector<1x32x4xf32>
    %12 = vector.shape_cast %11 : vector<1x32x4xf32> to vector<32x4xf32>
    %13 = arith.addf %10, %12 : vector<32x4xf32>
    %c5 = arith.constant 5 : index
    %c0_10 = arith.constant 0 : index
    %c0_11 = arith.constant 0 : index
    %14 = vector.load %arg2[%c5, %c0_10, %c0_11] : memref<9x32x4xf32, #tpu.memory_space<vmem>>, vector<1x32x4xf32>
    %15 = vector.shape_cast %14 : vector<1x32x4xf32> to vector<32x4xf32>
    %16 = arith.addf %13, %15 : vector<32x4xf32>
    %c6 = arith.constant 6 : index
    %c0_12 = arith.constant 0 : index
    %c0_13 = arith.constant 0 : index
    %17 = vector.load %arg2[%c6, %c0_12, %c0_13] : memref<9x32x4xf32, #tpu.memory_space<vmem>>, vector<1x32x4xf32>
    %18 = vector.shape_cast %17 : vector<1x32x4xf32> to vector<32x4xf32>
    %19 = arith.addf %16, %18 : vector<32x4xf32>
    %c7 = arith.constant 7 : index
    %c0_14 = arith.constant 0 : index
    %c0_15 = arith.constant 0 : index
    %20 = vector.load %arg2[%c7, %c0_14, %c0_15] : memref<9x32x4xf32, #tpu.memory_space<vmem>>, vector<1x32x4xf32>
    %21 = vector.shape_cast %20 : vector<1x32x4xf32> to vector<32x4xf32>
    %22 = arith.addf %19, %21 : vector<32x4xf32>
    %c8 = arith.constant 8 : index
    %c0_16 = arith.constant 0 : index
    %c0_17 = arith.constant 0 : index
    %23 = vector.load %arg2[%c8, %c0_16, %c0_17] : memref<9x32x4xf32, #tpu.memory_space<vmem>>, vector<1x32x4xf32>
    %24 = vector.shape_cast %23 : vector<1x32x4xf32> to vector<32x4xf32>
    %25 = arith.addf %22, %24 : vector<32x4xf32>
    %c0_18 = arith.constant 0 : index
    %c0_19 = arith.constant 0 : index
    %26 = vector.load %arg3[%c0_18, %c0_19] : memref<32x4xf32, #tpu.memory_space<vmem>>, vector<32x4xf32>
    %27 = arith.mulf %25, %26 : vector<32x4xf32>
    %cst = arith.constant dense<0.000000e+00> : vector<4xf32>
    %28 = vector.multi_reduction <add>, %27, %cst [0] : vector<32x4xf32> to vector<4xf32>
    %29 = vector.shape_cast %28 : vector<4xf32> to vector<1x4xf32>
    %cst_20 = arith.constant 3.200000e+01 : f32
    %30 = vector.broadcast %cst_20 : f32 to vector<1x4xf32>
    %31 = arith.divf %29, %30 : vector<1x4xf32>
    %32 = vector.broadcast %31 : vector<1x4xf32> to vector<32x4xf32>
    %33 = arith.subf %27, %32 : vector<32x4xf32>
    %34 = vector.broadcast %31 : vector<1x4xf32> to vector<32x4xf32>
    %35 = arith.subf %27, %34 : vector<32x4xf32>
    %36 = arith.mulf %33, %35 : vector<32x4xf32>
    %cst_21 = arith.constant dense<0.000000e+00> : vector<4xf32>
    %37 = vector.multi_reduction <add>, %36, %cst_21 [0] : vector<32x4xf32> to vector<4xf32>
    %38 = vector.shape_cast %37 : vector<4xf32> to vector<1x4xf32>
    %cst_22 = arith.constant 3.200000e+01 : f32
    %39 = vector.broadcast %cst_22 : f32 to vector<1x4xf32>
    %40 = arith.divf %38, %39 : vector<1x4xf32>
    %41 = vector.broadcast %31 : vector<1x4xf32> to vector<32x4xf32>
    %42 = arith.subf %27, %41 : vector<32x4xf32>
    %cst_23 = arith.constant 9.99999974E-6 : f32
    %43 = vector.broadcast %cst_23 : f32 to vector<1x4xf32>
    %44 = arith.addf %40, %43 : vector<1x4xf32>
    %45 = math.rsqrt %44 : vector<1x4xf32>
    %46 = vector.broadcast %45 : vector<1x4xf32> to vector<32x4xf32>
    %47 = arith.mulf %42, %46 : vector<32x4xf32>
    %c0_24 = arith.constant 0 : index
    %c0_25 = arith.constant 0 : index
    %48 = vector.load %arg1[%c0_24, %c0_25] : memref<1x4xf32, #tpu.memory_space<vmem>>, vector<1x4xf32>
    %49 = vector.broadcast %48 : vector<1x4xf32> to vector<32x4xf32>
    %50 = arith.mulf %47, %49 : vector<32x4xf32>
    %c0_26 = arith.constant 0 : index
    %c0_27 = arith.constant 0 : index
    %51 = vector.load %arg4[%c0_26, %c0_27] : memref<32x4xf32, #tpu.memory_space<vmem>>, vector<32x4xf32>
    tpu.vector_store %arg4[%c0_26, %c0_27], %50 {strides = array<i32>} : memref<32x4xf32, #tpu.memory_space<vmem>>, vector<32x4xf32>,
    return
  }
  func.func @transform_0(%arg0: i32) -> (i32, i32) {
    %c0_i32 = arith.constant 0 : i32
    %c0_i32_0 = arith.constant 0 : i32
    %c0_i32_1 = arith.constant 0 : i32
    return %c0_i32, %c0_i32_0 : i32, i32
  }
  func.func @transform_1(%arg0: i32) -> (i32, i32, i32) {
    %c0_i32 = arith.constant 0 : i32
    %c0_i32_0 = arith.constant 0 : i32
    %c0_i32_1 = arith.constant 0 : i32
    %c0_i32_2 = arith.constant 0 : i32
    return %c0_i32, %c0_i32_0, %c0_i32_1 : i32, i32, i32
  }
  func.func @transform_2(%arg0: i32) -> (i32, i32) {
    %c0_i32 = arith.constant 0 : i32
    %c0_i32_0 = arith.constant 0 : i32
    %c0_i32_1 = arith.constant 0 : i32
    return %c0_i32, %c0_i32_0 : i32, i32
  }
  func.func @transform_3(%arg0: i32) -> (i32, i32) {
    %c0_i32 = arith.constant 0 : i32
    %c0_i32_0 = arith.constant 0 : i32
    %c0_i32_1 = arith.constant 0 : i32
    return %c0_i32, %c0_i32_0 : i32, i32
  }
}

module attributes {stable_mosaic.version = 11 : i64} {
  func.func @kernel(%arg0: i32, %arg1: memref<1x4xf32, #tpu.memory_space<vmem>>, %arg2: memref<32x36xf32, #tpu.memory_space<vmem>>, %arg3: memref<36x4xf32, #tpu.memory_space<vmem>>, %arg4: memref<32x4xf32, #tpu.memory_space<vmem>>) attributes {dimension_semantics = [#tpu.dimension_semantics<arbitrary>], iteration_bounds = array<i64: 1>, scalar_prefetch = 0 : i64, scratch_operands = 0 : i64, tpu.core_type = #tpu.core_type<tc>, window_params = [{pipeline_mode = #tpu.pipeline_mode<synchronous>, transform_indices = @transform_0, window_bounds = array<i64: 1, 4>}, {pipeline_mode = #tpu.pipeline_mode<synchronous>, transform_indices = @transform_1, window_bounds = array<i64: 32, 36>}, {pipeline_mode = #tpu.pipeline_mode<synchronous>, transform_indices = @transform_2, window_bounds = array<i64: 36, 4>}, {pipeline_mode = #tpu.pipeline_mode<synchronous>, transform_indices = @transform_3, window_bounds = array<i64: 32, 4>}]} {
    %c0 = arith.constant 0 : index
    %c0_0 = arith.constant 0 : index
    %0 = vector.load %arg2[%c0, %c0_0] : memref<32x36xf32, #tpu.memory_space<vmem>>, vector<32x36xf32>
    %cst = arith.constant 0.000000e+00 : f32
    %1 = vector.broadcast %cst : f32 to vector<32x36xf32>
    %2 = arith.maximumf %0, %1 : vector<32x36xf32>
    %c0_1 = arith.constant 0 : index
    %c0_2 = arith.constant 0 : index
    %3 = vector.load %arg3[%c0_1, %c0_2] : memref<36x4xf32, #tpu.memory_space<vmem>>, vector<36x4xf32>
    %cst_3 = arith.constant dense<0.000000e+00> : vector<32x4xf32>
    %4 = tpu.matmul %2, %3, %cst_3 {dimension_numbers = #tpu.dot_dimension_numbers<[1], [0], [0], [1], [0, 0, 1, 1], [], []>} : vector<32x36xf32>, vector<36x4xf32>, vector<32x4xf32> -> vector<32x4xf32>
    %cst_4 = arith.constant dense<0.000000e+00> : vector<4xf32>
    %5 = vector.multi_reduction <add>, %4, %cst_4 [0] : vector<32x4xf32> to vector<4xf32>
    %6 = vector.shape_cast %5 : vector<4xf32> to vector<1x4xf32>
    %cst_5 = arith.constant 3.200000e+01 : f32
    %7 = vector.broadcast %cst_5 : f32 to vector<1x4xf32>
    %8 = arith.divf %6, %7 : vector<1x4xf32>
    %9 = vector.broadcast %8 : vector<1x4xf32> to vector<32x4xf32>
    %10 = arith.subf %4, %9 : vector<32x4xf32>
    %11 = vector.broadcast %8 : vector<1x4xf32> to vector<32x4xf32>
    %12 = arith.subf %4, %11 : vector<32x4xf32>
    %13 = arith.mulf %10, %12 : vector<32x4xf32>
    %cst_6 = arith.constant dense<0.000000e+00> : vector<4xf32>
    %14 = vector.multi_reduction <add>, %13, %cst_6 [0] : vector<32x4xf32> to vector<4xf32>
    %15 = vector.shape_cast %14 : vector<4xf32> to vector<1x4xf32>
    %cst_7 = arith.constant 3.200000e+01 : f32
    %16 = vector.broadcast %cst_7 : f32 to vector<1x4xf32>
    %17 = arith.divf %15, %16 : vector<1x4xf32>
    %18 = vector.broadcast %8 : vector<1x4xf32> to vector<32x4xf32>
    %19 = arith.subf %4, %18 : vector<32x4xf32>
    %cst_8 = arith.constant 9.99999974E-6 : f32
    %20 = vector.broadcast %cst_8 : f32 to vector<1x4xf32>
    %21 = arith.addf %17, %20 : vector<1x4xf32>
    %22 = math.rsqrt %21 : vector<1x4xf32>
    %23 = vector.broadcast %22 : vector<1x4xf32> to vector<32x4xf32>
    %24 = arith.mulf %19, %23 : vector<32x4xf32>
    %c0_9 = arith.constant 0 : index
    %c0_10 = arith.constant 0 : index
    %25 = vector.load %arg1[%c0_9, %c0_10] : memref<1x4xf32, #tpu.memory_space<vmem>>, vector<1x4xf32>
    %26 = vector.broadcast %25 : vector<1x4xf32> to vector<32x4xf32>
    %27 = arith.mulf %24, %26 : vector<32x4xf32>
    %c0_11 = arith.constant 0 : index
    %c0_12 = arith.constant 0 : index
    %28 = vector.load %arg4[%c0_11, %c0_12] : memref<32x4xf32, #tpu.memory_space<vmem>>, vector<32x4xf32>
    tpu.vector_store %arg4[%c0_11, %c0_12], %27 {strides = array<i32>} : memref<32x4xf32, #tpu.memory_space<vmem>>, vector<32x4xf32>,
    return
  }
  func.func @transform_0(%arg0: i32) -> (i32, i32) {
    %c0_i32 = arith.constant 0 : i32
    %c0_i32_0 = arith.constant 0 : i32
    %c0_i32_1 = arith.constant 0 : i32
    return %c0_i32, %c0_i32_0 : i32, i32
  }
  func.func @transform_1(%arg0: i32) -> (i32, i32) {
    %c0_i32 = arith.constant 0 : i32
    %c0_i32_0 = arith.constant 0 : i32
    %c0_i32_1 = arith.constant 0 : i32
    return %c0_i32, %c0_i32_0 : i32, i32
  }
  func.func @transform_2(%arg0: i32) -> (i32, i32) {
    %c0_i32 = arith.constant 0 : i32
    %c0_i32_0 = arith.constant 0 : i32
    %c0_i32_1 = arith.constant 0 : i32
    return %c0_i32, %c0_i32_0 : i32, i32
  }
  func.func @transform_3(%arg0: i32) -> (i32, i32) {
    %c0_i32 = arith.constant 0 : i32
    %c0_i32_0 = arith.constant 0 : i32
    %c0_i32_1 = arith.constant 0 : i32
    return %c0_i32, %c0_i32_0 : i32, i32
  }
}

module attributes {stable_mosaic.version = 11 : i64} {
  func.func @kernel(%arg0: i32, %arg1: memref<1x2xf32, #tpu.memory_space<vmem>>, %arg2: memref<9x128x2xf32, #tpu.memory_space<vmem>>, %arg3: memref<128x2xf32, #tpu.memory_space<vmem>>) attributes {dimension_semantics = [#tpu.dimension_semantics<arbitrary>], iteration_bounds = array<i64: 1>, scalar_prefetch = 0 : i64, scratch_operands = 0 : i64, tpu.core_type = #tpu.core_type<tc>, window_params = [{pipeline_mode = #tpu.pipeline_mode<synchronous>, transform_indices = @transform_0, window_bounds = array<i64: 1, 2>}, {pipeline_mode = #tpu.pipeline_mode<synchronous>, transform_indices = @transform_1, window_bounds = array<i64: 9, 128, 2>}, {pipeline_mode = #tpu.pipeline_mode<synchronous>, transform_indices = @transform_2, window_bounds = array<i64: 128, 2>}]} {
    %c0 = arith.constant 0 : index
    %c0_0 = arith.constant 0 : index
    %c0_1 = arith.constant 0 : index
    %0 = vector.load %arg2[%c0, %c0_0, %c0_1] : memref<9x128x2xf32, #tpu.memory_space<vmem>>, vector<1x128x2xf32>
    %1 = vector.shape_cast %0 : vector<1x128x2xf32> to vector<128x2xf32>
    %c1 = arith.constant 1 : index
    %c0_2 = arith.constant 0 : index
    %c0_3 = arith.constant 0 : index
    %2 = vector.load %arg2[%c1, %c0_2, %c0_3] : memref<9x128x2xf32, #tpu.memory_space<vmem>>, vector<1x128x2xf32>
    %3 = vector.shape_cast %2 : vector<1x128x2xf32> to vector<128x2xf32>
    %4 = arith.maximumf %1, %3 : vector<128x2xf32>
    %c2 = arith.constant 2 : index
    %c0_4 = arith.constant 0 : index
    %c0_5 = arith.constant 0 : index
    %5 = vector.load %arg2[%c2, %c0_4, %c0_5] : memref<9x128x2xf32, #tpu.memory_space<vmem>>, vector<1x128x2xf32>
    %6 = vector.shape_cast %5 : vector<1x128x2xf32> to vector<128x2xf32>
    %7 = arith.maximumf %4, %6 : vector<128x2xf32>
    %c3 = arith.constant 3 : index
    %c0_6 = arith.constant 0 : index
    %c0_7 = arith.constant 0 : index
    %8 = vector.load %arg2[%c3, %c0_6, %c0_7] : memref<9x128x2xf32, #tpu.memory_space<vmem>>, vector<1x128x2xf32>
    %9 = vector.shape_cast %8 : vector<1x128x2xf32> to vector<128x2xf32>
    %10 = arith.maximumf %7, %9 : vector<128x2xf32>
    %c4 = arith.constant 4 : index
    %c0_8 = arith.constant 0 : index
    %c0_9 = arith.constant 0 : index
    %11 = vector.load %arg2[%c4, %c0_8, %c0_9] : memref<9x128x2xf32, #tpu.memory_space<vmem>>, vector<1x128x2xf32>
    %12 = vector.shape_cast %11 : vector<1x128x2xf32> to vector<128x2xf32>
    %13 = arith.maximumf %10, %12 : vector<128x2xf32>
    %c5 = arith.constant 5 : index
    %c0_10 = arith.constant 0 : index
    %c0_11 = arith.constant 0 : index
    %14 = vector.load %arg2[%c5, %c0_10, %c0_11] : memref<9x128x2xf32, #tpu.memory_space<vmem>>, vector<1x128x2xf32>
    %15 = vector.shape_cast %14 : vector<1x128x2xf32> to vector<128x2xf32>
    %16 = arith.maximumf %13, %15 : vector<128x2xf32>
    %c6 = arith.constant 6 : index
    %c0_12 = arith.constant 0 : index
    %c0_13 = arith.constant 0 : index
    %17 = vector.load %arg2[%c6, %c0_12, %c0_13] : memref<9x128x2xf32, #tpu.memory_space<vmem>>, vector<1x128x2xf32>
    %18 = vector.shape_cast %17 : vector<1x128x2xf32> to vector<128x2xf32>
    %19 = arith.maximumf %16, %18 : vector<128x2xf32>
    %c7 = arith.constant 7 : index
    %c0_14 = arith.constant 0 : index
    %c0_15 = arith.constant 0 : index
    %20 = vector.load %arg2[%c7, %c0_14, %c0_15] : memref<9x128x2xf32, #tpu.memory_space<vmem>>, vector<1x128x2xf32>
    %21 = vector.shape_cast %20 : vector<1x128x2xf32> to vector<128x2xf32>
    %22 = arith.maximumf %19, %21 : vector<128x2xf32>
    %c8 = arith.constant 8 : index
    %c0_16 = arith.constant 0 : index
    %c0_17 = arith.constant 0 : index
    %23 = vector.load %arg2[%c8, %c0_16, %c0_17] : memref<9x128x2xf32, #tpu.memory_space<vmem>>, vector<1x128x2xf32>
    %24 = vector.shape_cast %23 : vector<1x128x2xf32> to vector<128x2xf32>
    %25 = arith.maximumf %22, %24 : vector<128x2xf32>
    %cst = arith.constant dense<0.000000e+00> : vector<2xf32>
    %26 = vector.multi_reduction <add>, %25, %cst [0] : vector<128x2xf32> to vector<2xf32>
    %27 = vector.shape_cast %26 : vector<2xf32> to vector<1x2xf32>
    %cst_18 = arith.constant 1.280000e+02 : f32
    %28 = vector.broadcast %cst_18 : f32 to vector<1x2xf32>
    %29 = arith.divf %27, %28 : vector<1x2xf32>
    %30 = vector.broadcast %29 : vector<1x2xf32> to vector<128x2xf32>
    %31 = arith.subf %25, %30 : vector<128x2xf32>
    %32 = vector.broadcast %29 : vector<1x2xf32> to vector<128x2xf32>
    %33 = arith.subf %25, %32 : vector<128x2xf32>
    %34 = arith.mulf %31, %33 : vector<128x2xf32>
    %cst_19 = arith.constant dense<0.000000e+00> : vector<2xf32>
    %35 = vector.multi_reduction <add>, %34, %cst_19 [0] : vector<128x2xf32> to vector<2xf32>
    %36 = vector.shape_cast %35 : vector<2xf32> to vector<1x2xf32>
    %cst_20 = arith.constant 1.280000e+02 : f32
    %37 = vector.broadcast %cst_20 : f32 to vector<1x2xf32>
    %38 = arith.divf %36, %37 : vector<1x2xf32>
    %39 = vector.broadcast %29 : vector<1x2xf32> to vector<128x2xf32>
    %40 = arith.subf %25, %39 : vector<128x2xf32>
    %cst_21 = arith.constant 9.99999974E-6 : f32
    %41 = vector.broadcast %cst_21 : f32 to vector<1x2xf32>
    %42 = arith.addf %38, %41 : vector<1x2xf32>
    %43 = math.rsqrt %42 : vector<1x2xf32>
    %44 = vector.broadcast %43 : vector<1x2xf32> to vector<128x2xf32>
    %45 = arith.mulf %40, %44 : vector<128x2xf32>
    %c0_22 = arith.constant 0 : index
    %c0_23 = arith.constant 0 : index
    %46 = vector.load %arg1[%c0_22, %c0_23] : memref<1x2xf32, #tpu.memory_space<vmem>>, vector<1x2xf32>
    %47 = vector.broadcast %46 : vector<1x2xf32> to vector<128x2xf32>
    %48 = arith.mulf %45, %47 : vector<128x2xf32>
    %c0_24 = arith.constant 0 : index
    %c0_25 = arith.constant 0 : index
    %49 = vector.load %arg3[%c0_24, %c0_25] : memref<128x2xf32, #tpu.memory_space<vmem>>, vector<128x2xf32>
    tpu.vector_store %arg3[%c0_24, %c0_25], %48 {strides = array<i32>} : memref<128x2xf32, #tpu.memory_space<vmem>>, vector<128x2xf32>,
    return
  }
  func.func @transform_0(%arg0: i32) -> (i32, i32) {
    %c0_i32 = arith.constant 0 : i32
    %c0_i32_0 = arith.constant 0 : i32
    %c0_i32_1 = arith.constant 0 : i32
    return %c0_i32, %c0_i32_0 : i32, i32
  }
  func.func @transform_1(%arg0: i32) -> (i32, i32, i32) {
    %c0_i32 = arith.constant 0 : i32
    %c0_i32_0 = arith.constant 0 : i32
    %c0_i32_1 = arith.constant 0 : i32
    %c0_i32_2 = arith.constant 0 : i32
    return %c0_i32, %c0_i32_0, %c0_i32_1 : i32, i32, i32
  }
  func.func @transform_2(%arg0: i32) -> (i32, i32) {
    %c0_i32 = arith.constant 0 : i32
    %c0_i32_0 = arith.constant 0 : i32
    %c0_i32_1 = arith.constant 0 : i32
    return %c0_i32, %c0_i32_0 : i32, i32
  }
}

module attributes {stable_mosaic.version = 11 : i64} {
  func.func @kernel(%arg0: i32, %arg1: memref<1x2xf32, #tpu.memory_space<vmem>>, %arg2: memref<9x128x2xf32, #tpu.memory_space<vmem>>, %arg3: memref<128x2xf32, #tpu.memory_space<vmem>>, %arg4: memref<128x2xf32, #tpu.memory_space<vmem>>) attributes {dimension_semantics = [#tpu.dimension_semantics<arbitrary>], iteration_bounds = array<i64: 1>, scalar_prefetch = 0 : i64, scratch_operands = 0 : i64, tpu.core_type = #tpu.core_type<tc>, window_params = [{pipeline_mode = #tpu.pipeline_mode<synchronous>, transform_indices = @transform_0, window_bounds = array<i64: 1, 2>}, {pipeline_mode = #tpu.pipeline_mode<synchronous>, transform_indices = @transform_1, window_bounds = array<i64: 9, 128, 2>}, {pipeline_mode = #tpu.pipeline_mode<synchronous>, transform_indices = @transform_2, window_bounds = array<i64: 128, 2>}, {pipeline_mode = #tpu.pipeline_mode<synchronous>, transform_indices = @transform_3, window_bounds = array<i64: 128, 2>}]} {
    %c0 = arith.constant 0 : index
    %c0_0 = arith.constant 0 : index
    %c0_1 = arith.constant 0 : index
    %0 = vector.load %arg2[%c0, %c0_0, %c0_1] : memref<9x128x2xf32, #tpu.memory_space<vmem>>, vector<1x128x2xf32>
    %1 = vector.shape_cast %0 : vector<1x128x2xf32> to vector<128x2xf32>
    %c1 = arith.constant 1 : index
    %c0_2 = arith.constant 0 : index
    %c0_3 = arith.constant 0 : index
    %2 = vector.load %arg2[%c1, %c0_2, %c0_3] : memref<9x128x2xf32, #tpu.memory_space<vmem>>, vector<1x128x2xf32>
    %3 = vector.shape_cast %2 : vector<1x128x2xf32> to vector<128x2xf32>
    %4 = arith.addf %1, %3 : vector<128x2xf32>
    %c2 = arith.constant 2 : index
    %c0_4 = arith.constant 0 : index
    %c0_5 = arith.constant 0 : index
    %5 = vector.load %arg2[%c2, %c0_4, %c0_5] : memref<9x128x2xf32, #tpu.memory_space<vmem>>, vector<1x128x2xf32>
    %6 = vector.shape_cast %5 : vector<1x128x2xf32> to vector<128x2xf32>
    %7 = arith.addf %4, %6 : vector<128x2xf32>
    %c3 = arith.constant 3 : index
    %c0_6 = arith.constant 0 : index
    %c0_7 = arith.constant 0 : index
    %8 = vector.load %arg2[%c3, %c0_6, %c0_7] : memref<9x128x2xf32, #tpu.memory_space<vmem>>, vector<1x128x2xf32>
    %9 = vector.shape_cast %8 : vector<1x128x2xf32> to vector<128x2xf32>
    %10 = arith.addf %7, %9 : vector<128x2xf32>
    %c4 = arith.constant 4 : index
    %c0_8 = arith.constant 0 : index
    %c0_9 = arith.constant 0 : index
    %11 = vector.load %arg2[%c4, %c0_8, %c0_9] : memref<9x128x2xf32, #tpu.memory_space<vmem>>, vector<1x128x2xf32>
    %12 = vector.shape_cast %11 : vector<1x128x2xf32> to vector<128x2xf32>
    %13 = arith.addf %10, %12 : vector<128x2xf32>
    %c5 = arith.constant 5 : index
    %c0_10 = arith.constant 0 : index
    %c0_11 = arith.constant 0 : index
    %14 = vector.load %arg2[%c5, %c0_10, %c0_11] : memref<9x128x2xf32, #tpu.memory_space<vmem>>, vector<1x128x2xf32>
    %15 = vector.shape_cast %14 : vector<1x128x2xf32> to vector<128x2xf32>
    %16 = arith.addf %13, %15 : vector<128x2xf32>
    %c6 = arith.constant 6 : index
    %c0_12 = arith.constant 0 : index
    %c0_13 = arith.constant 0 : index
    %17 = vector.load %arg2[%c6, %c0_12, %c0_13] : memref<9x128x2xf32, #tpu.memory_space<vmem>>, vector<1x128x2xf32>
    %18 = vector.shape_cast %17 : vector<1x128x2xf32> to vector<128x2xf32>
    %19 = arith.addf %16, %18 : vector<128x2xf32>
    %c7 = arith.constant 7 : index
    %c0_14 = arith.constant 0 : index
    %c0_15 = arith.constant 0 : index
    %20 = vector.load %arg2[%c7, %c0_14, %c0_15] : memref<9x128x2xf32, #tpu.memory_space<vmem>>, vector<1x128x2xf32>
    %21 = vector.shape_cast %20 : vector<1x128x2xf32> to vector<128x2xf32>
    %22 = arith.addf %19, %21 : vector<128x2xf32>
    %c8 = arith.constant 8 : index
    %c0_16 = arith.constant 0 : index
    %c0_17 = arith.constant 0 : index
    %23 = vector.load %arg2[%c8, %c0_16, %c0_17] : memref<9x128x2xf32, #tpu.memory_space<vmem>>, vector<1x128x2xf32>
    %24 = vector.shape_cast %23 : vector<1x128x2xf32> to vector<128x2xf32>
    %25 = arith.addf %22, %24 : vector<128x2xf32>
    %c0_18 = arith.constant 0 : index
    %c0_19 = arith.constant 0 : index
    %26 = vector.load %arg3[%c0_18, %c0_19] : memref<128x2xf32, #tpu.memory_space<vmem>>, vector<128x2xf32>
    %27 = arith.mulf %25, %26 : vector<128x2xf32>
    %cst = arith.constant dense<0.000000e+00> : vector<2xf32>
    %28 = vector.multi_reduction <add>, %27, %cst [0] : vector<128x2xf32> to vector<2xf32>
    %29 = vector.shape_cast %28 : vector<2xf32> to vector<1x2xf32>
    %cst_20 = arith.constant 1.280000e+02 : f32
    %30 = vector.broadcast %cst_20 : f32 to vector<1x2xf32>
    %31 = arith.divf %29, %30 : vector<1x2xf32>
    %32 = vector.broadcast %31 : vector<1x2xf32> to vector<128x2xf32>
    %33 = arith.subf %27, %32 : vector<128x2xf32>
    %34 = vector.broadcast %31 : vector<1x2xf32> to vector<128x2xf32>
    %35 = arith.subf %27, %34 : vector<128x2xf32>
    %36 = arith.mulf %33, %35 : vector<128x2xf32>
    %cst_21 = arith.constant dense<0.000000e+00> : vector<2xf32>
    %37 = vector.multi_reduction <add>, %36, %cst_21 [0] : vector<128x2xf32> to vector<2xf32>
    %38 = vector.shape_cast %37 : vector<2xf32> to vector<1x2xf32>
    %cst_22 = arith.constant 1.280000e+02 : f32
    %39 = vector.broadcast %cst_22 : f32 to vector<1x2xf32>
    %40 = arith.divf %38, %39 : vector<1x2xf32>
    %41 = vector.broadcast %31 : vector<1x2xf32> to vector<128x2xf32>
    %42 = arith.subf %27, %41 : vector<128x2xf32>
    %cst_23 = arith.constant 9.99999974E-6 : f32
    %43 = vector.broadcast %cst_23 : f32 to vector<1x2xf32>
    %44 = arith.addf %40, %43 : vector<1x2xf32>
    %45 = math.rsqrt %44 : vector<1x2xf32>
    %46 = vector.broadcast %45 : vector<1x2xf32> to vector<128x2xf32>
    %47 = arith.mulf %42, %46 : vector<128x2xf32>
    %c0_24 = arith.constant 0 : index
    %c0_25 = arith.constant 0 : index
    %48 = vector.load %arg1[%c0_24, %c0_25] : memref<1x2xf32, #tpu.memory_space<vmem>>, vector<1x2xf32>
    %49 = vector.broadcast %48 : vector<1x2xf32> to vector<128x2xf32>
    %50 = arith.mulf %47, %49 : vector<128x2xf32>
    %c0_26 = arith.constant 0 : index
    %c0_27 = arith.constant 0 : index
    %51 = vector.load %arg4[%c0_26, %c0_27] : memref<128x2xf32, #tpu.memory_space<vmem>>, vector<128x2xf32>
    tpu.vector_store %arg4[%c0_26, %c0_27], %50 {strides = array<i32>} : memref<128x2xf32, #tpu.memory_space<vmem>>, vector<128x2xf32>,
    return
  }
  func.func @transform_0(%arg0: i32) -> (i32, i32) {
    %c0_i32 = arith.constant 0 : i32
    %c0_i32_0 = arith.constant 0 : i32
    %c0_i32_1 = arith.constant 0 : i32
    return %c0_i32, %c0_i32_0 : i32, i32
  }
  func.func @transform_1(%arg0: i32) -> (i32, i32, i32) {
    %c0_i32 = arith.constant 0 : i32
    %c0_i32_0 = arith.constant 0 : i32
    %c0_i32_1 = arith.constant 0 : i32
    %c0_i32_2 = arith.constant 0 : i32
    return %c0_i32, %c0_i32_0, %c0_i32_1 : i32, i32, i32
  }
  func.func @transform_2(%arg0: i32) -> (i32, i32) {
    %c0_i32 = arith.constant 0 : i32
    %c0_i32_0 = arith.constant 0 : i32
    %c0_i32_1 = arith.constant 0 : i32
    return %c0_i32, %c0_i32_0 : i32, i32
  }
  func.func @transform_3(%arg0: i32) -> (i32, i32) {
    %c0_i32 = arith.constant 0 : i32
    %c0_i32_0 = arith.constant 0 : i32
    %c0_i32_1 = arith.constant 0 : i32
    return %c0_i32, %c0_i32_0 : i32, i32
  }
}

module attributes {stable_mosaic.version = 11 : i64} {
  func.func @kernel(%arg0: i32, %arg1: memref<1x16xf32, #tpu.memory_space<vmem>>, %arg2: memref<32x16xf32, #tpu.memory_space<vmem>>, %arg3: memref<16x16xf32, #tpu.memory_space<vmem>>, %arg4: memref<32x16xf32, #tpu.memory_space<vmem>>) attributes {dimension_semantics = [#tpu.dimension_semantics<arbitrary>], iteration_bounds = array<i64: 1>, scalar_prefetch = 0 : i64, scratch_operands = 0 : i64, tpu.core_type = #tpu.core_type<tc>, window_params = [{pipeline_mode = #tpu.pipeline_mode<synchronous>, transform_indices = @transform_0, window_bounds = array<i64: 1, 16>}, {pipeline_mode = #tpu.pipeline_mode<synchronous>, transform_indices = @transform_1, window_bounds = array<i64: 32, 16>}, {pipeline_mode = #tpu.pipeline_mode<synchronous>, transform_indices = @transform_2, window_bounds = array<i64: 16, 16>}, {pipeline_mode = #tpu.pipeline_mode<synchronous>, transform_indices = @transform_3, window_bounds = array<i64: 32, 16>}]} {
    %c0 = arith.constant 0 : index
    %c0_0 = arith.constant 0 : index
    %0 = vector.load %arg2[%c0, %c0_0] : memref<32x16xf32, #tpu.memory_space<vmem>>, vector<32x16xf32>
    %cst = arith.constant 0.000000e+00 : f32
    %1 = vector.broadcast %cst : f32 to vector<32x16xf32>
    %2 = arith.maximumf %0, %1 : vector<32x16xf32>
    %c0_1 = arith.constant 0 : index
    %c0_2 = arith.constant 0 : index
    %3 = vector.load %arg3[%c0_1, %c0_2] : memref<16x16xf32, #tpu.memory_space<vmem>>, vector<16x16xf32>
    %cst_3 = arith.constant dense<0.000000e+00> : vector<32x16xf32>
    %4 = tpu.matmul %2, %3, %cst_3 {dimension_numbers = #tpu.dot_dimension_numbers<[1], [0], [0], [1], [0, 0, 1, 1], [], []>} : vector<32x16xf32>, vector<16x16xf32>, vector<32x16xf32> -> vector<32x16xf32>
    %cst_4 = arith.constant dense<0.000000e+00> : vector<16xf32>
    %5 = vector.multi_reduction <add>, %4, %cst_4 [0] : vector<32x16xf32> to vector<16xf32>
    %6 = vector.shape_cast %5 : vector<16xf32> to vector<1x16xf32>
    %cst_5 = arith.constant 3.200000e+01 : f32
    %7 = vector.broadcast %cst_5 : f32 to vector<1x16xf32>
    %8 = arith.divf %6, %7 : vector<1x16xf32>
    %9 = vector.broadcast %8 : vector<1x16xf32> to vector<32x16xf32>
    %10 = arith.subf %4, %9 : vector<32x16xf32>
    %11 = vector.broadcast %8 : vector<1x16xf32> to vector<32x16xf32>
    %12 = arith.subf %4, %11 : vector<32x16xf32>
    %13 = arith.mulf %10, %12 : vector<32x16xf32>
    %cst_6 = arith.constant dense<0.000000e+00> : vector<16xf32>
    %14 = vector.multi_reduction <add>, %13, %cst_6 [0] : vector<32x16xf32> to vector<16xf32>
    %15 = vector.shape_cast %14 : vector<16xf32> to vector<1x16xf32>
    %cst_7 = arith.constant 3.200000e+01 : f32
    %16 = vector.broadcast %cst_7 : f32 to vector<1x16xf32>
    %17 = arith.divf %15, %16 : vector<1x16xf32>
    %18 = vector.broadcast %8 : vector<1x16xf32> to vector<32x16xf32>
    %19 = arith.subf %4, %18 : vector<32x16xf32>
    %cst_8 = arith.constant 9.99999974E-6 : f32
    %20 = vector.broadcast %cst_8 : f32 to vector<1x16xf32>
    %21 = arith.addf %17, %20 : vector<1x16xf32>
    %22 = math.rsqrt %21 : vector<1x16xf32>
    %23 = vector.broadcast %22 : vector<1x16xf32> to vector<32x16xf32>
    %24 = arith.mulf %19, %23 : vector<32x16xf32>
    %c0_9 = arith.constant 0 : index
    %c0_10 = arith.constant 0 : index
    %25 = vector.load %arg1[%c0_9, %c0_10] : memref<1x16xf32, #tpu.memory_space<vmem>>, vector<1x16xf32>
    %26 = vector.broadcast %25 : vector<1x16xf32> to vector<32x16xf32>
    %27 = arith.mulf %24, %26 : vector<32x16xf32>
    %c0_11 = arith.constant 0 : index
    %c0_12 = arith.constant 0 : index
    %28 = vector.load %arg4[%c0_11, %c0_12] : memref<32x16xf32, #tpu.memory_space<vmem>>, vector<32x16xf32>
    tpu.vector_store %arg4[%c0_11, %c0_12], %27 {strides = array<i32>} : memref<32x16xf32, #tpu.memory_space<vmem>>, vector<32x16xf32>,
    return
  }
  func.func @transform_0(%arg0: i32) -> (i32, i32) {
    %c0_i32 = arith.constant 0 : i32
    %c0_i32_0 = arith.constant 0 : i32
    %c0_i32_1 = arith.constant 0 : i32
    return %c0_i32, %c0_i32_0 : i32, i32
  }
  func.func @transform_1(%arg0: i32) -> (i32, i32) {
    %c0_i32 = arith.constant 0 : i32
    %c0_i32_0 = arith.constant 0 : i32
    %c0_i32_1 = arith.constant 0 : i32
    return %c0_i32, %c0_i32_0 : i32, i32
  }
  func.func @transform_2(%arg0: i32) -> (i32, i32) {
    %c0_i32 = arith.constant 0 : i32
    %c0_i32_0 = arith.constant 0 : i32
    %c0_i32_1 = arith.constant 0 : i32
    return %c0_i32, %c0_i32_0 : i32, i32
  }
  func.func @transform_3(%arg0: i32) -> (i32, i32) {
    %c0_i32 = arith.constant 0 : i32
    %c0_i32_0 = arith.constant 0 : i32
    %c0_i32_1 = arith.constant 0 : i32
    return %c0_i32, %c0_i32_0 : i32, i32
  }
}

module attributes {stable_mosaic.version = 11 : i64} {
  func.func @kernel(%arg0: i32, %arg1: memref<1x8xf32, #tpu.memory_space<vmem>>, %arg2: memref<8x16xf32, #tpu.memory_space<vmem>>, %arg3: memref<16x8xf32, #tpu.memory_space<vmem>>, %arg4: memref<8x8xf32, #tpu.memory_space<vmem>>) attributes {dimension_semantics = [#tpu.dimension_semantics<arbitrary>], iteration_bounds = array<i64: 1>, scalar_prefetch = 0 : i64, scratch_operands = 0 : i64, tpu.core_type = #tpu.core_type<tc>, window_params = [{pipeline_mode = #tpu.pipeline_mode<synchronous>, transform_indices = @transform_0, window_bounds = array<i64: 1, 8>}, {pipeline_mode = #tpu.pipeline_mode<synchronous>, transform_indices = @transform_1, window_bounds = array<i64: 8, 16>}, {pipeline_mode = #tpu.pipeline_mode<synchronous>, transform_indices = @transform_2, window_bounds = array<i64: 16, 8>}, {pipeline_mode = #tpu.pipeline_mode<synchronous>, transform_indices = @transform_3, window_bounds = array<i64: 8, 8>}]} {
    %c0 = arith.constant 0 : index
    %c0_0 = arith.constant 0 : index
    %0 = vector.load %arg2[%c0, %c0_0] : memref<8x16xf32, #tpu.memory_space<vmem>>, vector<8x16xf32>
    %cst = arith.constant 0.000000e+00 : f32
    %1 = vector.broadcast %cst : f32 to vector<8x16xf32>
    %2 = arith.maximumf %0, %1 : vector<8x16xf32>
    %c0_1 = arith.constant 0 : index
    %c0_2 = arith.constant 0 : index
    %3 = vector.load %arg3[%c0_1, %c0_2] : memref<16x8xf32, #tpu.memory_space<vmem>>, vector<16x8xf32>
    %cst_3 = arith.constant dense<0.000000e+00> : vector<8x8xf32>
    %4 = tpu.matmul %2, %3, %cst_3 {dimension_numbers = #tpu.dot_dimension_numbers<[1], [0], [0], [1], [0, 0, 1, 1], [], []>} : vector<8x16xf32>, vector<16x8xf32>, vector<8x8xf32> -> vector<8x8xf32>
    %cst_4 = arith.constant dense<0.000000e+00> : vector<8xf32>
    %5 = vector.multi_reduction <add>, %4, %cst_4 [0] : vector<8x8xf32> to vector<8xf32>
    %6 = vector.shape_cast %5 : vector<8xf32> to vector<1x8xf32>
    %cst_5 = arith.constant 8.000000e+00 : f32
    %7 = vector.broadcast %cst_5 : f32 to vector<1x8xf32>
    %8 = arith.divf %6, %7 : vector<1x8xf32>
    %9 = vector.broadcast %8 : vector<1x8xf32> to vector<8x8xf32>
    %10 = arith.subf %4, %9 : vector<8x8xf32>
    %11 = vector.broadcast %8 : vector<1x8xf32> to vector<8x8xf32>
    %12 = arith.subf %4, %11 : vector<8x8xf32>
    %13 = arith.mulf %10, %12 : vector<8x8xf32>
    %cst_6 = arith.constant dense<0.000000e+00> : vector<8xf32>
    %14 = vector.multi_reduction <add>, %13, %cst_6 [0] : vector<8x8xf32> to vector<8xf32>
    %15 = vector.shape_cast %14 : vector<8xf32> to vector<1x8xf32>
    %cst_7 = arith.constant 8.000000e+00 : f32
    %16 = vector.broadcast %cst_7 : f32 to vector<1x8xf32>
    %17 = arith.divf %15, %16 : vector<1x8xf32>
    %18 = vector.broadcast %8 : vector<1x8xf32> to vector<8x8xf32>
    %19 = arith.subf %4, %18 : vector<8x8xf32>
    %cst_8 = arith.constant 9.99999974E-6 : f32
    %20 = vector.broadcast %cst_8 : f32 to vector<1x8xf32>
    %21 = arith.addf %17, %20 : vector<1x8xf32>
    %22 = math.rsqrt %21 : vector<1x8xf32>
    %23 = vector.broadcast %22 : vector<1x8xf32> to vector<8x8xf32>
    %24 = arith.mulf %19, %23 : vector<8x8xf32>
    %c0_9 = arith.constant 0 : index
    %c0_10 = arith.constant 0 : index
    %25 = vector.load %arg1[%c0_9, %c0_10] : memref<1x8xf32, #tpu.memory_space<vmem>>, vector<1x8xf32>
    %26 = vector.broadcast %25 : vector<1x8xf32> to vector<8x8xf32>
    %27 = arith.mulf %24, %26 : vector<8x8xf32>
    %c0_11 = arith.constant 0 : index
    %c0_12 = arith.constant 0 : index
    %28 = vector.load %arg4[%c0_11, %c0_12] : memref<8x8xf32, #tpu.memory_space<vmem>>, vector<8x8xf32>
    tpu.vector_store %arg4[%c0_11, %c0_12], %27 {strides = array<i32>} : memref<8x8xf32, #tpu.memory_space<vmem>>, vector<8x8xf32>,
    return
  }
  func.func @transform_0(%arg0: i32) -> (i32, i32) {
    %c0_i32 = arith.constant 0 : i32
    %c0_i32_0 = arith.constant 0 : i32
    %c0_i32_1 = arith.constant 0 : i32
    return %c0_i32, %c0_i32_0 : i32, i32
  }
  func.func @transform_1(%arg0: i32) -> (i32, i32) {
    %c0_i32 = arith.constant 0 : i32
    %c0_i32_0 = arith.constant 0 : i32
    %c0_i32_1 = arith.constant 0 : i32
    return %c0_i32, %c0_i32_0 : i32, i32
  }
  func.func @transform_2(%arg0: i32) -> (i32, i32) {
    %c0_i32 = arith.constant 0 : i32
    %c0_i32_0 = arith.constant 0 : i32
    %c0_i32_1 = arith.constant 0 : i32
    return %c0_i32, %c0_i32_0 : i32, i32
  }
  func.func @transform_3(%arg0: i32) -> (i32, i32) {
    %c0_i32 = arith.constant 0 : i32
    %c0_i32_0 = arith.constant 0 : i32
    %c0_i32_1 = arith.constant 0 : i32
    return %c0_i32, %c0_i32_0 : i32, i32
  }
}

module attributes {stable_mosaic.version = 11 : i64} {
  func.func @kernel(%arg0: i32, %arg1: memref<1x8xf32, #tpu.memory_space<vmem>>, %arg2: memref<4x8x8xf32, #tpu.memory_space<vmem>>, %arg3: memref<8x8xf32, #tpu.memory_space<vmem>>) attributes {dimension_semantics = [#tpu.dimension_semantics<arbitrary>], iteration_bounds = array<i64: 1>, scalar_prefetch = 0 : i64, scratch_operands = 0 : i64, tpu.core_type = #tpu.core_type<tc>, window_params = [{pipeline_mode = #tpu.pipeline_mode<synchronous>, transform_indices = @transform_0, window_bounds = array<i64: 1, 8>}, {pipeline_mode = #tpu.pipeline_mode<synchronous>, transform_indices = @transform_1, window_bounds = array<i64: 4, 8, 8>}, {pipeline_mode = #tpu.pipeline_mode<synchronous>, transform_indices = @transform_2, window_bounds = array<i64: 8, 8>}]} {
    %c0 = arith.constant 0 : index
    %c0_0 = arith.constant 0 : index
    %c0_1 = arith.constant 0 : index
    %0 = vector.load %arg2[%c0, %c0_0, %c0_1] : memref<4x8x8xf32, #tpu.memory_space<vmem>>, vector<1x8x8xf32>
    %1 = vector.shape_cast %0 : vector<1x8x8xf32> to vector<8x8xf32>
    %c1 = arith.constant 1 : index
    %c0_2 = arith.constant 0 : index
    %c0_3 = arith.constant 0 : index
    %2 = vector.load %arg2[%c1, %c0_2, %c0_3] : memref<4x8x8xf32, #tpu.memory_space<vmem>>, vector<1x8x8xf32>
    %3 = vector.shape_cast %2 : vector<1x8x8xf32> to vector<8x8xf32>
    %4 = arith.maximumf %1, %3 : vector<8x8xf32>
    %c2 = arith.constant 2 : index
    %c0_4 = arith.constant 0 : index
    %c0_5 = arith.constant 0 : index
    %5 = vector.load %arg2[%c2, %c0_4, %c0_5] : memref<4x8x8xf32, #tpu.memory_space<vmem>>, vector<1x8x8xf32>
    %6 = vector.shape_cast %5 : vector<1x8x8xf32> to vector<8x8xf32>
    %7 = arith.maximumf %4, %6 : vector<8x8xf32>
    %c3 = arith.constant 3 : index
    %c0_6 = arith.constant 0 : index
    %c0_7 = arith.constant 0 : index
    %8 = vector.load %arg2[%c3, %c0_6, %c0_7] : memref<4x8x8xf32, #tpu.memory_space<vmem>>, vector<1x8x8xf32>
    %9 = vector.shape_cast %8 : vector<1x8x8xf32> to vector<8x8xf32>
    %10 = arith.maximumf %7, %9 : vector<8x8xf32>
    %c0_8 = arith.constant 0 : index
    %c0_9 = arith.constant 0 : index
    %11 = vector.load %arg1[%c0_8, %c0_9] : memref<1x8xf32, #tpu.memory_space<vmem>>, vector<1x8xf32>
    %12 = vector.broadcast %11 : vector<1x8xf32> to vector<8x8xf32>
    %13 = arith.mulf %10, %12 : vector<8x8xf32>
    %c0_10 = arith.constant 0 : index
    %c0_11 = arith.constant 0 : index
    %14 = vector.load %arg3[%c0_10, %c0_11] : memref<8x8xf32, #tpu.memory_space<vmem>>, vector<8x8xf32>
    tpu.vector_store %arg3[%c0_10, %c0_11], %13 {strides = array<i32>} : memref<8x8xf32, #tpu.memory_space<vmem>>, vector<8x8xf32>,
    return
  }
  func.func @transform_0(%arg0: i32) -> (i32, i32) {
    %c0_i32 = arith.constant 0 : i32
    %c0_i32_0 = arith.constant 0 : i32
    %c0_i32_1 = arith.constant 0 : i32
    return %c0_i32, %c0_i32_0 : i32, i32
  }
  func.func @transform_1(%arg0: i32) -> (i32, i32, i32) {
    %c0_i32 = arith.constant 0 : i32
    %c0_i32_0 = arith.constant 0 : i32
    %c0_i32_1 = arith.constant 0 : i32
    %c0_i32_2 = arith.constant 0 : i32
    return %c0_i32, %c0_i32_0, %c0_i32_1 : i32, i32, i32
  }
  func.func @transform_2(%arg0: i32) -> (i32, i32) {
    %c0_i32 = arith.constant 0 : i32
    %c0_i32_0 = arith.constant 0 : i32
    %c0_i32_1 = arith.constant 0 : i32
    return %c0_i32, %c0_i32_0 : i32, i32
  }
}

module attributes {stable_mosaic.version = 11 : i64} {
  func.func @kernel(%arg0: i32, %arg1: memref<1x8xf32, #tpu.memory_space<vmem>>, %arg2: memref<9x8x8xf32, #tpu.memory_space<vmem>>, %arg3: memref<8x8xf32, #tpu.memory_space<vmem>>) attributes {dimension_semantics = [#tpu.dimension_semantics<arbitrary>], iteration_bounds = array<i64: 1>, scalar_prefetch = 0 : i64, scratch_operands = 0 : i64, tpu.core_type = #tpu.core_type<tc>, window_params = [{pipeline_mode = #tpu.pipeline_mode<synchronous>, transform_indices = @transform_0, window_bounds = array<i64: 1, 8>}, {pipeline_mode = #tpu.pipeline_mode<synchronous>, transform_indices = @transform_1, window_bounds = array<i64: 9, 8, 8>}, {pipeline_mode = #tpu.pipeline_mode<synchronous>, transform_indices = @transform_2, window_bounds = array<i64: 8, 8>}]} {
    %c0 = arith.constant 0 : index
    %c0_0 = arith.constant 0 : index
    %c0_1 = arith.constant 0 : index
    %0 = vector.load %arg2[%c0, %c0_0, %c0_1] : memref<9x8x8xf32, #tpu.memory_space<vmem>>, vector<1x8x8xf32>
    %1 = vector.shape_cast %0 : vector<1x8x8xf32> to vector<8x8xf32>
    %c1 = arith.constant 1 : index
    %c0_2 = arith.constant 0 : index
    %c0_3 = arith.constant 0 : index
    %2 = vector.load %arg2[%c1, %c0_2, %c0_3] : memref<9x8x8xf32, #tpu.memory_space<vmem>>, vector<1x8x8xf32>
    %3 = vector.shape_cast %2 : vector<1x8x8xf32> to vector<8x8xf32>
    %4 = arith.maximumf %1, %3 : vector<8x8xf32>
    %c2 = arith.constant 2 : index
    %c0_4 = arith.constant 0 : index
    %c0_5 = arith.constant 0 : index
    %5 = vector.load %arg2[%c2, %c0_4, %c0_5] : memref<9x8x8xf32, #tpu.memory_space<vmem>>, vector<1x8x8xf32>
    %6 = vector.shape_cast %5 : vector<1x8x8xf32> to vector<8x8xf32>
    %7 = arith.maximumf %4, %6 : vector<8x8xf32>
    %c3 = arith.constant 3 : index
    %c0_6 = arith.constant 0 : index
    %c0_7 = arith.constant 0 : index
    %8 = vector.load %arg2[%c3, %c0_6, %c0_7] : memref<9x8x8xf32, #tpu.memory_space<vmem>>, vector<1x8x8xf32>
    %9 = vector.shape_cast %8 : vector<1x8x8xf32> to vector<8x8xf32>
    %10 = arith.maximumf %7, %9 : vector<8x8xf32>
    %c4 = arith.constant 4 : index
    %c0_8 = arith.constant 0 : index
    %c0_9 = arith.constant 0 : index
    %11 = vector.load %arg2[%c4, %c0_8, %c0_9] : memref<9x8x8xf32, #tpu.memory_space<vmem>>, vector<1x8x8xf32>
    %12 = vector.shape_cast %11 : vector<1x8x8xf32> to vector<8x8xf32>
    %13 = arith.maximumf %10, %12 : vector<8x8xf32>
    %c5 = arith.constant 5 : index
    %c0_10 = arith.constant 0 : index
    %c0_11 = arith.constant 0 : index
    %14 = vector.load %arg2[%c5, %c0_10, %c0_11] : memref<9x8x8xf32, #tpu.memory_space<vmem>>, vector<1x8x8xf32>
    %15 = vector.shape_cast %14 : vector<1x8x8xf32> to vector<8x8xf32>
    %16 = arith.maximumf %13, %15 : vector<8x8xf32>
    %c6 = arith.constant 6 : index
    %c0_12 = arith.constant 0 : index
    %c0_13 = arith.constant 0 : index
    %17 = vector.load %arg2[%c6, %c0_12, %c0_13] : memref<9x8x8xf32, #tpu.memory_space<vmem>>, vector<1x8x8xf32>
    %18 = vector.shape_cast %17 : vector<1x8x8xf32> to vector<8x8xf32>
    %19 = arith.maximumf %16, %18 : vector<8x8xf32>
    %c7 = arith.constant 7 : index
    %c0_14 = arith.constant 0 : index
    %c0_15 = arith.constant 0 : index
    %20 = vector.load %arg2[%c7, %c0_14, %c0_15] : memref<9x8x8xf32, #tpu.memory_space<vmem>>, vector<1x8x8xf32>
    %21 = vector.shape_cast %20 : vector<1x8x8xf32> to vector<8x8xf32>
    %22 = arith.maximumf %19, %21 : vector<8x8xf32>
    %c8 = arith.constant 8 : index
    %c0_16 = arith.constant 0 : index
    %c0_17 = arith.constant 0 : index
    %23 = vector.load %arg2[%c8, %c0_16, %c0_17] : memref<9x8x8xf32, #tpu.memory_space<vmem>>, vector<1x8x8xf32>
    %24 = vector.shape_cast %23 : vector<1x8x8xf32> to vector<8x8xf32>
    %25 = arith.maximumf %22, %24 : vector<8x8xf32>
    %cst = arith.constant dense<0.000000e+00> : vector<8xf32>
    %26 = vector.multi_reduction <add>, %25, %cst [0] : vector<8x8xf32> to vector<8xf32>
    %27 = vector.shape_cast %26 : vector<8xf32> to vector<1x8xf32>
    %cst_18 = arith.constant 8.000000e+00 : f32
    %28 = vector.broadcast %cst_18 : f32 to vector<1x8xf32>
    %29 = arith.divf %27, %28 : vector<1x8xf32>
    %30 = vector.broadcast %29 : vector<1x8xf32> to vector<8x8xf32>
    %31 = arith.subf %25, %30 : vector<8x8xf32>
    %32 = vector.broadcast %29 : vector<1x8xf32> to vector<8x8xf32>
    %33 = arith.subf %25, %32 : vector<8x8xf32>
    %34 = arith.mulf %31, %33 : vector<8x8xf32>
    %cst_19 = arith.constant dense<0.000000e+00> : vector<8xf32>
    %35 = vector.multi_reduction <add>, %34, %cst_19 [0] : vector<8x8xf32> to vector<8xf32>
    %36 = vector.shape_cast %35 : vector<8xf32> to vector<1x8xf32>
    %cst_20 = arith.constant 8.000000e+00 : f32
    %37 = vector.broadcast %cst_20 : f32 to vector<1x8xf32>
    %38 = arith.divf %36, %37 : vector<1x8xf32>
    %39 = vector.broadcast %29 : vector<1x8xf32> to vector<8x8xf32>
    %40 = arith.subf %25, %39 : vector<8x8xf32>
    %cst_21 = arith.constant 9.99999974E-6 : f32
    %41 = vector.broadcast %cst_21 : f32 to vector<1x8xf32>
    %42 = arith.addf %38, %41 : vector<1x8xf32>
    %43 = math.rsqrt %42 : vector<1x8xf32>
    %44 = vector.broadcast %43 : vector<1x8xf32> to vector<8x8xf32>
    %45 = arith.mulf %40, %44 : vector<8x8xf32>
    %c0_22 = arith.constant 0 : index
    %c0_23 = arith.constant 0 : index
    %46 = vector.load %arg1[%c0_22, %c0_23] : memref<1x8xf32, #tpu.memory_space<vmem>>, vector<1x8xf32>
    %47 = vector.broadcast %46 : vector<1x8xf32> to vector<8x8xf32>
    %48 = arith.mulf %45, %47 : vector<8x8xf32>
    %c0_24 = arith.constant 0 : index
    %c0_25 = arith.constant 0 : index
    %49 = vector.load %arg3[%c0_24, %c0_25] : memref<8x8xf32, #tpu.memory_space<vmem>>, vector<8x8xf32>
    tpu.vector_store %arg3[%c0_24, %c0_25], %48 {strides = array<i32>} : memref<8x8xf32, #tpu.memory_space<vmem>>, vector<8x8xf32>,
    return
  }
  func.func @transform_0(%arg0: i32) -> (i32, i32) {
    %c0_i32 = arith.constant 0 : i32
    %c0_i32_0 = arith.constant 0 : i32
    %c0_i32_1 = arith.constant 0 : i32
    return %c0_i32, %c0_i32_0 : i32, i32
  }
  func.func @transform_1(%arg0: i32) -> (i32, i32, i32) {
    %c0_i32 = arith.constant 0 : i32
    %c0_i32_0 = arith.constant 0 : i32
    %c0_i32_1 = arith.constant 0 : i32
    %c0_i32_2 = arith.constant 0 : i32
    return %c0_i32, %c0_i32_0, %c0_i32_1 : i32, i32, i32
  }
  func.func @transform_2(%arg0: i32) -> (i32, i32) {
    %c0_i32 = arith.constant 0 : i32
    %c0_i32_0 = arith.constant 0 : i32
    %c0_i32_1 = arith.constant 0 : i32
    return %c0_i32, %c0_i32_0 : i32, i32
  }
}

module attributes {stable_mosaic.version = 11 : i64} {
  func.func @kernel(%arg0: i32, %arg1: memref<1x8xf32, #tpu.memory_space<vmem>>, %arg2: memref<9x8x8xf32, #tpu.memory_space<vmem>>, %arg3: memref<8x8xf32, #tpu.memory_space<vmem>>, %arg4: memref<8x8xf32, #tpu.memory_space<vmem>>) attributes {dimension_semantics = [#tpu.dimension_semantics<arbitrary>], iteration_bounds = array<i64: 1>, scalar_prefetch = 0 : i64, scratch_operands = 0 : i64, tpu.core_type = #tpu.core_type<tc>, window_params = [{pipeline_mode = #tpu.pipeline_mode<synchronous>, transform_indices = @transform_0, window_bounds = array<i64: 1, 8>}, {pipeline_mode = #tpu.pipeline_mode<synchronous>, transform_indices = @transform_1, window_bounds = array<i64: 9, 8, 8>}, {pipeline_mode = #tpu.pipeline_mode<synchronous>, transform_indices = @transform_2, window_bounds = array<i64: 8, 8>}, {pipeline_mode = #tpu.pipeline_mode<synchronous>, transform_indices = @transform_3, window_bounds = array<i64: 8, 8>}]} {
    %c0 = arith.constant 0 : index
    %c0_0 = arith.constant 0 : index
    %c0_1 = arith.constant 0 : index
    %0 = vector.load %arg2[%c0, %c0_0, %c0_1] : memref<9x8x8xf32, #tpu.memory_space<vmem>>, vector<1x8x8xf32>
    %1 = vector.shape_cast %0 : vector<1x8x8xf32> to vector<8x8xf32>
    %c1 = arith.constant 1 : index
    %c0_2 = arith.constant 0 : index
    %c0_3 = arith.constant 0 : index
    %2 = vector.load %arg2[%c1, %c0_2, %c0_3] : memref<9x8x8xf32, #tpu.memory_space<vmem>>, vector<1x8x8xf32>
    %3 = vector.shape_cast %2 : vector<1x8x8xf32> to vector<8x8xf32>
    %4 = arith.addf %1, %3 : vector<8x8xf32>
    %c2 = arith.constant 2 : index
    %c0_4 = arith.constant 0 : index
    %c0_5 = arith.constant 0 : index
    %5 = vector.load %arg2[%c2, %c0_4, %c0_5] : memref<9x8x8xf32, #tpu.memory_space<vmem>>, vector<1x8x8xf32>
    %6 = vector.shape_cast %5 : vector<1x8x8xf32> to vector<8x8xf32>
    %7 = arith.addf %4, %6 : vector<8x8xf32>
    %c3 = arith.constant 3 : index
    %c0_6 = arith.constant 0 : index
    %c0_7 = arith.constant 0 : index
    %8 = vector.load %arg2[%c3, %c0_6, %c0_7] : memref<9x8x8xf32, #tpu.memory_space<vmem>>, vector<1x8x8xf32>
    %9 = vector.shape_cast %8 : vector<1x8x8xf32> to vector<8x8xf32>
    %10 = arith.addf %7, %9 : vector<8x8xf32>
    %c4 = arith.constant 4 : index
    %c0_8 = arith.constant 0 : index
    %c0_9 = arith.constant 0 : index
    %11 = vector.load %arg2[%c4, %c0_8, %c0_9] : memref<9x8x8xf32, #tpu.memory_space<vmem>>, vector<1x8x8xf32>
    %12 = vector.shape_cast %11 : vector<1x8x8xf32> to vector<8x8xf32>
    %13 = arith.addf %10, %12 : vector<8x8xf32>
    %c5 = arith.constant 5 : index
    %c0_10 = arith.constant 0 : index
    %c0_11 = arith.constant 0 : index
    %14 = vector.load %arg2[%c5, %c0_10, %c0_11] : memref<9x8x8xf32, #tpu.memory_space<vmem>>, vector<1x8x8xf32>
    %15 = vector.shape_cast %14 : vector<1x8x8xf32> to vector<8x8xf32>
    %16 = arith.addf %13, %15 : vector<8x8xf32>
    %c6 = arith.constant 6 : index
    %c0_12 = arith.constant 0 : index
    %c0_13 = arith.constant 0 : index
    %17 = vector.load %arg2[%c6, %c0_12, %c0_13] : memref<9x8x8xf32, #tpu.memory_space<vmem>>, vector<1x8x8xf32>
    %18 = vector.shape_cast %17 : vector<1x8x8xf32> to vector<8x8xf32>
    %19 = arith.addf %16, %18 : vector<8x8xf32>
    %c7 = arith.constant 7 : index
    %c0_14 = arith.constant 0 : index
    %c0_15 = arith.constant 0 : index
    %20 = vector.load %arg2[%c7, %c0_14, %c0_15] : memref<9x8x8xf32, #tpu.memory_space<vmem>>, vector<1x8x8xf32>
    %21 = vector.shape_cast %20 : vector<1x8x8xf32> to vector<8x8xf32>
    %22 = arith.addf %19, %21 : vector<8x8xf32>
    %c8 = arith.constant 8 : index
    %c0_16 = arith.constant 0 : index
    %c0_17 = arith.constant 0 : index
    %23 = vector.load %arg2[%c8, %c0_16, %c0_17] : memref<9x8x8xf32, #tpu.memory_space<vmem>>, vector<1x8x8xf32>
    %24 = vector.shape_cast %23 : vector<1x8x8xf32> to vector<8x8xf32>
    %25 = arith.addf %22, %24 : vector<8x8xf32>
    %c0_18 = arith.constant 0 : index
    %c0_19 = arith.constant 0 : index
    %26 = vector.load %arg3[%c0_18, %c0_19] : memref<8x8xf32, #tpu.memory_space<vmem>>, vector<8x8xf32>
    %27 = arith.mulf %25, %26 : vector<8x8xf32>
    %cst = arith.constant dense<0.000000e+00> : vector<8xf32>
    %28 = vector.multi_reduction <add>, %27, %cst [0] : vector<8x8xf32> to vector<8xf32>
    %29 = vector.shape_cast %28 : vector<8xf32> to vector<1x8xf32>
    %cst_20 = arith.constant 8.000000e+00 : f32
    %30 = vector.broadcast %cst_20 : f32 to vector<1x8xf32>
    %31 = arith.divf %29, %30 : vector<1x8xf32>
    %32 = vector.broadcast %31 : vector<1x8xf32> to vector<8x8xf32>
    %33 = arith.subf %27, %32 : vector<8x8xf32>
    %34 = vector.broadcast %31 : vector<1x8xf32> to vector<8x8xf32>
    %35 = arith.subf %27, %34 : vector<8x8xf32>
    %36 = arith.mulf %33, %35 : vector<8x8xf32>
    %cst_21 = arith.constant dense<0.000000e+00> : vector<8xf32>
    %37 = vector.multi_reduction <add>, %36, %cst_21 [0] : vector<8x8xf32> to vector<8xf32>
    %38 = vector.shape_cast %37 : vector<8xf32> to vector<1x8xf32>
    %cst_22 = arith.constant 8.000000e+00 : f32
    %39 = vector.broadcast %cst_22 : f32 to vector<1x8xf32>
    %40 = arith.divf %38, %39 : vector<1x8xf32>
    %41 = vector.broadcast %31 : vector<1x8xf32> to vector<8x8xf32>
    %42 = arith.subf %27, %41 : vector<8x8xf32>
    %cst_23 = arith.constant 9.99999974E-6 : f32
    %43 = vector.broadcast %cst_23 : f32 to vector<1x8xf32>
    %44 = arith.addf %40, %43 : vector<1x8xf32>
    %45 = math.rsqrt %44 : vector<1x8xf32>
    %46 = vector.broadcast %45 : vector<1x8xf32> to vector<8x8xf32>
    %47 = arith.mulf %42, %46 : vector<8x8xf32>
    %c0_24 = arith.constant 0 : index
    %c0_25 = arith.constant 0 : index
    %48 = vector.load %arg1[%c0_24, %c0_25] : memref<1x8xf32, #tpu.memory_space<vmem>>, vector<1x8xf32>
    %49 = vector.broadcast %48 : vector<1x8xf32> to vector<8x8xf32>
    %50 = arith.mulf %47, %49 : vector<8x8xf32>
    %c0_26 = arith.constant 0 : index
    %c0_27 = arith.constant 0 : index
    %51 = vector.load %arg4[%c0_26, %c0_27] : memref<8x8xf32, #tpu.memory_space<vmem>>, vector<8x8xf32>
    tpu.vector_store %arg4[%c0_26, %c0_27], %50 {strides = array<i32>} : memref<8x8xf32, #tpu.memory_space<vmem>>, vector<8x8xf32>,
    return
  }
  func.func @transform_0(%arg0: i32) -> (i32, i32) {
    %c0_i32 = arith.constant 0 : i32
    %c0_i32_0 = arith.constant 0 : i32
    %c0_i32_1 = arith.constant 0 : i32
    return %c0_i32, %c0_i32_0 : i32, i32
  }
  func.func @transform_1(%arg0: i32) -> (i32, i32, i32) {
    %c0_i32 = arith.constant 0 : i32
    %c0_i32_0 = arith.constant 0 : i32
    %c0_i32_1 = arith.constant 0 : i32
    %c0_i32_2 = arith.constant 0 : i32
    return %c0_i32, %c0_i32_0, %c0_i32_1 : i32, i32, i32
  }
  func.func @transform_2(%arg0: i32) -> (i32, i32) {
    %c0_i32 = arith.constant 0 : i32
    %c0_i32_0 = arith.constant 0 : i32
    %c0_i32_1 = arith.constant 0 : i32
    return %c0_i32, %c0_i32_0 : i32, i32
  }
  func.func @transform_3(%arg0: i32) -> (i32, i32) {
    %c0_i32 = arith.constant 0 : i32
    %c0_i32_0 = arith.constant 0 : i32
    %c0_i32_1 = arith.constant 0 : i32
    return %c0_i32, %c0_i32_0 : i32, i32
  }
}

module attributes {stable_mosaic.version = 11 : i64} {
  func.func @kernel(%arg0: i32, %arg1: memref<1x8xf32, #tpu.memory_space<vmem>>, %arg2: memref<8x72xf32, #tpu.memory_space<vmem>>, %arg3: memref<72x8xf32, #tpu.memory_space<vmem>>, %arg4: memref<8x8xf32, #tpu.memory_space<vmem>>) attributes {dimension_semantics = [#tpu.dimension_semantics<arbitrary>], iteration_bounds = array<i64: 1>, scalar_prefetch = 0 : i64, scratch_operands = 0 : i64, tpu.core_type = #tpu.core_type<tc>, window_params = [{pipeline_mode = #tpu.pipeline_mode<synchronous>, transform_indices = @transform_0, window_bounds = array<i64: 1, 8>}, {pipeline_mode = #tpu.pipeline_mode<synchronous>, transform_indices = @transform_1, window_bounds = array<i64: 8, 72>}, {pipeline_mode = #tpu.pipeline_mode<synchronous>, transform_indices = @transform_2, window_bounds = array<i64: 72, 8>}, {pipeline_mode = #tpu.pipeline_mode<synchronous>, transform_indices = @transform_3, window_bounds = array<i64: 8, 8>}]} {
    %c0 = arith.constant 0 : index
    %c0_0 = arith.constant 0 : index
    %0 = vector.load %arg2[%c0, %c0_0] : memref<8x72xf32, #tpu.memory_space<vmem>>, vector<8x72xf32>
    %cst = arith.constant 0.000000e+00 : f32
    %1 = vector.broadcast %cst : f32 to vector<8x72xf32>
    %2 = arith.maximumf %0, %1 : vector<8x72xf32>
    %c0_1 = arith.constant 0 : index
    %c0_2 = arith.constant 0 : index
    %3 = vector.load %arg3[%c0_1, %c0_2] : memref<72x8xf32, #tpu.memory_space<vmem>>, vector<72x8xf32>
    %cst_3 = arith.constant dense<0.000000e+00> : vector<8x8xf32>
    %4 = tpu.matmul %2, %3, %cst_3 {dimension_numbers = #tpu.dot_dimension_numbers<[1], [0], [0], [1], [0, 0, 1, 1], [], []>} : vector<8x72xf32>, vector<72x8xf32>, vector<8x8xf32> -> vector<8x8xf32>
    %cst_4 = arith.constant dense<0.000000e+00> : vector<8xf32>
    %5 = vector.multi_reduction <add>, %4, %cst_4 [0] : vector<8x8xf32> to vector<8xf32>
    %6 = vector.shape_cast %5 : vector<8xf32> to vector<1x8xf32>
    %cst_5 = arith.constant 8.000000e+00 : f32
    %7 = vector.broadcast %cst_5 : f32 to vector<1x8xf32>
    %8 = arith.divf %6, %7 : vector<1x8xf32>
    %9 = vector.broadcast %8 : vector<1x8xf32> to vector<8x8xf32>
    %10 = arith.subf %4, %9 : vector<8x8xf32>
    %11 = vector.broadcast %8 : vector<1x8xf32> to vector<8x8xf32>
    %12 = arith.subf %4, %11 : vector<8x8xf32>
    %13 = arith.mulf %10, %12 : vector<8x8xf32>
    %cst_6 = arith.constant dense<0.000000e+00> : vector<8xf32>
    %14 = vector.multi_reduction <add>, %13, %cst_6 [0] : vector<8x8xf32> to vector<8xf32>
    %15 = vector.shape_cast %14 : vector<8xf32> to vector<1x8xf32>
    %cst_7 = arith.constant 8.000000e+00 : f32
    %16 = vector.broadcast %cst_7 : f32 to vector<1x8xf32>
    %17 = arith.divf %15, %16 : vector<1x8xf32>
    %18 = vector.broadcast %8 : vector<1x8xf32> to vector<8x8xf32>
    %19 = arith.subf %4, %18 : vector<8x8xf32>
    %cst_8 = arith.constant 9.99999974E-6 : f32
    %20 = vector.broadcast %cst_8 : f32 to vector<1x8xf32>
    %21 = arith.addf %17, %20 : vector<1x8xf32>
    %22 = math.rsqrt %21 : vector<1x8xf32>
    %23 = vector.broadcast %22 : vector<1x8xf32> to vector<8x8xf32>
    %24 = arith.mulf %19, %23 : vector<8x8xf32>
    %c0_9 = arith.constant 0 : index
    %c0_10 = arith.constant 0 : index
    %25 = vector.load %arg1[%c0_9, %c0_10] : memref<1x8xf32, #tpu.memory_space<vmem>>, vector<1x8xf32>
    %26 = vector.broadcast %25 : vector<1x8xf32> to vector<8x8xf32>
    %27 = arith.mulf %24, %26 : vector<8x8xf32>
    %c0_11 = arith.constant 0 : index
    %c0_12 = arith.constant 0 : index
    %28 = vector.load %arg4[%c0_11, %c0_12] : memref<8x8xf32, #tpu.memory_space<vmem>>, vector<8x8xf32>
    tpu.vector_store %arg4[%c0_11, %c0_12], %27 {strides = array<i32>} : memref<8x8xf32, #tpu.memory_space<vmem>>, vector<8x8xf32>,
    return
  }
  func.func @transform_0(%arg0: i32) -> (i32, i32) {
    %c0_i32 = arith.constant 0 : i32
    %c0_i32_0 = arith.constant 0 : i32
    %c0_i32_1 = arith.constant 0 : i32
    return %c0_i32, %c0_i32_0 : i32, i32
  }
  func.func @transform_1(%arg0: i32) -> (i32, i32) {
    %c0_i32 = arith.constant 0 : i32
    %c0_i32_0 = arith.constant 0 : i32
    %c0_i32_1 = arith.constant 0 : i32
    return %c0_i32, %c0_i32_0 : i32, i32
  }
  func.func @transform_2(%arg0: i32) -> (i32, i32) {
    %c0_i32 = arith.constant 0 : i32
    %c0_i32_0 = arith.constant 0 : i32
    %c0_i32_1 = arith.constant 0 : i32
    return %c0_i32, %c0_i32_0 : i32, i32
  }
  func.func @transform_3(%arg0: i32) -> (i32, i32) {
    %c0_i32 = arith.constant 0 : i32
    %c0_i32_0 = arith.constant 0 : i32
    %c0_i32_1 = arith.constant 0 : i32
    return %c0_i32, %c0_i32_0 : i32, i32
  }
}

module attributes {stable_mosaic.version = 11 : i64} {
  func.func @_gap_fc_kernel(%arg0: i32, %arg1: memref<2x4x32xf32, #tpu.memory_space<vmem>>, %arg2: memref<32x2xf32, #tpu.memory_space<vmem>>, %arg3: memref<1x2xf32, #tpu.memory_space<vmem>>, %arg4: memref<2x2xf32, #tpu.memory_space<vmem>>) attributes {dimension_semantics = [#tpu.dimension_semantics<arbitrary>], iteration_bounds = array<i64: 1>, scalar_prefetch = 0 : i64, scratch_operands = 0 : i64, tpu.core_type = #tpu.core_type<tc>, window_params = [{pipeline_mode = #tpu.pipeline_mode<synchronous>, transform_indices = @transform_0, window_bounds = array<i64: 2, 4, 32>}, {pipeline_mode = #tpu.pipeline_mode<synchronous>, transform_indices = @transform_1, window_bounds = array<i64: 32, 2>}, {pipeline_mode = #tpu.pipeline_mode<synchronous>, transform_indices = @transform_2, window_bounds = array<i64: 1, 2>}, {pipeline_mode = #tpu.pipeline_mode<synchronous>, transform_indices = @transform_3, window_bounds = array<i64: 2, 2>}]} {
    %c0 = arith.constant 0 : index
    %c0_0 = arith.constant 0 : index
    %c0_1 = arith.constant 0 : index
    %0 = vector.load %arg1[%c0, %c0_0, %c0_1] : memref<2x4x32xf32, #tpu.memory_space<vmem>>, vector<2x4x32xf32>
    %cst = arith.constant dense<0.000000e+00> : vector<2x32xf32>
    %1 = vector.multi_reduction <add>, %0, %cst [1] : vector<2x4x32xf32> to vector<2x32xf32>
    %cst_2 = arith.constant 4.000000e+00 : f32
    %2 = vector.broadcast %cst_2 : f32 to vector<2x32xf32>
    %3 = arith.divf %1, %2 : vector<2x32xf32>
    %c0_3 = arith.constant 0 : index
    %c0_4 = arith.constant 0 : index
    %4 = vector.load %arg2[%c0_3, %c0_4] : memref<32x2xf32, #tpu.memory_space<vmem>>, vector<32x2xf32>
    %cst_5 = arith.constant dense<0.000000e+00> : vector<2x2xf32>
    %5 = tpu.matmul %3, %4, %cst_5 {dimension_numbers = #tpu.dot_dimension_numbers<[1], [0], [0], [1], [0, 0, 1, 1], [], []>} : vector<2x32xf32>, vector<32x2xf32>, vector<2x2xf32> -> vector<2x2xf32>
    %c0_6 = arith.constant 0 : index
    %c0_7 = arith.constant 0 : index
    %6 = vector.load %arg3[%c0_6, %c0_7] : memref<1x2xf32, #tpu.memory_space<vmem>>, vector<1x2xf32>
    %7 = vector.broadcast %6 : vector<1x2xf32> to vector<2x2xf32>
    %8 = arith.addf %5, %7 : vector<2x2xf32>
    %c0_8 = arith.constant 0 : index
    %c0_9 = arith.constant 0 : index
    %9 = vector.load %arg4[%c0_8, %c0_9] : memref<2x2xf32, #tpu.memory_space<vmem>>, vector<2x2xf32>
    tpu.vector_store %arg4[%c0_8, %c0_9], %8 {strides = array<i32>} : memref<2x2xf32, #tpu.memory_space<vmem>>, vector<2x2xf32>,
    return
  }
  func.func @transform_0(%arg0: i32) -> (i32, i32, i32) {
    %c0_i32 = arith.constant 0 : i32
    %c0_i32_0 = arith.constant 0 : i32
    %c0_i32_1 = arith.constant 0 : i32
    %c0_i32_2 = arith.constant 0 : i32
    return %c0_i32, %c0_i32_0, %c0_i32_1 : i32, i32, i32
  }
  func.func @transform_1(%arg0: i32) -> (i32, i32) {
    %c0_i32 = arith.constant 0 : i32
    %c0_i32_0 = arith.constant 0 : i32
    %c0_i32_1 = arith.constant 0 : i32
    return %c0_i32, %c0_i32_0 : i32, i32
  }
  func.func @transform_2(%arg0: i32) -> (i32, i32) {
    %c0_i32 = arith.constant 0 : i32
    %c0_i32_0 = arith.constant 0 : i32
    %c0_i32_1 = arith.constant 0 : i32
    return %c0_i32, %c0_i32_0 : i32, i32
  }
  func.func @transform_3(%arg0: i32) -> (i32, i32) {
    %c0_i32 = arith.constant 0 : i32
    %c0_i32_0 = arith.constant 0 : i32
    %c0_i32_1 = arith.constant 0 : i32
    return %c0_i32, %c0_i32_0 : i32, i32
  }
}

</mosaic_0001>

<llo_original>
// kernel: forward.71
$region0: #{forward.71}
  #allocation0 [shape = 'u32[]', space=smem, size = 0x4, offset = 0x4, fixed_abs, tag = 'smem constant byte address 0x4 - core index']
  #allocation1 [shape = 'u32[72,128]{1,0:T(1,128)}', space=vmem, size = 0x9000, scoped, tag = 'internal scratch']
  %s0 = inlined_call_operand.vmem [shape: f32[1,4], index: 0, kind: input, shape index: {}]
  %s1 = inlined_call_operand.vmem [shape: f32[128,8], index: 1, kind: input, shape index: {}]
  %s2 = inlined_call_operand.vmem [shape: f32[8,4], index: 2, kind: input, shape index: {}]
  %s3 = inlined_call_operand.vmem [shape: f32[128,4], index: 3, kind: output, shape index: {}]
  %s4 = sld [smem:[#allocation0]]
  $region22: #{forward.71} parent=0
    _
  %s6 = ssub.s32 1, %s4
  %s7 = scalar_select 0, %s6, %s4
  // Predicated region
  $region2: #{forward.71} parent=0 // pred_check
    _
  $region3: #{forward.71} parent=0 // pred_check_branch
    %9 = sbr.rel (0) target = $region5
  $region4: #{forward.71} parent=0 // pred_region
    _
  $region5: #{forward.71} parent=0 // pred_fallthru
    _
  // Predicated region
  $region6: #{forward.71} parent=0 // pred_check
    _
  $region7: #{forward.71} parent=0 // pred_check_branch
    %11 = sbr.rel (0) target = $region9
  $region8: #{forward.71} parent=0 // pred_region
    _
  $region9: #{forward.71} parent=0 // pred_fallthru
    _
  // Predicated region
  $region10: #{forward.71} parent=0 // pred_check
    _
  $region11: #{forward.71} parent=0 // pred_check_branch
    %13 = sbr.rel (0) target = $region13
  $region12: #{forward.71} parent=0 // pred_region
    _
  $region13: #{forward.71} parent=0 // pred_fallthru
    _
  %v14 = vld [vmem:[%s1] sm:$0xff]
  %v15 = vld [vmem:[%s1 + $0x8] sm:$0xff]
  %v16 = vld [vmem:[%s1 + $0x10] sm:$0xff]
  %v17 = vld [vmem:[%s1 + $0x18] sm:$0xff]
  %v18 = vld [vmem:[%s1 + $0x20] sm:$0xff]
  %v19 = vld [vmem:[%s1 + $0x28] sm:$0xff]
  %v20 = vld [vmem:[%s1 + $0x30] sm:$0xff]
  %v21 = vld [vmem:[%s1 + $0x38] sm:$0xff]
  %v22 = vld [vmem:[%s1 + $0x40] sm:$0xff]
  %v23 = vld [vmem:[%s1 + $0x48] sm:$0xff]
  %v24 = vld [vmem:[%s1 + $0x50] sm:$0xff]
  %v25 = vld [vmem:[%s1 + $0x58] sm:$0xff]
  %v26 = vld [vmem:[%s1 + $0x60] sm:$0xff]
  %v27 = vld [vmem:[%s1 + $0x68] sm:$0xff]
  %v28 = vld [vmem:[%s1 + $0x70] sm:$0xff]
  %v29 = vld [vmem:[%s1 + $0x78] sm:$0xff]
  %v30 = vmax.f32 %v14, 0.0
  %v31 = vmax.f32 %v15, 0.0
  %v32 = vmax.f32 %v16, 0.0
  %v33 = vmax.f32 %v17, 0.0
  %v34 = vmax.f32 %v18, 0.0
  %v35 = vmax.f32 %v19, 0.0
  %v36 = vmax.f32 %v20, 0.0
  %v37 = vmax.f32 %v21, 0.0
  %v38 = vmax.f32 %v22, 0.0
  %v39 = vmax.f32 %v23, 0.0
  %v40 = vmax.f32 %v24, 0.0
  %v41 = vmax.f32 %v25, 0.0
  %v42 = vmax.f32 %v26, 0.0
  %v43 = vmax.f32 %v27, 0.0
  %v44 = vmax.f32 %v28, 0.0
  %v45 = vmax.f32 %v29, 0.0
  %v46 = vld [vmem:[%s2] sm:$0xff]
  %vm47 = vcmask 64512
  %v49 = vsel %vm47, %v30, 0
  %v52 = vsel %vm47, %v31, 0
  %v55 = vsel %vm47, %v32, 0
  %v58 = vsel %vm47, %v33, 0
  %v61 = vsel %vm47, %v34, 0
  %v64 = vsel %vm47, %v35, 0
  %v67 = vsel %vm47, %v36, 0
  %v70 = vsel %vm47, %v37, 0
  %v73 = vsel %vm47, %v38, 0
  %v76 = vsel %vm47, %v39, 0
  %v79 = vsel %vm47, %v40, 0
  %v82 = vsel %vm47, %v41, 0
  %v85 = vsel %vm47, %v42, 0
  %v88 = vsel %vm47, %v43, 0
  %v91 = vsel %vm47, %v44, 0
  %v94 = vsel %vm47, %v45, 0
  %96 = vmatpush.msra.mxu0 0.0
  %97 = vmatpush.msra.mxu0 0.0
  %98 = vmatpush.msra.mxu0 0.0
  %99 = vmatpush.msra.mxu0 0.0
  %100 = vmatpush.msra.mxu0 0.0
  %101 = vmatpush.msra.mxu0 0.0
  %102 = vmatpush.msra.mxu0 0.0
  %103 = vmatpush.msra.mxu0 0.0
  %104 = vmatpush.msra.mxu0 0.0
  %105 = vmatpush.msra.mxu0 0.0
  %106 = vmatpush.msra.mxu0 0.0
  %107 = vmatpush.msra.mxu0 0.0
  %108 = vmatpush.msra.mxu0 0.0
  %109 = vmatpush.msra.mxu0 0.0
  %110 = vmatpush.msra.mxu0 0.0
  %111 = vmatpush.msra.mxu0 %v46
  %112 = vmatmul.f32.gmra.mxu0 %v49
  %v113 = vpop.f32.mrf.mxu0
  %v114 = vadd.f32 0.0, %v113
  %115 = vmatmul.f32.gmra.mxu0 %v52
  %v116 = vpop.f32.mrf.mxu0
  %v117 = vadd.f32 0.0, %v116
  %118 = vmatmul.f32.gmra.mxu0 %v55
  %v119 = vpop.f32.mrf.mxu0
  %v120 = vadd.f32 0.0, %v119
  %121 = vmatmul.f32.gmra.mxu0 %v58
  %v122 = vpop.f32.mrf.mxu0
  %v123 = vadd.f32 0.0, %v122
  %124 = vmatmul.f32.gmra.mxu0 %v61
  %v125 = vpop.f32.mrf.mxu0
  %v126 = vadd.f32 0.0, %v125
  %127 = vmatmul.f32.gmra.mxu0 %v64
  %v128 = vpop.f32.mrf.mxu0
  %v129 = vadd.f32 0.0, %v128
  %130 = vmatmul.f32.gmra.mxu0 %v67
  %v131 = vpop.f32.mrf.mxu0
  %v132 = vadd.f32 0.0, %v131
  %133 = vmatmul.f32.gmra.mxu0 %v70
  %v134 = vpop.f32.mrf.mxu0
  %v135 = vadd.f32 0.0, %v134
  %136 = vmatmul.f32.gmra.mxu0 %v73
  %v137 = vpop.f32.mrf.mxu0
  %v138 = vadd.f32 0.0, %v137
  %139 = vmatmul.f32.gmra.mxu0 %v76
  %v140 = vpop.f32.mrf.mxu0
  %v141 = vadd.f32 0.0, %v140
  %142 = vmatmul.f32.gmra.mxu0 %v79
  %v143 = vpop.f32.mrf.mxu0
  %v144 = vadd.f32 0.0, %v143
  %145 = vmatmul.f32.gmra.mxu0 %v82
  %v146 = vpop.f32.mrf.mxu0
  %v147 = vadd.f32 0.0, %v146
  %148 = vmatmul.f32.gmra.mxu0 %v85
  %v149 = vpop.f32.mrf.mxu0
  %v150 = vadd.f32 0.0, %v149
  %151 = vmatmul.f32.gmra.mxu0 %v88
  %v152 = vpop.f32.mrf.mxu0
  %v153 = vadd.f32 0.0, %v152
  %154 = vmatmul.f32.gmra.mxu0 %v91
  %v155 = vpop.f32.mrf.mxu0
  %v156 = vadd.f32 0.0, %v155
  %157 = vmatmul.f32.gmra.mxu0 %v94
  %v158 = vpop.f32.mrf.mxu0
  %v159 = vadd.f32 0.0, %v158
  %160 = vdwg.mxu0
  %vm161 = vcmask 31744
  %v162 = vsel %vm161, %v114, 0.0
  %v163 = vsel %vm161, %v117, 0.0
  %v164 = vadd.f32 %v162, %v163
  %v165 = vsel %vm161, %v120, 0.0
  %v166 = vadd.f32 %v164, %v165
  %v167 = vsel %vm161, %v123, 0.0
  %v168 = vadd.f32 %v166, %v167
  %v169 = vsel %vm161, %v126, 0.0
  %v170 = vadd.f32 %v168, %v169
  %v171 = vsel %vm161, %v129, 0.0
  %v172 = vadd.f32 %v170, %v171
  %v173 = vsel %vm161, %v132, 0.0
  %v174 = vadd.f32 %v172, %v173
  %v175 = vsel %vm161, %v135, 0.0
  %v176 = vadd.f32 %v174, %v175
  %v177 = vsel %vm161, %v138, 0.0
  %v178 = vadd.f32 %v176, %v177
  %v179 = vsel %vm161, %v141, 0.0
  %v180 = vadd.f32 %v178, %v179
  %v181 = vsel %vm161, %v144, 0.0
  %v182 = vadd.f32 %v180, %v181
  %v183 = vsel %vm161, %v147, 0.0
  %v184 = vadd.f32 %v182, %v183
  %v185 = vsel %vm161, %v150, 0.0
  %v186 = vadd.f32 %v184, %v185
  %v187 = vsel %vm161, %v153, 0.0
  %v188 = vadd.f32 %v186, %v187
  %v189 = vsel %vm161, %v156, 0.0
  %v190 = vadd.f32 %v188, %v189
  %v191 = vsel %vm161, %v159, 0.0
  %v192 = vadd.f32 %v190, %v191
  %v193 = vrot.slane %v192, 4
  %v194 = vadd.f32 %v192, %v193
  %v195 = vrot.slane %v194, 2
  %v196 = vadd.f32 %v194, %v195
  %v197 = vrot.slane %v196, 1
  %v198 = vadd.f32 %v196, %v197
  %v199 = vrcp.pop 128.0
  %v200 = vmul.f32 128.0, %v199
  %v201 = vsub.f32 1.0, %v200
  %v202 = vmul.f32 %v199, %v201
  %v203 = vadd.f32 %v199, %v202
  %vm204 = vweird.f32 %v199
  %v205 = vsel %vm204, %v199, %v203
  %v206 = vmul.f32 %v198, %v205
  %v207 = vsub.f32 %v114, %v206
  %v208 = vsub.f32 %v117, %v206
  %v209 = vsub.f32 %v120, %v206
  %v210 = vsub.f32 %v123, %v206
  %v211 = vsub.f32 %v126, %v206
  %v212 = vsub.f32 %v129, %v206
  %v213 = vsub.f32 %v132, %v206
  %v214 = vsub.f32 %v135, %v206
  %v215 = vsub.f32 %v138, %v206
  %v216 = vsub.f32 %v141, %v206
  %v217 = vsub.f32 %v144, %v206
  %v218 = vsub.f32 %v147, %v206
  %v219 = vsub.f32 %v150, %v206
  %v220 = vsub.f32 %v153, %v206
  %v221 = vsub.f32 %v156, %v206
  %v222 = vsub.f32 %v159, %v206
  %v223 = vmul.f32 %v207, %v207
  %v224 = vmul.f32 %v208, %v208
  %v225 = vmul.f32 %v209, %v209
  %v226 = vmul.f32 %v210, %v210
  %v227 = vmul.f32 %v211, %v211
  %v228 = vmul.f32 %v212, %v212
  %v229 = vmul.f32 %v213, %v213
  %v230 = vmul.f32 %v214, %v214
  %v231 = vmul.f32 %v215, %v215
  %v232 = vmul.f32 %v216, %v216
  %v233 = vmul.f32 %v217, %v217
  %v234 = vmul.f32 %v218, %v218
  %v235 = vmul.f32 %v219, %v219
  %v236 = vmul.f32 %v220, %v220
  %v237 = vmul.f32 %v221, %v221
  %v238 = vmul.f32 %v222, %v222
  %v239 = vsel %vm161, %v223, 0.0
  %v240 = vsel %vm161, %v224, 0.0
  %v241 = vadd.f32 %v239, %v240
  %v242 = vsel %vm161, %v225, 0.0
  %v243 = vadd.f32 %v241, %v242
  %v244 = vsel %vm161, %v226, 0.0
  %v245 = vadd.f32 %v243, %v244
  %v246 = vsel %vm161, %v227, 0.0
  %v247 = vadd.f32 %v245, %v246
  %v248 = vsel %vm161, %v228, 0.0
  %v249 = vadd.f32 %v247, %v248
  %v250 = vsel %vm161, %v229, 0.0
  %v251 = vadd.f32 %v249, %v250
  %v252 = vsel %vm161, %v230, 0.0
  %v253 = vadd.f32 %v251, %v252
  %v254 = vsel %vm161, %v231, 0.0
  %v255 = vadd.f32 %v253, %v254
  %v256 = vsel %vm161, %v232, 0.0
  %v257 = vadd.f32 %v255, %v256
  %v258 = vsel %vm161, %v233, 0.0
  %v259 = vadd.f32 %v257, %v258
  %v260 = vsel %vm161, %v234, 0.0
  %v261 = vadd.f32 %v259, %v260
  %v262 = vsel %vm161, %v235, 0.0
  %v263 = vadd.f32 %v261, %v262
  %v264 = vsel %vm161, %v236, 0.0
  %v265 = vadd.f32 %v263, %v264
  %v266 = vsel %vm161, %v237, 0.0
  %v267 = vadd.f32 %v265, %v266
  %v268 = vsel %vm161, %v238, 0.0
  %v269 = vadd.f32 %v267, %v268
  %v270 = vrot.slane %v269, 4
  %v271 = vadd.f32 %v269, %v270
  %v272 = vrot.slane %v271, 2
  %v273 = vadd.f32 %v271, %v272
  %v274 = vrot.slane %v273, 1
  %v275 = vadd.f32 %v273, %v274
  %v276 = vmul.f32 %v275, %v205
  %v277 = vadd.f32 %v276, 1e-05
  %v278 = vrsqrt.pop %v277
  %v279 = vmul.f32 %v278, %v277
  %v280 = vmul.f32 %v279, %v278
  %v281 = vmul.f32 0.5, %v280
  %v282 = vsub.f32 1.5, %v281
  %v283 = vmul.f32 %v278, %v282
  %vm284 = vweird.f32 %v277
  %vm285 = vweird.f32 %v278
  %vm286 = vmor %vm284, %vm285
  %v287 = vsel %vm286, %v278, %v283
  %v288 = vmul.f32 %v207, %v287
  %v289 = vmul.f32 %v208, %v287
  %v290 = vmul.f32 %v209, %v287
  %v291 = vmul.f32 %v210, %v287
  %v292 = vmul.f32 %v211, %v287
  %v293 = vmul.f32 %v212, %v287
  %v294 = vmul.f32 %v213, %v287
  %v295 = vmul.f32 %v214, %v287
  %v296 = vmul.f32 %v215, %v287
  %v297 = vmul.f32 %v216, %v287
  %v298 = vmul.f32 %v217, %v287
  %v299 = vmul.f32 %v218, %v287
  %v300 = vmul.f32 %v219, %v287
  %v301 = vmul.f32 %v220, %v287
  %v302 = vmul.f32 %v221, %v287
  %v303 = vmul.f32 %v222, %v287
  %v304 = vld [vmem:[%s0] sm:$0x1]
  %v306 = vperm.slane %v304, 0
  %v308 = vmul.f32 %v288, %v306
  %v309 = vmul.f32 %v289, %v306
  %v310 = vmul.f32 %v290, %v306
  %v311 = vmul.f32 %v291, %v306
  %v312 = vmul.f32 %v292, %v306
  %v313 = vmul.f32 %v293, %v306
  %v314 = vmul.f32 %v294, %v306
  %v315 = vmul.f32 %v295, %v306
  %v316 = vmul.f32 %v296, %v306
  %v317 = vmul.f32 %v297, %v306
  %v318 = vmul.f32 %v298, %v306
  %v319 = vmul.f32 %v299, %v306
  %v320 = vmul.f32 %v300, %v306
  %v321 = vmul.f32 %v301, %v306
  %v322 = vmul.f32 %v302, %v306
  %v323 = vmul.f32 %v303, %v306
  %324 = vst.msk [vmem:[%s3] sm:$0xff] %vm161, %v308
  %325 = vst.msk [vmem:[%s3 + $0x8] sm:$0xff] %vm161, %v309
  %326 = vst.msk [vmem:[%s3 + $0x10] sm:$0xff] %vm161, %v310
  %327 = vst.msk [vmem:[%s3 + $0x18] sm:$0xff] %vm161, %v311
  %328 = vst.msk [vmem:[%s3 + $0x20] sm:$0xff] %vm161, %v312
  %329 = vst.msk [vmem:[%s3 + $0x28] sm:$0xff] %vm161, %v313
  %330 = vst.msk [vmem:[%s3 + $0x30] sm:$0xff] %vm161, %v314
  %331 = vst.msk [vmem:[%s3 + $0x38] sm:$0xff] %vm161, %v315
  %332 = vst.msk [vmem:[%s3 + $0x40] sm:$0xff] %vm161, %v316
  %333 = vst.msk [vmem:[%s3 + $0x48] sm:$0xff] %vm161, %v317
  %334 = vst.msk [vmem:[%s3 + $0x50] sm:$0xff] %vm161, %v318
  %335 = vst.msk [vmem:[%s3 + $0x58] sm:$0xff] %vm161, %v319
  %336 = vst.msk [vmem:[%s3 + $0x60] sm:$0xff] %vm161, %v320
  %337 = vst.msk [vmem:[%s3 + $0x68] sm:$0xff] %vm161, %v321
  %338 = vst.msk [vmem:[%s3 + $0x70] sm:$0xff] %vm161, %v322
  %339 = vst.msk [vmem:[%s3 + $0x78] sm:$0xff] %vm161, %v323
  // Predicated region
  $region14: #{forward.71} parent=0 // pred_check
    _
  $region15: #{forward.71} parent=0 // pred_check_branch
    %341 = sbr.rel (0) target = $region17
  $region16: #{forward.71} parent=0 // pred_region
    _
  $region17: #{forward.71} parent=0 // pred_fallthru
    _
  // Predicated region
  $region18: #{forward.71} parent=0 // pred_check
    _
  $region19: #{forward.71} parent=0 // pred_check_branch
    %343 = sbr.rel (0) target = $region21
  $region20: #{forward.71} parent=0 // pred_region
    _
  $region21: #{forward.71} parent=0 // pred_fallthru
    _

// kernel: forward.69
$region0: #{forward.69}
  #allocation0 [shape = 'u32[]', space=smem, size = 0x4, offset = 0x4, fixed_abs, tag = 'smem constant byte address 0x4 - core index']
  #allocation1 [shape = 'u32[72,128]{1,0:T(1,128)}', space=vmem, size = 0x9000, scoped, tag = 'internal scratch']
  %s0 = inlined_call_operand.vmem [shape: f32[1,8], index: 0, kind: input, shape index: {}]
  %s1 = inlined_call_operand.vmem [shape: f32[128,9], index: 1, kind: input, shape index: {}]
  %s2 = inlined_call_operand.vmem [shape: f32[9,8], index: 2, kind: input, shape index: {}]
  %s3 = inlined_call_operand.vmem [shape: f32[128,8], index: 3, kind: output, shape index: {}]
  %s4 = sld [smem:[#allocation0]]
  $region22: #{forward.69} parent=0
    _
  %s6 = ssub.s32 1, %s4
  %s7 = scalar_select 0, %s6, %s4
  // Predicated region
  $region2: #{forward.69} parent=0 // pred_check
    _
  $region3: #{forward.69} parent=0 // pred_check_branch
    %9 = sbr.rel (0) target = $region5
  $region4: #{forward.69} parent=0 // pred_region
    _
  $region5: #{forward.69} parent=0 // pred_fallthru
    _
  // Predicated region
  $region6: #{forward.69} parent=0 // pred_check
    _
  $region7: #{forward.69} parent=0 // pred_check_branch
    %11 = sbr.rel (0) target = $region9
  $region8: #{forward.69} parent=0 // pred_region
    _
  $region9: #{forward.69} parent=0 // pred_fallthru
    _
  // Predicated region
  $region10: #{forward.69} parent=0 // pred_check
    _
  $region11: #{forward.69} parent=0 // pred_check_branch
    %13 = sbr.rel (0) target = $region13
  $region12: #{forward.69} parent=0 // pred_region
    _
  $region13: #{forward.69} parent=0 // pred_fallthru
    _
  %v14 = vld [vmem:[%s1] sm:$0xff]
  %v15 = vld [vmem:[%s1 + $0x8] sm:$0xff]
  %v16 = vld [vmem:[%s1 + $0x10] sm:$0xff]
  %v17 = vld [vmem:[%s1 + $0x18] sm:$0xff]
  %v18 = vld [vmem:[%s1 + $0x20] sm:$0xff]
  %v19 = vld [vmem:[%s1 + $0x28] sm:$0xff]
  %v20 = vld [vmem:[%s1 + $0x30] sm:$0xff]
  %v21 = vld [vmem:[%s1 + $0x38] sm:$0xff]
  %v22 = vld [vmem:[%s1 + $0x40] sm:$0xff]
  %v23 = vld [vmem:[%s1 + $0x48] sm:$0xff]
  %v24 = vld [vmem:[%s1 + $0x50] sm:$0xff]
  %v25 = vld [vmem:[%s1 + $0x58] sm:$0xff]
  %v26 = vld [vmem:[%s1 + $0x60] sm:$0xff]
  %v27 = vld [vmem:[%s1 + $0x68] sm:$0xff]
  %v28 = vld [vmem:[%s1 + $0x70] sm:$0xff]
  %v29 = vld [vmem:[%s1 + $0x78] sm:$0xff]
  %v30 = vld [vmem:[%s2] sm:$0xff]
  %v31 = vld [vmem:[%s2 + $0x8] sm:$0x1]
  %vm32 = vcmask 72704
  %v34 = vsel %vm32, %v14, 0
  %v37 = vsel %vm32, %v15, 0
  %v40 = vsel %vm32, %v16, 0
  %v43 = vsel %vm32, %v17, 0
  %v46 = vsel %vm32, %v18, 0
  %v49 = vsel %vm32, %v19, 0
  %v52 = vsel %vm32, %v20, 0
  %v55 = vsel %vm32, %v21, 0
  %v58 = vsel %vm32, %v22, 0
  %v61 = vsel %vm32, %v23, 0
  %v64 = vsel %vm32, %v24, 0
  %v67 = vsel %vm32, %v25, 0
  %v70 = vsel %vm32, %v26, 0
  %v73 = vsel %vm32, %v27, 0
  %v76 = vsel %vm32, %v28, 0
  %v79 = vsel %vm32, %v29, 0
  %vm81 = vcmask 1040384
  %v83 = vsel %vm81, %v31, 0
  %85 = vmatpush.msra.mxu0 0.0
  %86 = vmatpush.msra.mxu0 0.0
  %87 = vmatpush.msra.mxu0 0.0
  %88 = vmatpush.msra.mxu0 0.0
  %89 = vmatpush.msra.mxu0 0.0
  %90 = vmatpush.msra.mxu0 0.0
  %91 = vmatpush.msra.mxu0 0.0
  %92 = vmatpush.msra.mxu0 0.0
  %93 = vmatpush.msra.mxu0 0.0
  %94 = vmatpush.msra.mxu0 0.0
  %95 = vmatpush.msra.mxu0 0.0
  %96 = vmatpush.msra.mxu0 0.0
  %97 = vmatpush.msra.mxu0 0.0
  %98 = vmatpush.msra.mxu0 0.0
  %99 = vmatpush.msra.mxu0 %v83
  %100 = vmatpush.msra.mxu0 %v30
  %101 = vmatmul.f32.gmra.mxu0 %v34
  %v102 = vpop.f32.mrf.mxu0
  %v103 = vadd.f32 0.0, %v102
  %104 = vmatmul.f32.gmra.mxu0 %v37
  %v105 = vpop.f32.mrf.mxu0
  %v106 = vadd.f32 0.0, %v105
  %107 = vmatmul.f32.gmra.mxu0 %v40
  %v108 = vpop.f32.mrf.mxu0
  %v109 = vadd.f32 0.0, %v108
  %110 = vmatmul.f32.gmra.mxu0 %v43
  %v111 = vpop.f32.mrf.mxu0
  %v112 = vadd.f32 0.0, %v111
  %113 = vmatmul.f32.gmra.mxu0 %v46
  %v114 = vpop.f32.mrf.mxu0
  %v115 = vadd.f32 0.0, %v114
  %116 = vmatmul.f32.gmra.mxu0 %v49
  %v117 = vpop.f32.mrf.mxu0
  %v118 = vadd.f32 0.0, %v117
  %119 = vmatmul.f32.gmra.mxu0 %v52
  %v120 = vpop.f32.mrf.mxu0
  %v121 = vadd.f32 0.0, %v120
  %122 = vmatmul.f32.gmra.mxu0 %v55
  %v123 = vpop.f32.mrf.mxu0
  %v124 = vadd.f32 0.0, %v123
  %125 = vmatmul.f32.gmra.mxu0 %v58
  %v126 = vpop.f32.mrf.mxu0
  %v127 = vadd.f32 0.0, %v126
  %128 = vmatmul.f32.gmra.mxu0 %v61
  %v129 = vpop.f32.mrf.mxu0
  %v130 = vadd.f32 0.0, %v129
  %131 = vmatmul.f32.gmra.mxu0 %v64
  %v132 = vpop.f32.mrf.mxu0
  %v133 = vadd.f32 0.0, %v132
  %134 = vmatmul.f32.gmra.mxu0 %v67
  %v135 = vpop.f32.mrf.mxu0
  %v136 = vadd.f32 0.0, %v135
  %137 = vmatmul.f32.gmra.mxu0 %v70
  %v138 = vpop.f32.mrf.mxu0
  %v139 = vadd.f32 0.0, %v138
  %140 = vmatmul.f32.gmra.mxu0 %v73
  %v141 = vpop.f32.mrf.mxu0
  %v142 = vadd.f32 0.0, %v141
  %143 = vmatmul.f32.gmra.mxu0 %v76
  %v144 = vpop.f32.mrf.mxu0
  %v145 = vadd.f32 0.0, %v144
  %146 = vmatmul.f32.gmra.mxu0 %v79
  %v147 = vpop.f32.mrf.mxu0
  %v148 = vadd.f32 0.0, %v147
  %149 = vdwg.mxu0
  %vm150 = vcmask 64512
  %v151 = vsel %vm150, %v103, 0.0
  %v152 = vsel %vm150, %v106, 0.0
  %v153 = vadd.f32 %v151, %v152
  %v154 = vsel %vm150, %v109, 0.0
  %v155 = vadd.f32 %v153, %v154
  %v156 = vsel %vm150, %v112, 0.0
  %v157 = vadd.f32 %v155, %v156
  %v158 = vsel %vm150, %v115, 0.0
  %v159 = vadd.f32 %v157, %v158
  %v160 = vsel %vm150, %v118, 0.0
  %v161 = vadd.f32 %v159, %v160
  %v162 = vsel %vm150, %v121, 0.0
  %v163 = vadd.f32 %v161, %v162
  %v164 = vsel %vm150, %v124, 0.0
  %v165 = vadd.f32 %v163, %v164
  %v166 = vsel %vm150, %v127, 0.0
  %v167 = vadd.f32 %v165, %v166
  %v168 = vsel %vm150, %v130, 0.0
  %v169 = vadd.f32 %v167, %v168
  %v170 = vsel %vm150, %v133, 0.0
  %v171 = vadd.f32 %v169, %v170
  %v172 = vsel %vm150, %v136, 0.0
  %v173 = vadd.f32 %v171, %v172
  %v174 = vsel %vm150, %v139, 0.0
  %v175 = vadd.f32 %v173, %v174
  %v176 = vsel %vm150, %v142, 0.0
  %v177 = vadd.f32 %v175, %v176
  %v178 = vsel %vm150, %v145, 0.0
  %v179 = vadd.f32 %v177, %v178
  %v180 = vsel %vm150, %v148, 0.0
  %v181 = vadd.f32 %v179, %v180
  %v182 = vrot.slane %v181, 4
  %v183 = vadd.f32 %v181, %v182
  %v184 = vrot.slane %v183, 2
  %v185 = vadd.f32 %v183, %v184
  %v186 = vrot.slane %v185, 1
  %v187 = vadd.f32 %v185, %v186
  %v188 = vrcp.pop 128.0
  %v189 = vmul.f32 128.0, %v188
  %v190 = vsub.f32 1.0, %v189
  %v191 = vmul.f32 %v188, %v190
  %v192 = vadd.f32 %v188, %v191
  %vm193 = vweird.f32 %v188
  %v194 = vsel %vm193, %v188, %v192
  %v195 = vmul.f32 %v187, %v194
  %v196 = vsub.f32 %v103, %v195
  %v197 = vsub.f32 %v106, %v195
  %v198 = vsub.f32 %v109, %v195
  %v199 = vsub.f32 %v112, %v195
  %v200 = vsub.f32 %v115, %v195
  %v201 = vsub.f32 %v118, %v195
  %v202 = vsub.f32 %v121, %v195
  %v203 = vsub.f32 %v124, %v195
  %v204 = vsub.f32 %v127, %v195
  %v205 = vsub.f32 %v130, %v195
  %v206 = vsub.f32 %v133, %v195
  %v207 = vsub.f32 %v136, %v195
  %v208 = vsub.f32 %v139, %v195
  %v209 = vsub.f32 %v142, %v195
  %v210 = vsub.f32 %v145, %v195
  %v211 = vsub.f32 %v148, %v195
  %v212 = vmul.f32 %v196, %v196
  %v213 = vmul.f32 %v197, %v197
  %v214 = vmul.f32 %v198, %v198
  %v215 = vmul.f32 %v199, %v199
  %v216 = vmul.f32 %v200, %v200
  %v217 = vmul.f32 %v201, %v201
  %v218 = vmul.f32 %v202, %v202
  %v219 = vmul.f32 %v203, %v203
  %v220 = vmul.f32 %v204, %v204
  %v221 = vmul.f32 %v205, %v205
  %v222 = vmul.f32 %v206, %v206
  %v223 = vmul.f32 %v207, %v207
  %v224 = vmul.f32 %v208, %v208
  %v225 = vmul.f32 %v209, %v209
  %v226 = vmul.f32 %v210, %v210
  %v227 = vmul.f32 %v211, %v211
  %v228 = vsel %vm150, %v212, 0.0
  %v229 = vsel %vm150, %v213, 0.0
  %v230 = vadd.f32 %v228, %v229
  %v231 = vsel %vm150, %v214, 0.0
  %v232 = vadd.f32 %v230, %v231
  %v233 = vsel %vm150, %v215, 0.0
  %v234 = vadd.f32 %v232, %v233
  %v235 = vsel %vm150, %v216, 0.0
  %v236 = vadd.f32 %v234, %v235
  %v237 = vsel %vm150, %v217, 0.0
  %v238 = vadd.f32 %v236, %v237
  %v239 = vsel %vm150, %v218, 0.0
  %v240 = vadd.f32 %v238, %v239
  %v241 = vsel %vm150, %v219, 0.0
  %v242 = vadd.f32 %v240, %v241
  %v243 = vsel %vm150, %v220, 0.0
  %v244 = vadd.f32 %v242, %v243
  %v245 = vsel %vm150, %v221, 0.0
  %v246 = vadd.f32 %v244, %v245
  %v247 = vsel %vm150, %v222, 0.0
  %v248 = vadd.f32 %v246, %v247
  %v249 = vsel %vm150, %v223, 0.0
  %v250 = vadd.f32 %v248, %v249
  %v251 = vsel %vm150, %v224, 0.0
  %v252 = vadd.f32 %v250, %v251
  %v253 = vsel %vm150, %v225, 0.0
  %v254 = vadd.f32 %v252, %v253
  %v255 = vsel %vm150, %v226, 0.0
  %v256 = vadd.f32 %v254, %v255
  %v257 = vsel %vm150, %v227, 0.0
  %v258 = vadd.f32 %v256, %v257
  %v259 = vrot.slane %v258, 4
  %v260 = vadd.f32 %v258, %v259
  %v261 = vrot.slane %v260, 2
  %v262 = vadd.f32 %v260, %v261
  %v263 = vrot.slane %v262, 1
  %v264 = vadd.f32 %v262, %v263
  %v265 = vmul.f32 %v264, %v194
  %v266 = vadd.f32 %v265, 1e-05
  %v267 = vrsqrt.pop %v266
  %v268 = vmul.f32 %v267, %v266
  %v269 = vmul.f32 %v268, %v267
  %v270 = vmul.f32 0.5, %v269
  %v271 = vsub.f32 1.5, %v270
  %v272 = vmul.f32 %v267, %v271
  %vm273 = vweird.f32 %v266
  %vm274 = vweird.f32 %v267
  %vm275 = vmor %vm273, %vm274
  %v276 = vsel %vm275, %v267, %v272
  %v277 = vmul.f32 %v196, %v276
  %v278 = vmul.f32 %v197, %v276
  %v279 = vmul.f32 %v198, %v276
  %v280 = vmul.f32 %v199, %v276
  %v281 = vmul.f32 %v200, %v276
  %v282 = vmul.f32 %v201, %v276
  %v283 = vmul.f32 %v202, %v276
  %v284 = vmul.f32 %v203, %v276
  %v285 = vmul.f32 %v204, %v276
  %v286 = vmul.f32 %v205, %v276
  %v287 = vmul.f32 %v206, %v276
  %v288 = vmul.f32 %v207, %v276
  %v289 = vmul.f32 %v208, %v276
  %v290 = vmul.f32 %v209, %v276
  %v291 = vmul.f32 %v210, %v276
  %v292 = vmul.f32 %v211, %v276
  %v293 = vld [vmem:[%s0] sm:$0x1]
  %v295 = vperm.slane %v293, 0
  %v297 = vmul.f32 %v277, %v295
  %v298 = vmul.f32 %v278, %v295
  %v299 = vmul.f32 %v279, %v295
  %v300 = vmul.f32 %v280, %v295
  %v301 = vmul.f32 %v281, %v295
  %v302 = vmul.f32 %v282, %v295
  %v303 = vmul.f32 %v283, %v295
  %v304 = vmul.f32 %v284, %v295
  %v305 = vmul.f32 %v285, %v295
  %v306 = vmul.f32 %v286, %v295
  %v307 = vmul.f32 %v287, %v295
  %v308 = vmul.f32 %v288, %v295
  %v309 = vmul.f32 %v289, %v295
  %v310 = vmul.f32 %v290, %v295
  %v311 = vmul.f32 %v291, %v295
  %v312 = vmul.f32 %v292, %v295
  %313 = vst.msk [vmem:[%s3] sm:$0xff] %vm150, %v297
  %314 = vst.msk [vmem:[%s3 + $0x8] sm:$0xff] %vm150, %v298
  %315 = vst.msk [vmem:[%s3 + $0x10] sm:$0xff] %vm150, %v299
  %316 = vst.msk [vmem:[%s3 + $0x18] sm:$0xff] %vm150, %v300
  %317 = vst.msk [vmem:[%s3 + $0x20] sm:$0xff] %vm150, %v301
  %318 = vst.msk [vmem:[%s3 + $0x28] sm:$0xff] %vm150, %v302
  %319 = vst.msk [vmem:[%s3 + $0x30] sm:$0xff] %vm150, %v303
  %320 = vst.msk [vmem:[%s3 + $0x38] sm:$0xff] %vm150, %v304
  %321 = vst.msk [vmem:[%s3 + $0x40] sm:$0xff] %vm150, %v305
  %322 = vst.msk [vmem:[%s3 + $0x48] sm:$0xff] %vm150, %v306
  %323 = vst.msk [vmem:[%s3 + $0x50] sm:$0xff] %vm150, %v307
  %324 = vst.msk [vmem:[%s3 + $0x58] sm:$0xff] %vm150, %v308
  %325 = vst.msk [vmem:[%s3 + $0x60] sm:$0xff] %vm150, %v309
  %326 = vst.msk [vmem:[%s3 + $0x68] sm:$0xff] %vm150, %v310
  %327 = vst.msk [vmem:[%s3 + $0x70] sm:$0xff] %vm150, %v311
  %328 = vst.msk [vmem:[%s3 + $0x78] sm:$0xff] %vm150, %v312
  // Predicated region
  $region14: #{forward.69} parent=0 // pred_check
    _
  $region15: #{forward.69} parent=0 // pred_check_branch
    %330 = sbr.rel (0) target = $region17
  $region16: #{forward.69} parent=0 // pred_region
    _
  $region17: #{forward.69} parent=0 // pred_fallthru
    _
  // Predicated region
  $region18: #{forward.69} parent=0 // pred_check
    _
  $region19: #{forward.69} parent=0 // pred_check_branch
    %332 = sbr.rel (0) target = $region21
  $region20: #{forward.69} parent=0 // pred_region
    _
  $region21: #{forward.69} parent=0 // pred_fallthru
    _

// kernel: forward.87
$region0: #{forward.87}
  #allocation0 [shape = 'u32[]', space=smem, size = 0x4, offset = 0x4, fixed_abs, tag = 'smem constant byte address 0x4 - core index']
  #allocation1 [shape = 'u32[72,128]{1,0:T(1,128)}', space=vmem, size = 0x9000, scoped, tag = 'internal scratch']
  %s0 = inlined_call_operand.vmem [shape: f32[1,8], index: 0, kind: input, shape index: {}]
  %s1 = inlined_call_operand.vmem [shape: f32[128,8], index: 1, kind: input, shape index: {}]
  %s2 = inlined_call_operand.vmem [shape: f32[8,8], index: 2, kind: input, shape index: {}]
  %s3 = inlined_call_operand.vmem [shape: f32[128,8], index: 3, kind: output, shape index: {}]
  %s4 = sld [smem:[#allocation0]]
  $region22: #{forward.87} parent=0
    _
  %s6 = ssub.s32 1, %s4
  %s7 = scalar_select 0, %s6, %s4
  // Predicated region
  $region2: #{forward.87} parent=0 // pred_check
    _
  $region3: #{forward.87} parent=0 // pred_check_branch
    %9 = sbr.rel (0) target = $region5
  $region4: #{forward.87} parent=0 // pred_region
    _
  $region5: #{forward.87} parent=0 // pred_fallthru
    _
  // Predicated region
  $region6: #{forward.87} parent=0 // pred_check
    _
  $region7: #{forward.87} parent=0 // pred_check_branch
    %11 = sbr.rel (0) target = $region9
  $region8: #{forward.87} parent=0 // pred_region
    _
  $region9: #{forward.87} parent=0 // pred_fallthru
    _
  // Predicated region
  $region10: #{forward.87} parent=0 // pred_check
    _
  $region11: #{forward.87} parent=0 // pred_check_branch
    %13 = sbr.rel (0) target = $region13
  $region12: #{forward.87} parent=0 // pred_region
    _
  $region13: #{forward.87} parent=0 // pred_fallthru
    _
  %v14 = vld [vmem:[%s1] sm:$0xff]
  %v15 = vld [vmem:[%s1 + $0x8] sm:$0xff]
  %v16 = vld [vmem:[%s1 + $0x10] sm:$0xff]
  %v17 = vld [vmem:[%s1 + $0x18] sm:$0xff]
  %v18 = vld [vmem:[%s1 + $0x20] sm:$0xff]
  %v19 = vld [vmem:[%s1 + $0x28] sm:$0xff]
  %v20 = vld [vmem:[%s1 + $0x30] sm:$0xff]
  %v21 = vld [vmem:[%s1 + $0x38] sm:$0xff]
  %v22 = vld [vmem:[%s1 + $0x40] sm:$0xff]
  %v23 = vld [vmem:[%s1 + $0x48] sm:$0xff]
  %v24 = vld [vmem:[%s1 + $0x50] sm:$0xff]
  %v25 = vld [vmem:[%s1 + $0x58] sm:$0xff]
  %v26 = vld [vmem:[%s1 + $0x60] sm:$0xff]
  %v27 = vld [vmem:[%s1 + $0x68] sm:$0xff]
  %v28 = vld [vmem:[%s1 + $0x70] sm:$0xff]
  %v29 = vld [vmem:[%s1 + $0x78] sm:$0xff]
  %v30 = vmax.f32 %v14, 0.0
  %v31 = vmax.f32 %v15, 0.0
  %v32 = vmax.f32 %v16, 0.0
  %v33 = vmax.f32 %v17, 0.0
  %v34 = vmax.f32 %v18, 0.0
  %v35 = vmax.f32 %v19, 0.0
  %v36 = vmax.f32 %v20, 0.0
  %v37 = vmax.f32 %v21, 0.0
  %v38 = vmax.f32 %v22, 0.0
  %v39 = vmax.f32 %v23, 0.0
  %v40 = vmax.f32 %v24, 0.0
  %v41 = vmax.f32 %v25, 0.0
  %v42 = vmax.f32 %v26, 0.0
  %v43 = vmax.f32 %v27, 0.0
  %v44 = vmax.f32 %v28, 0.0
  %v45 = vmax.f32 %v29, 0.0
  %v46 = vld [vmem:[%s2] sm:$0xff]
  %vm47 = vcmask 64512
  %v49 = vsel %vm47, %v30, 0
  %v52 = vsel %vm47, %v31, 0
  %v55 = vsel %vm47, %v32, 0
  %v58 = vsel %vm47, %v33, 0
  %v61 = vsel %vm47, %v34, 0
  %v64 = vsel %vm47, %v35, 0
  %v67 = vsel %vm47, %v36, 0
  %v70 = vsel %vm47, %v37, 0
  %v73 = vsel %vm47, %v38, 0
  %v76 = vsel %vm47, %v39, 0
  %v79 = vsel %vm47, %v40, 0
  %v82 = vsel %vm47, %v41, 0
  %v85 = vsel %vm47, %v42, 0
  %v88 = vsel %vm47, %v43, 0
  %v91 = vsel %vm47, %v44, 0
  %v94 = vsel %vm47, %v45, 0
  %96 = vmatpush.msra.mxu0 0.0
  %97 = vmatpush.msra.mxu0 0.0
  %98 = vmatpush.msra.mxu0 0.0
  %99 = vmatpush.msra.mxu0 0.0
  %100 = vmatpush.msra.mxu0 0.0
  %101 = vmatpush.msra.mxu0 0.0
  %102 = vmatpush.msra.mxu0 0.0
  %103 = vmatpush.msra.mxu0 0.0
  %104 = vmatpush.msra.mxu0 0.0
  %105 = vmatpush.msra.mxu0 0.0
  %106 = vmatpush.msra.mxu0 0.0
  %107 = vmatpush.msra.mxu0 0.0
  %108 = vmatpush.msra.mxu0 0.0
  %109 = vmatpush.msra.mxu0 0.0
  %110 = vmatpush.msra.mxu0 0.0
  %111 = vmatpush.msra.mxu0 %v46
  %112 = vmatmul.f32.gmra.mxu0 %v49
  %v113 = vpop.f32.mrf.mxu0
  %v114 = vadd.f32 0.0, %v113
  %115 = vmatmul.f32.gmra.mxu0 %v52
  %v116 = vpop.f32.mrf.mxu0
  %v117 = vadd.f32 0.0, %v116
  %118 = vmatmul.f32.gmra.mxu0 %v55
  %v119 = vpop.f32.mrf.mxu0
  %v120 = vadd.f32 0.0, %v119
  %121 = vmatmul.f32.gmra.mxu0 %v58
  %v122 = vpop.f32.mrf.mxu0
  %v123 = vadd.f32 0.0, %v122
  %124 = vmatmul.f32.gmra.mxu0 %v61
  %v125 = vpop.f32.mrf.mxu0
  %v126 = vadd.f32 0.0, %v125
  %127 = vmatmul.f32.gmra.mxu0 %v64
  %v128 = vpop.f32.mrf.mxu0
  %v129 = vadd.f32 0.0, %v128
  %130 = vmatmul.f32.gmra.mxu0 %v67
  %v131 = vpop.f32.mrf.mxu0
  %v132 = vadd.f32 0.0, %v131
  %133 = vmatmul.f32.gmra.mxu0 %v70
  %v134 = vpop.f32.mrf.mxu0
  %v135 = vadd.f32 0.0, %v134
  %136 = vmatmul.f32.gmra.mxu0 %v73
  %v137 = vpop.f32.mrf.mxu0
  %v138 = vadd.f32 0.0, %v137
  %139 = vmatmul.f32.gmra.mxu0 %v76
  %v140 = vpop.f32.mrf.mxu0
  %v141 = vadd.f32 0.0, %v140
  %142 = vmatmul.f32.gmra.mxu0 %v79
  %v143 = vpop.f32.mrf.mxu0
  %v144 = vadd.f32 0.0, %v143
  %145 = vmatmul.f32.gmra.mxu0 %v82
  %v146 = vpop.f32.mrf.mxu0
  %v147 = vadd.f32 0.0, %v146
  %148 = vmatmul.f32.gmra.mxu0 %v85
  %v149 = vpop.f32.mrf.mxu0
  %v150 = vadd.f32 0.0, %v149
  %151 = vmatmul.f32.gmra.mxu0 %v88
  %v152 = vpop.f32.mrf.mxu0
  %v153 = vadd.f32 0.0, %v152
  %154 = vmatmul.f32.gmra.mxu0 %v91
  %v155 = vpop.f32.mrf.mxu0
  %v156 = vadd.f32 0.0, %v155
  %157 = vmatmul.f32.gmra.mxu0 %v94
  %v158 = vpop.f32.mrf.mxu0
  %v159 = vadd.f32 0.0, %v158
  %160 = vdwg.mxu0
  %v161 = vsel %vm47, %v114, 0.0
  %v162 = vsel %vm47, %v117, 0.0
  %v163 = vadd.f32 %v161, %v162
  %v164 = vsel %vm47, %v120, 0.0
  %v165 = vadd.f32 %v163, %v164
  %v166 = vsel %vm47, %v123, 0.0
  %v167 = vadd.f32 %v165, %v166
  %v168 = vsel %vm47, %v126, 0.0
  %v169 = vadd.f32 %v167, %v168
  %v170 = vsel %vm47, %v129, 0.0
  %v171 = vadd.f32 %v169, %v170
  %v172 = vsel %vm47, %v132, 0.0
  %v173 = vadd.f32 %v171, %v172
  %v174 = vsel %vm47, %v135, 0.0
  %v175 = vadd.f32 %v173, %v174
  %v176 = vsel %vm47, %v138, 0.0
  %v177 = vadd.f32 %v175, %v176
  %v178 = vsel %vm47, %v141, 0.0
  %v179 = vadd.f32 %v177, %v178
  %v180 = vsel %vm47, %v144, 0.0
  %v181 = vadd.f32 %v179, %v180
  %v182 = vsel %vm47, %v147, 0.0
  %v183 = vadd.f32 %v181, %v182
  %v184 = vsel %vm47, %v150, 0.0
  %v185 = vadd.f32 %v183, %v184
  %v186 = vsel %vm47, %v153, 0.0
  %v187 = vadd.f32 %v185, %v186
  %v188 = vsel %vm47, %v156, 0.0
  %v189 = vadd.f32 %v187, %v188
  %v190 = vsel %vm47, %v159, 0.0
  %v191 = vadd.f32 %v189, %v190
  %v192 = vrot.slane %v191, 4
  %v193 = vadd.f32 %v191, %v192
  %v194 = vrot.slane %v193, 2
  %v195 = vadd.f32 %v193, %v194
  %v196 = vrot.slane %v195, 1
  %v197 = vadd.f32 %v195, %v196
  %v198 = vrcp.pop 128.0
  %v199 = vmul.f32 128.0, %v198
  %v200 = vsub.f32 1.0, %v199
  %v201 = vmul.f32 %v198, %v200
  %v202 = vadd.f32 %v198, %v201
  %vm203 = vweird.f32 %v198
  %v204 = vsel %vm203, %v198, %v202
  %v205 = vmul.f32 %v197, %v204
  %v206 = vsub.f32 %v114, %v205
  %v207 = vsub.f32 %v117, %v205
  %v208 = vsub.f32 %v120, %v205
  %v209 = vsub.f32 %v123, %v205
  %v210 = vsub.f32 %v126, %v205
  %v211 = vsub.f32 %v129, %v205
  %v212 = vsub.f32 %v132, %v205
  %v213 = vsub.f32 %v135, %v205
  %v214 = vsub.f32 %v138, %v205
  %v215 = vsub.f32 %v141, %v205
  %v216 = vsub.f32 %v144, %v205
  %v217 = vsub.f32 %v147, %v205
  %v218 = vsub.f32 %v150, %v205
  %v219 = vsub.f32 %v153, %v205
  %v220 = vsub.f32 %v156, %v205
  %v221 = vsub.f32 %v159, %v205
  %v222 = vmul.f32 %v206, %v206
  %v223 = vmul.f32 %v207, %v207
  %v224 = vmul.f32 %v208, %v208
  %v225 = vmul.f32 %v209, %v209
  %v226 = vmul.f32 %v210, %v210
  %v227 = vmul.f32 %v211, %v211
  %v228 = vmul.f32 %v212, %v212
  %v229 = vmul.f32 %v213, %v213
  %v230 = vmul.f32 %v214, %v214
  %v231 = vmul.f32 %v215, %v215
  %v232 = vmul.f32 %v216, %v216
  %v233 = vmul.f32 %v217, %v217
  %v234 = vmul.f32 %v218, %v218
  %v235 = vmul.f32 %v219, %v219
  %v236 = vmul.f32 %v220, %v220
  %v237 = vmul.f32 %v221, %v221
  %v238 = vsel %vm47, %v222, 0.0
  %v239 = vsel %vm47, %v223, 0.0
  %v240 = vadd.f32 %v238, %v239
  %v241 = vsel %vm47, %v224, 0.0
  %v242 = vadd.f32 %v240, %v241
  %v243 = vsel %vm47, %v225, 0.0
  %v244 = vadd.f32 %v242, %v243
  %v245 = vsel %vm47, %v226, 0.0
  %v246 = vadd.f32 %v244, %v245
  %v247 = vsel %vm47, %v227, 0.0
  %v248 = vadd.f32 %v246, %v247
  %v249 = vsel %vm47, %v228, 0.0
  %v250 = vadd.f32 %v248, %v249
  %v251 = vsel %vm47, %v229, 0.0
  %v252 = vadd.f32 %v250, %v251
  %v253 = vsel %vm47, %v230, 0.0
  %v254 = vadd.f32 %v252, %v253
  %v255 = vsel %vm47, %v231, 0.0
  %v256 = vadd.f32 %v254, %v255
  %v257 = vsel %vm47, %v232, 0.0
  %v258 = vadd.f32 %v256, %v257
  %v259 = vsel %vm47, %v233, 0.0
  %v260 = vadd.f32 %v258, %v259
  %v261 = vsel %vm47, %v234, 0.0
  %v262 = vadd.f32 %v260, %v261
  %v263 = vsel %vm47, %v235, 0.0
  %v264 = vadd.f32 %v262, %v263
  %v265 = vsel %vm47, %v236, 0.0
  %v266 = vadd.f32 %v264, %v265
  %v267 = vsel %vm47, %v237, 0.0
  %v268 = vadd.f32 %v266, %v267
  %v269 = vrot.slane %v268, 4
  %v270 = vadd.f32 %v268, %v269
  %v271 = vrot.slane %v270, 2
  %v272 = vadd.f32 %v270, %v271
  %v273 = vrot.slane %v272, 1
  %v274 = vadd.f32 %v272, %v273
  %v275 = vmul.f32 %v274, %v204
  %v276 = vadd.f32 %v275, 1e-05
  %v277 = vrsqrt.pop %v276
  %v278 = vmul.f32 %v277, %v276
  %v279 = vmul.f32 %v278, %v277
  %v280 = vmul.f32 0.5, %v279
  %v281 = vsub.f32 1.5, %v280
  %v282 = vmul.f32 %v277, %v281
  %vm283 = vweird.f32 %v276
  %vm284 = vweird.f32 %v277
  %vm285 = vmor %vm283, %vm284
  %v286 = vsel %vm285, %v277, %v282
  %v287 = vmul.f32 %v206, %v286
  %v288 = vmul.f32 %v207, %v286
  %v289 = vmul.f32 %v208, %v286
  %v290 = vmul.f32 %v209, %v286
  %v291 = vmul.f32 %v210, %v286
  %v292 = vmul.f32 %v211, %v286
  %v293 = vmul.f32 %v212, %v286
  %v294 = vmul.f32 %v213, %v286
  %v295 = vmul.f32 %v214, %v286
  %v296 = vmul.f32 %v215, %v286
  %v297 = vmul.f32 %v216, %v286
  %v298 = vmul.f32 %v217, %v286
  %v299 = vmul.f32 %v218, %v286
  %v300 = vmul.f32 %v219, %v286
  %v301 = vmul.f32 %v220, %v286
  %v302 = vmul.f32 %v221, %v286
  %v303 = vld [vmem:[%s0] sm:$0x1]
  %v305 = vperm.slane %v303, 0
  %v307 = vmul.f32 %v287, %v305
  %v308 = vmul.f32 %v288, %v305
  %v309 = vmul.f32 %v289, %v305
  %v310 = vmul.f32 %v290, %v305
  %v311 = vmul.f32 %v291, %v305
  %v312 = vmul.f32 %v292, %v305
  %v313 = vmul.f32 %v293, %v305
  %v314 = vmul.f32 %v294, %v305
  %v315 = vmul.f32 %v295, %v305
  %v316 = vmul.f32 %v296, %v305
  %v317 = vmul.f32 %v297, %v305
  %v318 = vmul.f32 %v298, %v305
  %v319 = vmul.f32 %v299, %v305
  %v320 = vmul.f32 %v300, %v305
  %v321 = vmul.f32 %v301, %v305
  %v322 = vmul.f32 %v302, %v305
  %323 = vst.msk [vmem:[%s3] sm:$0xff] %vm47, %v307
  %324 = vst.msk [vmem:[%s3 + $0x8] sm:$0xff] %vm47, %v308
  %325 = vst.msk [vmem:[%s3 + $0x10] sm:$0xff] %vm47, %v309
  %326 = vst.msk [vmem:[%s3 + $0x18] sm:$0xff] %vm47, %v310
  %327 = vst.msk [vmem:[%s3 + $0x20] sm:$0xff] %vm47, %v311
  %328 = vst.msk [vmem:[%s3 + $0x28] sm:$0xff] %vm47, %v312
  %329 = vst.msk [vmem:[%s3 + $0x30] sm:$0xff] %vm47, %v313
  %330 = vst.msk [vmem:[%s3 + $0x38] sm:$0xff] %vm47, %v314
  %331 = vst.msk [vmem:[%s3 + $0x40] sm:$0xff] %vm47, %v315
  %332 = vst.msk [vmem:[%s3 + $0x48] sm:$0xff] %vm47, %v316
  %333 = vst.msk [vmem:[%s3 + $0x50] sm:$0xff] %vm47, %v317
  %334 = vst.msk [vmem:[%s3 + $0x58] sm:$0xff] %vm47, %v318
  %335 = vst.msk [vmem:[%s3 + $0x60] sm:$0xff] %vm47, %v319
  %336 = vst.msk [vmem:[%s3 + $0x68] sm:$0xff] %vm47, %v320
  %337 = vst.msk [vmem:[%s3 + $0x70] sm:$0xff] %vm47, %v321
  %338 = vst.msk [vmem:[%s3 + $0x78] sm:$0xff] %vm47, %v322
  // Predicated region
  $region14: #{forward.87} parent=0 // pred_check
    _
  $region15: #{forward.87} parent=0 // pred_check_branch
    %340 = sbr.rel (0) target = $region17
  $region16: #{forward.87} parent=0 // pred_region
    _
  $region17: #{forward.87} parent=0 // pred_fallthru
    _
  // Predicated region
  $region18: #{forward.87} parent=0 // pred_check
    _
  $region19: #{forward.87} parent=0 // pred_check_branch
    %342 = sbr.rel (0) target = $region21
  $region20: #{forward.87} parent=0 // pred_region
    _
  $region21: #{forward.87} parent=0 // pred_fallthru
    _

// kernel: forward.93
$region0: #{forward.93}
  #allocation0 [shape = 'u32[]', space=smem, size = 0x4, offset = 0x4, fixed_abs, tag = 'smem constant byte address 0x4 - core index']
  #allocation1 [shape = 'u32[72,128]{1,0:T(1,128)}', space=vmem, size = 0x9000, scoped, tag = 'internal scratch']
  %s0 = inlined_call_operand.vmem [shape: f32[1,4], index: 0, kind: input, shape index: {}]
  %s1 = inlined_call_operand.vmem [shape: f32[4,32,4], index: 1, kind: input, shape index: {}]
  %s2 = inlined_call_operand.vmem [shape: f32[32,4], index: 2, kind: output, shape index: {}]
  %s3 = sld [smem:[#allocation0]]
  $region18: #{forward.93} parent=0
    _
  %s5 = ssub.s32 1, %s3
  %s6 = scalar_select 0, %s5, %s3
  // Predicated region
  $region2: #{forward.93} parent=0 // pred_check
    _
  $region3: #{forward.93} parent=0 // pred_check_branch
    %8 = sbr.rel (0) target = $region5
  $region4: #{forward.93} parent=0 // pred_region
    _
  $region5: #{forward.93} parent=0 // pred_fallthru
    _
  // Predicated region
  $region6: #{forward.93} parent=0 // pred_check
    _
  $region7: #{forward.93} parent=0 // pred_check_branch
    %10 = sbr.rel (0) target = $region9
  $region8: #{forward.93} parent=0 // pred_region
    _
  $region9: #{forward.93} parent=0 // pred_fallthru
    _
  %v11 = vld [vmem:[%s1] sm:$0xff]
  %v12 = vld [vmem:[%s1 + $0x8] sm:$0xff]
  %v13 = vld [vmem:[%s1 + $0x10] sm:$0xff]
  %v14 = vld [vmem:[%s1 + $0x18] sm:$0xff]
  %s15 = scalar_lea.vmem %s1, 32
  %v16 = vld [vmem:[%s15] sm:$0xff]
  %v17 = vld [vmem:[%s15 + $0x8] sm:$0xff]
  %v18 = vld [vmem:[%s15 + $0x10] sm:$0xff]
  %v19 = vld [vmem:[%s15 + $0x18] sm:$0xff]
  %v20 = vmax.f32 %v11, %v16
  %v21 = vmax.f32 %v12, %v17
  %v22 = vmax.f32 %v13, %v18
  %v23 = vmax.f32 %v14, %v19
  %s24 = scalar_lea.vmem %s1, 64
  %v25 = vld [vmem:[%s24] sm:$0xff]
  %v26 = vld [vmem:[%s24 + $0x8] sm:$0xff]
  %v27 = vld [vmem:[%s24 + $0x10] sm:$0xff]
  %v28 = vld [vmem:[%s24 + $0x18] sm:$0xff]
  %v29 = vmax.f32 %v20, %v25
  %v30 = vmax.f32 %v21, %v26
  %v31 = vmax.f32 %v22, %v27
  %v32 = vmax.f32 %v23, %v28
  %s33 = scalar_lea.vmem %s1, 96
  %v34 = vld [vmem:[%s33] sm:$0xff]
  %v35 = vld [vmem:[%s33 + $0x8] sm:$0xff]
  %v36 = vld [vmem:[%s33 + $0x10] sm:$0xff]
  %v37 = vld [vmem:[%s33 + $0x18] sm:$0xff]
  %v38 = vmax.f32 %v29, %v34
  %v39 = vmax.f32 %v30, %v35
  %v40 = vmax.f32 %v31, %v36
  %v41 = vmax.f32 %v32, %v37
  %v42 = vld [vmem:[%s0] sm:$0x1]
  %v44 = vperm.slane %v42, 0
  %v46 = vmul.f32 %v38, %v44
  %v47 = vmul.f32 %v39, %v44
  %v48 = vmul.f32 %v40, %v44
  %v49 = vmul.f32 %v41, %v44
  %vm50 = vcmask 31744
  %51 = vst.msk [vmem:[%s2] sm:$0xff] %vm50, %v46
  %52 = vst.msk [vmem:[%s2 + $0x8] sm:$0xff] %vm50, %v47
  %53 = vst.msk [vmem:[%s2 + $0x10] sm:$0xff] %vm50, %v48
  %54 = vst.msk [vmem:[%s2 + $0x18] sm:$0xff] %vm50, %v49
  // Predicated region
  $region10: #{forward.93} parent=0 // pred_check
    _
  $region11: #{forward.93} parent=0 // pred_check_branch
    %56 = sbr.rel (0) target = $region13
  $region12: #{forward.93} parent=0 // pred_region
    _
  $region13: #{forward.93} parent=0 // pred_fallthru
    _
  // Predicated region
  $region14: #{forward.93} parent=0 // pred_check
    _
  $region15: #{forward.93} parent=0 // pred_check_branch
    %58 = sbr.rel (0) target = $region17
  $region16: #{forward.93} parent=0 // pred_region
    _
  $region17: #{forward.93} parent=0 // pred_fallthru
    _

// kernel: forward.99
$region0: #{forward.99}
  #allocation0 [shape = 'u32[]', space=smem, size = 0x4, offset = 0x4, fixed_abs, tag = 'smem constant byte address 0x4 - core index']
  #allocation1 [shape = 'u32[72,128]{1,0:T(1,128)}', space=vmem, size = 0x9000, scoped, tag = 'internal scratch']
  %s0 = inlined_call_operand.vmem [shape: f32[1,4], index: 0, kind: input, shape index: {}]
  %s1 = inlined_call_operand.vmem [shape: f32[32,8], index: 1, kind: input, shape index: {}]
  %s2 = inlined_call_operand.vmem [shape: f32[8,4], index: 2, kind: input, shape index: {}]
  %s3 = inlined_call_operand.vmem [shape: f32[32,4], index: 3, kind: output, shape index: {}]
  %s4 = sld [smem:[#allocation0]]
  $region22: #{forward.99} parent=0
    _
  %s6 = ssub.s32 1, %s4
  %s7 = scalar_select 0, %s6, %s4
  // Predicated region
  $region2: #{forward.99} parent=0 // pred_check
    _
  $region3: #{forward.99} parent=0 // pred_check_branch
    %9 = sbr.rel (0) target = $region5
  $region4: #{forward.99} parent=0 // pred_region
    _
  $region5: #{forward.99} parent=0 // pred_fallthru
    _
  // Predicated region
  $region6: #{forward.99} parent=0 // pred_check
    _
  $region7: #{forward.99} parent=0 // pred_check_branch
    %11 = sbr.rel (0) target = $region9
  $region8: #{forward.99} parent=0 // pred_region
    _
  $region9: #{forward.99} parent=0 // pred_fallthru
    _
  // Predicated region
  $region10: #{forward.99} parent=0 // pred_check
    _
  $region11: #{forward.99} parent=0 // pred_check_branch
    %13 = sbr.rel (0) target = $region13
  $region12: #{forward.99} parent=0 // pred_region
    _
  $region13: #{forward.99} parent=0 // pred_fallthru
    _
  %v14 = vld [vmem:[%s1] sm:$0xff]
  %v15 = vld [vmem:[%s1 + $0x8] sm:$0xff]
  %v16 = vld [vmem:[%s1 + $0x10] sm:$0xff]
  %v17 = vld [vmem:[%s1 + $0x18] sm:$0xff]
  %v18 = vmax.f32 %v14, 0.0
  %v19 = vmax.f32 %v15, 0.0
  %v20 = vmax.f32 %v16, 0.0
  %v21 = vmax.f32 %v17, 0.0
  %v22 = vld [vmem:[%s2] sm:$0xff]
  %vm23 = vcmask 64512
  %v25 = vsel %vm23, %v18, 0
  %v28 = vsel %vm23, %v19, 0
  %v31 = vsel %vm23, %v20, 0
  %v34 = vsel %vm23, %v21, 0
  %36 = vmatpush.msra.mxu0 0.0
  %37 = vmatpush.msra.mxu0 0.0
  %38 = vmatpush.msra.mxu0 0.0
  %39 = vmatpush.msra.mxu0 0.0
  %40 = vmatpush.msra.mxu0 0.0
  %41 = vmatpush.msra.mxu0 0.0
  %42 = vmatpush.msra.mxu0 0.0
  %43 = vmatpush.msra.mxu0 0.0
  %44 = vmatpush.msra.mxu0 0.0
  %45 = vmatpush.msra.mxu0 0.0
  %46 = vmatpush.msra.mxu0 0.0
  %47 = vmatpush.msra.mxu0 0.0
  %48 = vmatpush.msra.mxu0 0.0
  %49 = vmatpush.msra.mxu0 0.0
  %50 = vmatpush.msra.mxu0 0.0
  %51 = vmatpush.msra.mxu0 %v22
  %52 = vmatmul.f32.gmra.mxu0 %v25
  %v53 = vpop.f32.mrf.mxu0
  %v54 = vadd.f32 0.0, %v53
  %55 = vmatmul.f32.gmra.mxu0 %v28
  %v56 = vpop.f32.mrf.mxu0
  %v57 = vadd.f32 0.0, %v56
  %58 = vmatmul.f32.gmra.mxu0 %v31
  %v59 = vpop.f32.mrf.mxu0
  %v60 = vadd.f32 0.0, %v59
  %61 = vmatmul.f32.gmra.mxu0 %v34
  %v62 = vpop.f32.mrf.mxu0
  %v63 = vadd.f32 0.0, %v62
  %64 = vdwg.mxu0
  %vm65 = vcmask 31744
  %v66 = vsel %vm65, %v54, 0.0
  %v67 = vsel %vm65, %v57, 0.0
  %v68 = vadd.f32 %v66, %v67
  %v69 = vsel %vm65, %v60, 0.0
  %v70 = vadd.f32 %v68, %v69
  %v71 = vsel %vm65, %v63, 0.0
  %v72 = vadd.f32 %v70, %v71
  %v73 = vrot.slane %v72, 4
  %v74 = vadd.f32 %v72, %v73
  %v75 = vrot.slane %v74, 2
  %v76 = vadd.f32 %v74, %v75
  %v77 = vrot.slane %v76, 1
  %v78 = vadd.f32 %v76, %v77
  %v79 = vrcp.pop 32.0
  %v80 = vmul.f32 32.0, %v79
  %v81 = vsub.f32 1.0, %v80
  %v82 = vmul.f32 %v79, %v81
  %v83 = vadd.f32 %v79, %v82
  %vm84 = vweird.f32 %v79
  %v85 = vsel %vm84, %v79, %v83
  %v86 = vmul.f32 %v78, %v85
  %v87 = vsub.f32 %v54, %v86
  %v88 = vsub.f32 %v57, %v86
  %v89 = vsub.f32 %v60, %v86
  %v90 = vsub.f32 %v63, %v86
  %v91 = vmul.f32 %v87, %v87
  %v92 = vmul.f32 %v88, %v88
  %v93 = vmul.f32 %v89, %v89
  %v94 = vmul.f32 %v90, %v90
  %v95 = vsel %vm65, %v91, 0.0
  %v96 = vsel %vm65, %v92, 0.0
  %v97 = vadd.f32 %v95, %v96
  %v98 = vsel %vm65, %v93, 0.0
  %v99 = vadd.f32 %v97, %v98
  %v100 = vsel %vm65, %v94, 0.0
  %v101 = vadd.f32 %v99, %v100
  %v102 = vrot.slane %v101, 4
  %v103 = vadd.f32 %v101, %v102
  %v104 = vrot.slane %v103, 2
  %v105 = vadd.f32 %v103, %v104
  %v106 = vrot.slane %v105, 1
  %v107 = vadd.f32 %v105, %v106
  %v108 = vmul.f32 %v107, %v85
  %v109 = vadd.f32 %v108, 1e-05
  %v110 = vrsqrt.pop %v109
  %v111 = vmul.f32 %v110, %v109
  %v112 = vmul.f32 %v111, %v110
  %v113 = vmul.f32 0.5, %v112
  %v114 = vsub.f32 1.5, %v113
  %v115 = vmul.f32 %v110, %v114
  %vm116 = vweird.f32 %v109
  %vm117 = vweird.f32 %v110
  %vm118 = vmor %vm116, %vm117
  %v119 = vsel %vm118, %v110, %v115
  %v120 = vmul.f32 %v87, %v119
  %v121 = vmul.f32 %v88, %v119
  %v122 = vmul.f32 %v89, %v119
  %v123 = vmul.f32 %v90, %v119
  %v124 = vld [vmem:[%s0] sm:$0x1]
  %v126 = vperm.slane %v124, 0
  %v128 = vmul.f32 %v120, %v126
  %v129 = vmul.f32 %v121, %v126
  %v130 = vmul.f32 %v122, %v126
  %v131 = vmul.f32 %v123, %v126
  %132 = vst.msk [vmem:[%s3] sm:$0xff] %vm65, %v128
  %133 = vst.msk [vmem:[%s3 + $0x8] sm:$0xff] %vm65, %v129
  %134 = vst.msk [vmem:[%s3 + $0x10] sm:$0xff] %vm65, %v130
  %135 = vst.msk [vmem:[%s3 + $0x18] sm:$0xff] %vm65, %v131
  // Predicated region
  $region14: #{forward.99} parent=0 // pred_check
    _
  $region15: #{forward.99} parent=0 // pred_check_branch
    %137 = sbr.rel (0) target = $region17
  $region16: #{forward.99} parent=0 // pred_region
    _
  $region17: #{forward.99} parent=0 // pred_fallthru
    _
  // Predicated region
  $region18: #{forward.99} parent=0 // pred_check
    _
  $region19: #{forward.99} parent=0 // pred_check_branch
    %139 = sbr.rel (0) target = $region21
  $region20: #{forward.99} parent=0 // pred_region
    _
  $region21: #{forward.99} parent=0 // pred_fallthru
    _

// kernel: forward.80
$region0: #{forward.80}
  #allocation0 [shape = 'u32[]', space=smem, size = 0x4, offset = 0x4, fixed_abs, tag = 'smem constant byte address 0x4 - core index']
  #allocation1 [shape = 'u32[72,128]{1,0:T(1,128)}', space=vmem, size = 0x9000, scoped, tag = 'internal scratch']
  %s0 = inlined_call_operand.vmem [shape: f32[1,2], index: 0, kind: input, shape index: {}]
  %s1 = inlined_call_operand.vmem [shape: f32[128,18], index: 1, kind: input, shape index: {}]
  %s2 = inlined_call_operand.vmem [shape: f32[18,2], index: 2, kind: input, shape index: {}]
  %s3 = inlined_call_operand.vmem [shape: f32[128,2], index: 3, kind: output, shape index: {}]
  %s4 = sld [smem:[#allocation0]]
  $region22: #{forward.80} parent=0
    _
  %s6 = ssub.s32 1, %s4
  %s7 = scalar_select 0, %s6, %s4
  // Predicated region
  $region2: #{forward.80} parent=0 // pred_check
    _
  $region3: #{forward.80} parent=0 // pred_check_branch
    %9 = sbr.rel (0) target = $region5
  $region4: #{forward.80} parent=0 // pred_region
    _
  $region5: #{forward.80} parent=0 // pred_fallthru
    _
  // Predicated region
  $region6: #{forward.80} parent=0 // pred_check
    _
  $region7: #{forward.80} parent=0 // pred_check_branch
    %11 = sbr.rel (0) target = $region9
  $region8: #{forward.80} parent=0 // pred_region
    _
  $region9: #{forward.80} parent=0 // pred_fallthru
    _
  // Predicated region
  $region10: #{forward.80} parent=0 // pred_check
    _
  $region11: #{forward.80} parent=0 // pred_check_branch
    %13 = sbr.rel (0) target = $region13
  $region12: #{forward.80} parent=0 // pred_region
    _
  $region13: #{forward.80} parent=0 // pred_fallthru
    _
  %v14 = vld [vmem:[%s1] sm:$0xff]
  %v15 = vld [vmem:[%s1 + $0x8] sm:$0xff]
  %v16 = vld [vmem:[%s1 + $0x10] sm:$0xff]
  %v17 = vld [vmem:[%s1 + $0x18] sm:$0xff]
  %v18 = vld [vmem:[%s1 + $0x20] sm:$0xff]
  %v19 = vld [vmem:[%s1 + $0x28] sm:$0xff]
  %v20 = vld [vmem:[%s1 + $0x30] sm:$0xff]
  %v21 = vld [vmem:[%s1 + $0x38] sm:$0xff]
  %v22 = vld [vmem:[%s1 + $0x40] sm:$0xff]
  %v23 = vld [vmem:[%s1 + $0x48] sm:$0xff]
  %v24 = vld [vmem:[%s1 + $0x50] sm:$0xff]
  %v25 = vld [vmem:[%s1 + $0x58] sm:$0xff]
  %v26 = vld [vmem:[%s1 + $0x60] sm:$0xff]
  %v27 = vld [vmem:[%s1 + $0x68] sm:$0xff]
  %v28 = vld [vmem:[%s1 + $0x70] sm:$0xff]
  %v29 = vld [vmem:[%s1 + $0x78] sm:$0xff]
  %v30 = vmax.f32 %v14, 0.0
  %v31 = vmax.f32 %v15, 0.0
  %v32 = vmax.f32 %v16, 0.0
  %v33 = vmax.f32 %v17, 0.0
  %v34 = vmax.f32 %v18, 0.0
  %v35 = vmax.f32 %v19, 0.0
  %v36 = vmax.f32 %v20, 0.0
  %v37 = vmax.f32 %v21, 0.0
  %v38 = vmax.f32 %v22, 0.0
  %v39 = vmax.f32 %v23, 0.0
  %v40 = vmax.f32 %v24, 0.0
  %v41 = vmax.f32 %v25, 0.0
  %v42 = vmax.f32 %v26, 0.0
  %v43 = vmax.f32 %v27, 0.0
  %v44 = vmax.f32 %v28, 0.0
  %v45 = vmax.f32 %v29, 0.0
  %v46 = vld [vmem:[%s2] sm:$0xff]
  %v47 = vld [vmem:[%s2 + $0x8] sm:$0xff]
  %v48 = vld [vmem:[%s2 + $0x10] sm:$0x3]
  %vm49 = vcmask 146432
  %v51 = vsel %vm49, %v30, 0
  %v54 = vsel %vm49, %v31, 0
  %v57 = vsel %vm49, %v32, 0
  %v60 = vsel %vm49, %v33, 0
  %v63 = vsel %vm49, %v34, 0
  %v66 = vsel %vm49, %v35, 0
  %v69 = vsel %vm49, %v36, 0
  %v72 = vsel %vm49, %v37, 0
  %v75 = vsel %vm49, %v38, 0
  %v78 = vsel %vm49, %v39, 0
  %v81 = vsel %vm49, %v40, 0
  %v84 = vsel %vm49, %v41, 0
  %v87 = vsel %vm49, %v42, 0
  %v90 = vsel %vm49, %v43, 0
  %v93 = vsel %vm49, %v44, 0
  %v96 = vsel %vm49, %v45, 0
  %vm98 = vcmask 1041408
  %v100 = vsel %vm98, %v48, 0
  %102 = vmatpush.msra.mxu0 0.0
  %103 = vmatpush.msra.mxu0 0.0
  %104 = vmatpush.msra.mxu0 0.0
  %105 = vmatpush.msra.mxu0 0.0
  %106 = vmatpush.msra.mxu0 0.0
  %107 = vmatpush.msra.mxu0 0.0
  %108 = vmatpush.msra.mxu0 0.0
  %109 = vmatpush.msra.mxu0 0.0
  %110 = vmatpush.msra.mxu0 0.0
  %111 = vmatpush.msra.mxu0 0.0
  %112 = vmatpush.msra.mxu0 0.0
  %113 = vmatpush.msra.mxu0 0.0
  %114 = vmatpush.msra.mxu0 0.0
  %115 = vmatpush.msra.mxu0 %v100
  %116 = vmatpush.msra.mxu0 %v47
  %117 = vmatpush.msra.mxu0 %v46
  %118 = vmatmul.f32.gmra.mxu0 %v51
  %v119 = vpop.f32.mrf.mxu0
  %v120 = vadd.f32 0.0, %v119
  %121 = vmatmul.f32.gmra.mxu0 %v54
  %v122 = vpop.f32.mrf.mxu0
  %v123 = vadd.f32 0.0, %v122
  %124 = vmatmul.f32.gmra.mxu0 %v57
  %v125 = vpop.f32.mrf.mxu0
  %v126 = vadd.f32 0.0, %v125
  %127 = vmatmul.f32.gmra.mxu0 %v60
  %v128 = vpop.f32.mrf.mxu0
  %v129 = vadd.f32 0.0, %v128
  %130 = vmatmul.f32.gmra.mxu0 %v63
  %v131 = vpop.f32.mrf.mxu0
  %v132 = vadd.f32 0.0, %v131
  %133 = vmatmul.f32.gmra.mxu0 %v66
  %v134 = vpop.f32.mrf.mxu0
  %v135 = vadd.f32 0.0, %v134
  %136 = vmatmul.f32.gmra.mxu0 %v69
  %v137 = vpop.f32.mrf.mxu0
  %v138 = vadd.f32 0.0, %v137
  %139 = vmatmul.f32.gmra.mxu0 %v72
  %v140 = vpop.f32.mrf.mxu0
  %v141 = vadd.f32 0.0, %v140
  %142 = vmatmul.f32.gmra.mxu0 %v75
  %v143 = vpop.f32.mrf.mxu0
  %v144 = vadd.f32 0.0, %v143
  %145 = vmatmul.f32.gmra.mxu0 %v78
  %v146 = vpop.f32.mrf.mxu0
  %v147 = vadd.f32 0.0, %v146
  %148 = vmatmul.f32.gmra.mxu0 %v81
  %v149 = vpop.f32.mrf.mxu0
  %v150 = vadd.f32 0.0, %v149
  %151 = vmatmul.f32.gmra.mxu0 %v84
  %v152 = vpop.f32.mrf.mxu0
  %v153 = vadd.f32 0.0, %v152
  %154 = vmatmul.f32.gmra.mxu0 %v87
  %v155 = vpop.f32.mrf.mxu0
  %v156 = vadd.f32 0.0, %v155
  %157 = vmatmul.f32.gmra.mxu0 %v90
  %v158 = vpop.f32.mrf.mxu0
  %v159 = vadd.f32 0.0, %v158
  %160 = vmatmul.f32.gmra.mxu0 %v93
  %v161 = vpop.f32.mrf.mxu0
  %v162 = vadd.f32 0.0, %v161
  %163 = vmatmul.f32.gmra.mxu0 %v96
  %v164 = vpop.f32.mrf.mxu0
  %v165 = vadd.f32 0.0, %v164
  %166 = vdwg.mxu0
  %vm167 = vcmask 15360
  %v168 = vsel %vm167, %v120, 0.0
  %v169 = vsel %vm167, %v123, 0.0
  %v170 = vadd.f32 %v168, %v169
  %v171 = vsel %vm167, %v126, 0.0
  %v172 = vadd.f32 %v170, %v171
  %v173 = vsel %vm167, %v129, 0.0
  %v174 = vadd.f32 %v172, %v173
  %v175 = vsel %vm167, %v132, 0.0
  %v176 = vadd.f32 %v174, %v175
  %v177 = vsel %vm167, %v135, 0.0
  %v178 = vadd.f32 %v176, %v177
  %v179 = vsel %vm167, %v138, 0.0
  %v180 = vadd.f32 %v178, %v179
  %v181 = vsel %vm167, %v141, 0.0
  %v182 = vadd.f32 %v180, %v181
  %v183 = vsel %vm167, %v144, 0.0
  %v184 = vadd.f32 %v182, %v183
  %v185 = vsel %vm167, %v147, 0.0
  %v186 = vadd.f32 %v184, %v185
  %v187 = vsel %vm167, %v150, 0.0
  %v188 = vadd.f32 %v186, %v187
  %v189 = vsel %vm167, %v153, 0.0
  %v190 = vadd.f32 %v188, %v189
  %v191 = vsel %vm167, %v156, 0.0
  %v192 = vadd.f32 %v190, %v191
  %v193 = vsel %vm167, %v159, 0.0
  %v194 = vadd.f32 %v192, %v193
  %v195 = vsel %vm167, %v162, 0.0
  %v196 = vadd.f32 %v194, %v195
  %v197 = vsel %vm167, %v165, 0.0
  %v198 = vadd.f32 %v196, %v197
  %v199 = vrot.slane %v198, 4
  %v200 = vadd.f32 %v198, %v199
  %v201 = vrot.slane %v200, 2
  %v202 = vadd.f32 %v200, %v201
  %v203 = vrot.slane %v202, 1
  %v204 = vadd.f32 %v202, %v203
  %v205 = vrcp.pop 128.0
  %v206 = vmul.f32 128.0, %v205
  %v207 = vsub.f32 1.0, %v206
  %v208 = vmul.f32 %v205, %v207
  %v209 = vadd.f32 %v205, %v208
  %vm210 = vweird.f32 %v205
  %v211 = vsel %vm210, %v205, %v209
  %v212 = vmul.f32 %v204, %v211
  %v213 = vsub.f32 %v120, %v212
  %v214 = vsub.f32 %v123, %v212
  %v215 = vsub.f32 %v126, %v212
  %v216 = vsub.f32 %v129, %v212
  %v217 = vsub.f32 %v132, %v212
  %v218 = vsub.f32 %v135, %v212
  %v219 = vsub.f32 %v138, %v212
  %v220 = vsub.f32 %v141, %v212
  %v221 = vsub.f32 %v144, %v212
  %v222 = vsub.f32 %v147, %v212
  %v223 = vsub.f32 %v150, %v212
  %v224 = vsub.f32 %v153, %v212
  %v225 = vsub.f32 %v156, %v212
  %v226 = vsub.f32 %v159, %v212
  %v227 = vsub.f32 %v162, %v212
  %v228 = vsub.f32 %v165, %v212
  %v229 = vmul.f32 %v213, %v213
  %v230 = vmul.f32 %v214, %v214
  %v231 = vmul.f32 %v215, %v215
  %v232 = vmul.f32 %v216, %v216
  %v233 = vmul.f32 %v217, %v217
  %v234 = vmul.f32 %v218, %v218
  %v235 = vmul.f32 %v219, %v219
  %v236 = vmul.f32 %v220, %v220
  %v237 = vmul.f32 %v221, %v221
  %v238 = vmul.f32 %v222, %v222
  %v239 = vmul.f32 %v223, %v223
  %v240 = vmul.f32 %v224, %v224
  %v241 = vmul.f32 %v225, %v225
  %v242 = vmul.f32 %v226, %v226
  %v243 = vmul.f32 %v227, %v227
  %v244 = vmul.f32 %v228, %v228
  %v245 = vsel %vm167, %v229, 0.0
  %v246 = vsel %vm167, %v230, 0.0
  %v247 = vadd.f32 %v245, %v246
  %v248 = vsel %vm167, %v231, 0.0
  %v249 = vadd.f32 %v247, %v248
  %v250 = vsel %vm167, %v232, 0.0
  %v251 = vadd.f32 %v249, %v250
  %v252 = vsel %vm167, %v233, 0.0
  %v253 = vadd.f32 %v251, %v252
  %v254 = vsel %vm167, %v234, 0.0
  %v255 = vadd.f32 %v253, %v254
  %v256 = vsel %vm167, %v235, 0.0
  %v257 = vadd.f32 %v255, %v256
  %v258 = vsel %vm167, %v236, 0.0
  %v259 = vadd.f32 %v257, %v258
  %v260 = vsel %vm167, %v237, 0.0
  %v261 = vadd.f32 %v259, %v260
  %v262 = vsel %vm167, %v238, 0.0
  %v263 = vadd.f32 %v261, %v262
  %v264 = vsel %vm167, %v239, 0.0
  %v265 = vadd.f32 %v263, %v264
  %v266 = vsel %vm167, %v240, 0.0
  %v267 = vadd.f32 %v265, %v266
  %v268 = vsel %vm167, %v241, 0.0
  %v269 = vadd.f32 %v267, %v268
  %v270 = vsel %vm167, %v242, 0.0
  %v271 = vadd.f32 %v269, %v270
  %v272 = vsel %vm167, %v243, 0.0
  %v273 = vadd.f32 %v271, %v272
  %v274 = vsel %vm167, %v244, 0.0
  %v275 = vadd.f32 %v273, %v274
  %v276 = vrot.slane %v275, 4
  %v277 = vadd.f32 %v275, %v276
  %v278 = vrot.slane %v277, 2
  %v279 = vadd.f32 %v277, %v278
  %v280 = vrot.slane %v279, 1
  %v281 = vadd.f32 %v279, %v280
  %v282 = vmul.f32 %v281, %v211
  %v283 = vadd.f32 %v282, 1e-05
  %v284 = vrsqrt.pop %v283
  %v285 = vmul.f32 %v284, %v283
  %v286 = vmul.f32 %v285, %v284
  %v287 = vmul.f32 0.5, %v286
  %v288 = vsub.f32 1.5, %v287
  %v289 = vmul.f32 %v284, %v288
  %vm290 = vweird.f32 %v283
  %vm291 = vweird.f32 %v284
  %vm292 = vmor %vm290, %vm291
  %v293 = vsel %vm292, %v284, %v289
  %v294 = vmul.f32 %v213, %v293
  %v295 = vmul.f32 %v214, %v293
  %v296 = vmul.f32 %v215, %v293
  %v297 = vmul.f32 %v216, %v293
  %v298 = vmul.f32 %v217, %v293
  %v299 = vmul.f32 %v218, %v293
  %v300 = vmul.f32 %v219, %v293
  %v301 = vmul.f32 %v220, %v293
  %v302 = vmul.f32 %v221, %v293
  %v303 = vmul.f32 %v222, %v293
  %v304 = vmul.f32 %v223, %v293
  %v305 = vmul.f32 %v224, %v293
  %v306 = vmul.f32 %v225, %v293
  %v307 = vmul.f32 %v226, %v293
  %v308 = vmul.f32 %v227, %v293
  %v309 = vmul.f32 %v228, %v293
  %v310 = vld [vmem:[%s0] sm:$0x1]
  %v312 = vperm.slane %v310, 0
  %v314 = vmul.f32 %v294, %v312
  %v315 = vmul.f32 %v295, %v312
  %v316 = vmul.f32 %v296, %v312
  %v317 = vmul.f32 %v297, %v312
  %v318 = vmul.f32 %v298, %v312
  %v319 = vmul.f32 %v299, %v312
  %v320 = vmul.f32 %v300, %v312
  %v321 = vmul.f32 %v301, %v312
  %v322 = vmul.f32 %v302, %v312
  %v323 = vmul.f32 %v303, %v312
  %v324 = vmul.f32 %v304, %v312
  %v325 = vmul.f32 %v305, %v312
  %v326 = vmul.f32 %v306, %v312
  %v327 = vmul.f32 %v307, %v312
  %v328 = vmul.f32 %v308, %v312
  %v329 = vmul.f32 %v309, %v312
  %330 = vst.msk [vmem:[%s3] sm:$0xff] %vm167, %v314
  %331 = vst.msk [vmem:[%s3 + $0x8] sm:$0xff] %vm167, %v315
  %332 = vst.msk [vmem:[%s3 + $0x10] sm:$0xff] %vm167, %v316
  %333 = vst.msk [vmem:[%s3 + $0x18] sm:$0xff] %vm167, %v317
  %334 = vst.msk [vmem:[%s3 + $0x20] sm:$0xff] %vm167, %v318
  %335 = vst.msk [vmem:[%s3 + $0x28] sm:$0xff] %vm167, %v319
  %336 = vst.msk [vmem:[%s3 + $0x30] sm:$0xff] %vm167, %v320
  %337 = vst.msk [vmem:[%s3 + $0x38] sm:$0xff] %vm167, %v321
  %338 = vst.msk [vmem:[%s3 + $0x40] sm:$0xff] %vm167, %v322
  %339 = vst.msk [vmem:[%s3 + $0x48] sm:$0xff] %vm167, %v323
  %340 = vst.msk [vmem:[%s3 + $0x50] sm:$0xff] %vm167, %v324
  %341 = vst.msk [vmem:[%s3 + $0x58] sm:$0xff] %vm167, %v325
  %342 = vst.msk [vmem:[%s3 + $0x60] sm:$0xff] %vm167, %v326
  %343 = vst.msk [vmem:[%s3 + $0x68] sm:$0xff] %vm167, %v327
  %344 = vst.msk [vmem:[%s3 + $0x70] sm:$0xff] %vm167, %v328
  %345 = vst.msk [vmem:[%s3 + $0x78] sm:$0xff] %vm167, %v329
  // Predicated region
  $region14: #{forward.80} parent=0 // pred_check
    _
  $region15: #{forward.80} parent=0 // pred_check_branch
    %347 = sbr.rel (0) target = $region17
  $region16: #{forward.80} parent=0 // pred_region
    _
  $region17: #{forward.80} parent=0 // pred_fallthru
    _
  // Predicated region
  $region18: #{forward.80} parent=0 // pred_check
    _
  $region19: #{forward.80} parent=0 // pred_check_branch
    %349 = sbr.rel (0) target = $region21
  $region20: #{forward.80} parent=0 // pred_region
    _
  $region21: #{forward.80} parent=0 // pred_fallthru
    _

// kernel: forward.101
$region0: #{forward.101}
  #allocation0 [shape = 'u32[]', space=smem, size = 0x4, offset = 0x4, fixed_abs, tag = 'smem constant byte address 0x4 - core index']
  #allocation1 [shape = 'u32[72,128]{1,0:T(1,128)}', space=vmem, size = 0x9000, scoped, tag = 'internal scratch']
  %s0 = inlined_call_operand.vmem [shape: f32[1,4], index: 0, kind: input, shape index: {}]
  %s1 = inlined_call_operand.vmem [shape: f32[9,32,4], index: 1, kind: input, shape index: {}]
  %s2 = inlined_call_operand.vmem [shape: f32[32,4], index: 2, kind: output, shape index: {}]
  %s3 = sld [smem:[#allocation0]]
  $region18: #{forward.101} parent=0
    _
  %s5 = ssub.s32 1, %s3
  %s6 = scalar_select 0, %s5, %s3
  // Predicated region
  $region2: #{forward.101} parent=0 // pred_check
    _
  $region3: #{forward.101} parent=0 // pred_check_branch
    %8 = sbr.rel (0) target = $region5
  $region4: #{forward.101} parent=0 // pred_region
    _
  $region5: #{forward.101} parent=0 // pred_fallthru
    _
  // Predicated region
  $region6: #{forward.101} parent=0 // pred_check
    _
  $region7: #{forward.101} parent=0 // pred_check_branch
    %10 = sbr.rel (0) target = $region9
  $region8: #{forward.101} parent=0 // pred_region
    _
  $region9: #{forward.101} parent=0 // pred_fallthru
    _
  %v11 = vld [vmem:[%s1] sm:$0xff]
  %v12 = vld [vmem:[%s1 + $0x8] sm:$0xff]
  %v13 = vld [vmem:[%s1 + $0x10] sm:$0xff]
  %v14 = vld [vmem:[%s1 + $0x18] sm:$0xff]
  %s15 = scalar_lea.vmem %s1, 32
  %v16 = vld [vmem:[%s15] sm:$0xff]
  %v17 = vld [vmem:[%s15 + $0x8] sm:$0xff]
  %v18 = vld [vmem:[%s15 + $0x10] sm:$0xff]
  %v19 = vld [vmem:[%s15 + $0x18] sm:$0xff]
  %v20 = vmax.f32 %v11, %v16
  %v21 = vmax.f32 %v12, %v17
  %v22 = vmax.f32 %v13, %v18
  %v23 = vmax.f32 %v14, %v19
  %s24 = scalar_lea.vmem %s1, 64
  %v25 = vld [vmem:[%s24] sm:$0xff]
  %v26 = vld [vmem:[%s24 + $0x8] sm:$0xff]
  %v27 = vld [vmem:[%s24 + $0x10] sm:$0xff]
  %v28 = vld [vmem:[%s24 + $0x18] sm:$0xff]
  %v29 = vmax.f32 %v20, %v25
  %v30 = vmax.f32 %v21, %v26
  %v31 = vmax.f32 %v22, %v27
  %v32 = vmax.f32 %v23, %v28
  %s33 = scalar_lea.vmem %s1, 96
  %v34 = vld [vmem:[%s33] sm:$0xff]
  %v35 = vld [vmem:[%s33 + $0x8] sm:$0xff]
  %v36 = vld [vmem:[%s33 + $0x10] sm:$0xff]
  %v37 = vld [vmem:[%s33 + $0x18] sm:$0xff]
  %v38 = vmax.f32 %v29, %v34
  %v39 = vmax.f32 %v30, %v35
  %v40 = vmax.f32 %v31, %v36
  %v41 = vmax.f32 %v32, %v37
  %s42 = scalar_lea.vmem %s1, 128
  %v43 = vld [vmem:[%s42] sm:$0xff]
  %v44 = vld [vmem:[%s42 + $0x8] sm:$0xff]
  %v45 = vld [vmem:[%s42 + $0x10] sm:$0xff]
  %v46 = vld [vmem:[%s42 + $0x18] sm:$0xff]
  %v47 = vmax.f32 %v38, %v43
  %v48 = vmax.f32 %v39, %v44
  %v49 = vmax.f32 %v40, %v45
  %v50 = vmax.f32 %v41, %v46
  %s51 = scalar_lea.vmem %s1, 160
  %v52 = vld [vmem:[%s51] sm:$0xff]
  %v53 = vld [vmem:[%s51 + $0x8] sm:$0xff]
  %v54 = vld [vmem:[%s51 + $0x10] sm:$0xff]
  %v55 = vld [vmem:[%s51 + $0x18] sm:$0xff]
  %v56 = vmax.f32 %v47, %v52
  %v57 = vmax.f32 %v48, %v53
  %v58 = vmax.f32 %v49, %v54
  %v59 = vmax.f32 %v50, %v55
  %s60 = scalar_lea.vmem %s1, 192
  %v61 = vld [vmem:[%s60] sm:$0xff]
  %v62 = vld [vmem:[%s60 + $0x8] sm:$0xff]
  %v63 = vld [vmem:[%s60 + $0x10] sm:$0xff]
  %v64 = vld [vmem:[%s60 + $0x18] sm:$0xff]
  %v65 = vmax.f32 %v56, %v61
  %v66 = vmax.f32 %v57, %v62
  %v67 = vmax.f32 %v58, %v63
  %v68 = vmax.f32 %v59, %v64
  %s69 = scalar_lea.vmem %s1, 224
  %v70 = vld [vmem:[%s69] sm:$0xff]
  %v71 = vld [vmem:[%s69 + $0x8] sm:$0xff]
  %v72 = vld [vmem:[%s69 + $0x10] sm:$0xff]
  %v73 = vld [vmem:[%s69 + $0x18] sm:$0xff]
  %v74 = vmax.f32 %v65, %v70
  %v75 = vmax.f32 %v66, %v71
  %v76 = vmax.f32 %v67, %v72
  %v77 = vmax.f32 %v68, %v73
  %s78 = scalar_lea.vmem %s1, 256
  %v79 = vld [vmem:[%s78] sm:$0xff]
  %v80 = vld [vmem:[%s78 + $0x8] sm:$0xff]
  %v81 = vld [vmem:[%s78 + $0x10] sm:$0xff]
  %v82 = vld [vmem:[%s78 + $0x18] sm:$0xff]
  %v83 = vmax.f32 %v74, %v79
  %v84 = vmax.f32 %v75, %v80
  %v85 = vmax.f32 %v76, %v81
  %v86 = vmax.f32 %v77, %v82
  %vm87 = vcmask 31744
  %v88 = vsel %vm87, %v83, 0.0
  %v89 = vsel %vm87, %v84, 0.0
  %v90 = vadd.f32 %v88, %v89
  %v91 = vsel %vm87, %v85, 0.0
  %v92 = vadd.f32 %v90, %v91
  %v93 = vsel %vm87, %v86, 0.0
  %v94 = vadd.f32 %v92, %v93
  %v95 = vrot.slane %v94, 4
  %v96 = vadd.f32 %v94, %v95
  %v97 = vrot.slane %v96, 2
  %v98 = vadd.f32 %v96, %v97
  %v99 = vrot.slane %v98, 1
  %v100 = vadd.f32 %v98, %v99
  %v101 = vrcp.pop 32.0
  %v102 = vmul.f32 32.0, %v101
  %v103 = vsub.f32 1.0, %v102
  %v104 = vmul.f32 %v101, %v103
  %v105 = vadd.f32 %v101, %v104
  %vm106 = vweird.f32 %v101
  %v107 = vsel %vm106, %v101, %v105
  %v108 = vmul.f32 %v100, %v107
  %v109 = vsub.f32 %v83, %v108
  %v110 = vsub.f32 %v84, %v108
  %v111 = vsub.f32 %v85, %v108
  %v112 = vsub.f32 %v86, %v108
  %v113 = vmul.f32 %v109, %v109
  %v114 = vmul.f32 %v110, %v110
  %v115 = vmul.f32 %v111, %v111
  %v116 = vmul.f32 %v112, %v112
  %v117 = vsel %vm87, %v113, 0.0
  %v118 = vsel %vm87, %v114, 0.0
  %v119 = vadd.f32 %v117, %v118
  %v120 = vsel %vm87, %v115, 0.0
  %v121 = vadd.f32 %v119, %v120
  %v122 = vsel %vm87, %v116, 0.0
  %v123 = vadd.f32 %v121, %v122
  %v124 = vrot.slane %v123, 4
  %v125 = vadd.f32 %v123, %v124
  %v126 = vrot.slane %v125, 2
  %v127 = vadd.f32 %v125, %v126
  %v128 = vrot.slane %v127, 1
  %v129 = vadd.f32 %v127, %v128
  %v130 = vmul.f32 %v129, %v107
  %v131 = vadd.f32 %v130, 1e-05
  %v132 = vrsqrt.pop %v131
  %v133 = vmul.f32 %v132, %v131
  %v134 = vmul.f32 %v133, %v132
  %v135 = vmul.f32 0.5, %v134
  %v136 = vsub.f32 1.5, %v135
  %v137 = vmul.f32 %v132, %v136
  %vm138 = vweird.f32 %v131
  %vm139 = vweird.f32 %v132
  %vm140 = vmor %vm138, %vm139
  %v141 = vsel %vm140, %v132, %v137
  %v142 = vmul.f32 %v109, %v141
  %v143 = vmul.f32 %v110, %v141
  %v144 = vmul.f32 %v111, %v141
  %v145 = vmul.f32 %v112, %v141
  %v146 = vld [vmem:[%s0] sm:$0x1]
  %v148 = vperm.slane %v146, 0
  %v150 = vmul.f32 %v142, %v148
  %v151 = vmul.f32 %v143, %v148
  %v152 = vmul.f32 %v144, %v148
  %v153 = vmul.f32 %v145, %v148
  %154 = vst.msk [vmem:[%s2] sm:$0xff] %vm87, %v150
  %155 = vst.msk [vmem:[%s2 + $0x8] sm:$0xff] %vm87, %v151
  %156 = vst.msk [vmem:[%s2 + $0x10] sm:$0xff] %vm87, %v152
  %157 = vst.msk [vmem:[%s2 + $0x18] sm:$0xff] %vm87, %v153
  // Predicated region
  $region10: #{forward.101} parent=0 // pred_check
    _
  $region11: #{forward.101} parent=0 // pred_check_branch
    %159 = sbr.rel (0) target = $region13
  $region12: #{forward.101} parent=0 // pred_region
    _
  $region13: #{forward.101} parent=0 // pred_fallthru
    _
  // Predicated region
  $region14: #{forward.101} parent=0 // pred_check
    _
  $region15: #{forward.101} parent=0 // pred_check_branch
    %161 = sbr.rel (0) target = $region17
  $region16: #{forward.101} parent=0 // pred_region
    _
  $region17: #{forward.101} parent=0 // pred_fallthru
    _

// kernel: forward.100
$region0: #{forward.100}
  #allocation0 [shape = 'u32[]', space=smem, size = 0x4, offset = 0x4, fixed_abs, tag = 'smem constant byte address 0x4 - core index']
  #allocation1 [shape = 'u32[72,128]{1,0:T(1,128)}', space=vmem, size = 0x9000, scoped, tag = 'internal scratch']
  %s0 = inlined_call_operand.vmem [shape: f32[1,4], index: 0, kind: input, shape index: {}]
  %s1 = inlined_call_operand.vmem [shape: f32[9,32,4], index: 1, kind: input, shape index: {}]
  %s2 = inlined_call_operand.vmem [shape: f32[32,4], index: 2, kind: input, shape index: {}]
  %s3 = inlined_call_operand.vmem [shape: f32[32,4], index: 3, kind: output, shape index: {}]
  %s4 = sld [smem:[#allocation0]]
  $region22: #{forward.100} parent=0
    _
  %s6 = ssub.s32 1, %s4
  %s7 = scalar_select 0, %s6, %s4
  // Predicated region
  $region2: #{forward.100} parent=0 // pred_check
    _
  $region3: #{forward.100} parent=0 // pred_check_branch
    %9 = sbr.rel (0) target = $region5
  $region4: #{forward.100} parent=0 // pred_region
    _
  $region5: #{forward.100} parent=0 // pred_fallthru
    _
  // Predicated region
  $region6: #{forward.100} parent=0 // pred_check
    _
  $region7: #{forward.100} parent=0 // pred_check_branch
    %11 = sbr.rel (0) target = $region9
  $region8: #{forward.100} parent=0 // pred_region
    _
  $region9: #{forward.100} parent=0 // pred_fallthru
    _
  // Predicated region
  $region10: #{forward.100} parent=0 // pred_check
    _
  $region11: #{forward.100} parent=0 // pred_check_branch
    %13 = sbr.rel (0) target = $region13
  $region12: #{forward.100} parent=0 // pred_region
    _
  $region13: #{forward.100} parent=0 // pred_fallthru
    _
  %v14 = vld [vmem:[%s1] sm:$0xff]
  %v15 = vld [vmem:[%s1 + $0x8] sm:$0xff]
  %v16 = vld [vmem:[%s1 + $0x10] sm:$0xff]
  %v17 = vld [vmem:[%s1 + $0x18] sm:$0xff]
  %s18 = scalar_lea.vmem %s1, 32
  %v19 = vld [vmem:[%s18] sm:$0xff]
  %v20 = vld [vmem:[%s18 + $0x8] sm:$0xff]
  %v21 = vld [vmem:[%s18 + $0x10] sm:$0xff]
  %v22 = vld [vmem:[%s18 + $0x18] sm:$0xff]
  %v23 = vadd.f32 %v14, %v19
  %v24 = vadd.f32 %v15, %v20
  %v25 = vadd.f32 %v16, %v21
  %v26 = vadd.f32 %v17, %v22
  %s27 = scalar_lea.vmem %s1, 64
  %v28 = vld [vmem:[%s27] sm:$0xff]
  %v29 = vld [vmem:[%s27 + $0x8] sm:$0xff]
  %v30 = vld [vmem:[%s27 + $0x10] sm:$0xff]
  %v31 = vld [vmem:[%s27 + $0x18] sm:$0xff]
  %v32 = vadd.f32 %v23, %v28
  %v33 = vadd.f32 %v24, %v29
  %v34 = vadd.f32 %v25, %v30
  %v35 = vadd.f32 %v26, %v31
  %s36 = scalar_lea.vmem %s1, 96
  %v37 = vld [vmem:[%s36] sm:$0xff]
  %v38 = vld [vmem:[%s36 + $0x8] sm:$0xff]
  %v39 = vld [vmem:[%s36 + $0x10] sm:$0xff]
  %v40 = vld [vmem:[%s36 + $0x18] sm:$0xff]
  %v41 = vadd.f32 %v32, %v37
  %v42 = vadd.f32 %v33, %v38
  %v43 = vadd.f32 %v34, %v39
  %v44 = vadd.f32 %v35, %v40
  %s45 = scalar_lea.vmem %s1, 128
  %v46 = vld [vmem:[%s45] sm:$0xff]
  %v47 = vld [vmem:[%s45 + $0x8] sm:$0xff]
  %v48 = vld [vmem:[%s45 + $0x10] sm:$0xff]
  %v49 = vld [vmem:[%s45 + $0x18] sm:$0xff]
  %v50 = vadd.f32 %v41, %v46
  %v51 = vadd.f32 %v42, %v47
  %v52 = vadd.f32 %v43, %v48
  %v53 = vadd.f32 %v44, %v49
  %s54 = scalar_lea.vmem %s1, 160
  %v55 = vld [vmem:[%s54] sm:$0xff]
  %v56 = vld [vmem:[%s54 + $0x8] sm:$0xff]
  %v57 = vld [vmem:[%s54 + $0x10] sm:$0xff]
  %v58 = vld [vmem:[%s54 + $0x18] sm:$0xff]
  %v59 = vadd.f32 %v50, %v55
  %v60 = vadd.f32 %v51, %v56
  %v61 = vadd.f32 %v52, %v57
  %v62 = vadd.f32 %v53, %v58
  %s63 = scalar_lea.vmem %s1, 192
  %v64 = vld [vmem:[%s63] sm:$0xff]
  %v65 = vld [vmem:[%s63 + $0x8] sm:$0xff]
  %v66 = vld [vmem:[%s63 + $0x10] sm:$0xff]
  %v67 = vld [vmem:[%s63 + $0x18] sm:$0xff]
  %v68 = vadd.f32 %v59, %v64
  %v69 = vadd.f32 %v60, %v65
  %v70 = vadd.f32 %v61, %v66
  %v71 = vadd.f32 %v62, %v67
  %s72 = scalar_lea.vmem %s1, 224
  %v73 = vld [vmem:[%s72] sm:$0xff]
  %v74 = vld [vmem:[%s72 + $0x8] sm:$0xff]
  %v75 = vld [vmem:[%s72 + $0x10] sm:$0xff]
  %v76 = vld [vmem:[%s72 + $0x18] sm:$0xff]
  %v77 = vadd.f32 %v68, %v73
  %v78 = vadd.f32 %v69, %v74
  %v79 = vadd.f32 %v70, %v75
  %v80 = vadd.f32 %v71, %v76
  %s81 = scalar_lea.vmem %s1, 256
  %v82 = vld [vmem:[%s81] sm:$0xff]
  %v83 = vld [vmem:[%s81 + $0x8] sm:$0xff]
  %v84 = vld [vmem:[%s81 + $0x10] sm:$0xff]
  %v85 = vld [vmem:[%s81 + $0x18] sm:$0xff]
  %v86 = vadd.f32 %v77, %v82
  %v87 = vadd.f32 %v78, %v83
  %v88 = vadd.f32 %v79, %v84
  %v89 = vadd.f32 %v80, %v85
  %v90 = vld [vmem:[%s2] sm:$0xff]
  %v91 = vld [vmem:[%s2 + $0x8] sm:$0xff]
  %v92 = vld [vmem:[%s2 + $0x10] sm:$0xff]
  %v93 = vld [vmem:[%s2 + $0x18] sm:$0xff]
  %v94 = vmul.f32 %v86, %v90
  %v95 = vmul.f32 %v87, %v91
  %v96 = vmul.f32 %v88, %v92
  %v97 = vmul.f32 %v89, %v93
  %vm98 = vcmask 31744
  %v99 = vsel %vm98, %v94, 0.0
  %v100 = vsel %vm98, %v95, 0.0
  %v101 = vadd.f32 %v99, %v100
  %v102 = vsel %vm98, %v96, 0.0
  %v103 = vadd.f32 %v101, %v102
  %v104 = vsel %vm98, %v97, 0.0
  %v105 = vadd.f32 %v103, %v104
  %v106 = vrot.slane %v105, 4
  %v107 = vadd.f32 %v105, %v106
  %v108 = vrot.slane %v107, 2
  %v109 = vadd.f32 %v107, %v108
  %v110 = vrot.slane %v109, 1
  %v111 = vadd.f32 %v109, %v110
  %v112 = vrcp.pop 32.0
  %v113 = vmul.f32 32.0, %v112
  %v114 = vsub.f32 1.0, %v113
  %v115 = vmul.f32 %v112, %v114
  %v116 = vadd.f32 %v112, %v115
  %vm117 = vweird.f32 %v112
  %v118 = vsel %vm117, %v112, %v116
  %v119 = vmul.f32 %v111, %v118
  %v120 = vsub.f32 %v94, %v119
  %v121 = vsub.f32 %v95, %v119
  %v122 = vsub.f32 %v96, %v119
  %v123 = vsub.f32 %v97, %v119
  %v124 = vmul.f32 %v120, %v120
  %v125 = vmul.f32 %v121, %v121
  %v126 = vmul.f32 %v122, %v122
  %v127 = vmul.f32 %v123, %v123
  %v128 = vsel %vm98, %v124, 0.0
  %v129 = vsel %vm98, %v125, 0.0
  %v130 = vadd.f32 %v128, %v129
  %v131 = vsel %vm98, %v126, 0.0
  %v132 = vadd.f32 %v130, %v131
  %v133 = vsel %vm98, %v127, 0.0
  %v134 = vadd.f32 %v132, %v133
  %v135 = vrot.slane %v134, 4
  %v136 = vadd.f32 %v134, %v135
  %v137 = vrot.slane %v136, 2
  %v138 = vadd.f32 %v136, %v137
  %v139 = vrot.slane %v138, 1
  %v140 = vadd.f32 %v138, %v139
  %v141 = vmul.f32 %v140, %v118
  %v142 = vadd.f32 %v141, 1e-05
  %v143 = vrsqrt.pop %v142
  %v144 = vmul.f32 %v143, %v142
  %v145 = vmul.f32 %v144, %v143
  %v146 = vmul.f32 0.5, %v145
  %v147 = vsub.f32 1.5, %v146
  %v148 = vmul.f32 %v143, %v147
  %vm149 = vweird.f32 %v142
  %vm150 = vweird.f32 %v143
  %vm151 = vmor %vm149, %vm150
  %v152 = vsel %vm151, %v143, %v148
  %v153 = vmul.f32 %v120, %v152
  %v154 = vmul.f32 %v121, %v152
  %v155 = vmul.f32 %v122, %v152
  %v156 = vmul.f32 %v123, %v152
  %v157 = vld [vmem:[%s0] sm:$0x1]
  %v159 = vperm.slane %v157, 0
  %v161 = vmul.f32 %v153, %v159
  %v162 = vmul.f32 %v154, %v159
  %v163 = vmul.f32 %v155, %v159
  %v164 = vmul.f32 %v156, %v159
  %165 = vst.msk [vmem:[%s3] sm:$0xff] %vm98, %v161
  %166 = vst.msk [vmem:[%s3 + $0x8] sm:$0xff] %vm98, %v162
  %167 = vst.msk [vmem:[%s3 + $0x10] sm:$0xff] %vm98, %v163
  %168 = vst.msk [vmem:[%s3 + $0x18] sm:$0xff] %vm98, %v164
  // Predicated region
  $region14: #{forward.100} parent=0 // pred_check
    _
  $region15: #{forward.100} parent=0 // pred_check_branch
    %170 = sbr.rel (0) target = $region17
  $region16: #{forward.100} parent=0 // pred_region
    _
  $region17: #{forward.100} parent=0 // pred_fallthru
    _
  // Predicated region
  $region18: #{forward.100} parent=0 // pred_check
    _
  $region19: #{forward.100} parent=0 // pred_check_branch
    %172 = sbr.rel (0) target = $region21
  $region20: #{forward.100} parent=0 // pred_region
    _
  $region21: #{forward.100} parent=0 // pred_fallthru
    _

// kernel: forward.102
$region0: #{forward.102}
  #allocation0 [shape = 'u32[]', space=smem, size = 0x4, offset = 0x4, fixed_abs, tag = 'smem constant byte address 0x4 - core index']
  #allocation1 [shape = 'u32[72,128]{1,0:T(1,128)}', space=vmem, size = 0x9000, scoped, tag = 'internal scratch']
  %s0 = inlined_call_operand.vmem [shape: f32[1,4], index: 0, kind: input, shape index: {}]
  %s1 = inlined_call_operand.vmem [shape: f32[32,36], index: 1, kind: input, shape index: {}]
  %s2 = inlined_call_operand.vmem [shape: f32[36,4], index: 2, kind: input, shape index: {}]
  %s3 = inlined_call_operand.vmem [shape: f32[32,4], index: 3, kind: output, shape index: {}]
  %s4 = sld [smem:[#allocation0]]
  $region22: #{forward.102} parent=0
    _
  %s6 = ssub.s32 1, %s4
  %s7 = scalar_select 0, %s6, %s4
  // Predicated region
  $region2: #{forward.102} parent=0 // pred_check
    _
  $region3: #{forward.102} parent=0 // pred_check_branch
    %9 = sbr.rel (0) target = $region5
  $region4: #{forward.102} parent=0 // pred_region
    _
  $region5: #{forward.102} parent=0 // pred_fallthru
    _
  // Predicated region
  $region6: #{forward.102} parent=0 // pred_check
    _
  $region7: #{forward.102} parent=0 // pred_check_branch
    %11 = sbr.rel (0) target = $region9
  $region8: #{forward.102} parent=0 // pred_region
    _
  $region9: #{forward.102} parent=0 // pred_fallthru
    _
  // Predicated region
  $region10: #{forward.102} parent=0 // pred_check
    _
  $region11: #{forward.102} parent=0 // pred_check_branch
    %13 = sbr.rel (0) target = $region13
  $region12: #{forward.102} parent=0 // pred_region
    _
  $region13: #{forward.102} parent=0 // pred_fallthru
    _
  %v14 = vld [vmem:[%s1] sm:$0xff]
  %v15 = vld [vmem:[%s1 + $0x8] sm:$0xff]
  %v16 = vld [vmem:[%s1 + $0x10] sm:$0xff]
  %v17 = vld [vmem:[%s1 + $0x18] sm:$0xff]
  %v18 = vmax.f32 %v14, 0.0
  %v19 = vmax.f32 %v15, 0.0
  %v20 = vmax.f32 %v16, 0.0
  %v21 = vmax.f32 %v17, 0.0
  %v22 = vld [vmem:[%s2] sm:$0xff]
  %v23 = vld [vmem:[%s2 + $0x8] sm:$0xff]
  %v24 = vld [vmem:[%s2 + $0x10] sm:$0xff]
  %v25 = vld [vmem:[%s2 + $0x18] sm:$0xff]
  %v26 = vld [vmem:[%s2 + $0x20] sm:$0xf]
  %vm27 = vcmask 293888
  %v29 = vsel %vm27, %v18, 0
  %v32 = vsel %vm27, %v19, 0
  %v35 = vsel %vm27, %v20, 0
  %v38 = vsel %vm27, %v21, 0
  %vm40 = vcmask 1043456
  %v42 = vsel %vm40, %v26, 0
  %44 = vmatpush.msra.mxu0 0.0
  %45 = vmatpush.msra.mxu0 0.0
  %46 = vmatpush.msra.mxu0 0.0
  %47 = vmatpush.msra.mxu0 0.0
  %48 = vmatpush.msra.mxu0 0.0
  %49 = vmatpush.msra.mxu0 0.0
  %50 = vmatpush.msra.mxu0 0.0
  %51 = vmatpush.msra.mxu0 0.0
  %52 = vmatpush.msra.mxu0 0.0
  %53 = vmatpush.msra.mxu0 0.0
  %54 = vmatpush.msra.mxu0 0.0
  %55 = vmatpush.msra.mxu0 %v42
  %56 = vmatpush.msra.mxu0 %v25
  %57 = vmatpush.msra.mxu0 %v24
  %58 = vmatpush.msra.mxu0 %v23
  %59 = vmatpush.msra.mxu0 %v22
  %60 = vmatmul.f32.gmra.mxu0 %v29
  %v61 = vpop.f32.mrf.mxu0
  %v62 = vadd.f32 0.0, %v61
  %63 = vmatmul.f32.gmra.mxu0 %v32
  %v64 = vpop.f32.mrf.mxu0
  %v65 = vadd.f32 0.0, %v64
  %66 = vmatmul.f32.gmra.mxu0 %v35
  %v67 = vpop.f32.mrf.mxu0
  %v68 = vadd.f32 0.0, %v67
  %69 = vmatmul.f32.gmra.mxu0 %v38
  %v70 = vpop.f32.mrf.mxu0
  %v71 = vadd.f32 0.0, %v70
  %72 = vdwg.mxu0
  %vm73 = vcmask 31744
  %v74 = vsel %vm73, %v62, 0.0
  %v75 = vsel %vm73, %v65, 0.0
  %v76 = vadd.f32 %v74, %v75
  %v77 = vsel %vm73, %v68, 0.0
  %v78 = vadd.f32 %v76, %v77
  %v79 = vsel %vm73, %v71, 0.0
  %v80 = vadd.f32 %v78, %v79
  %v81 = vrot.slane %v80, 4
  %v82 = vadd.f32 %v80, %v81
  %v83 = vrot.slane %v82, 2
  %v84 = vadd.f32 %v82, %v83
  %v85 = vrot.slane %v84, 1
  %v86 = vadd.f32 %v84, %v85
  %v87 = vrcp.pop 32.0
  %v88 = vmul.f32 32.0, %v87
  %v89 = vsub.f32 1.0, %v88
  %v90 = vmul.f32 %v87, %v89
  %v91 = vadd.f32 %v87, %v90
  %vm92 = vweird.f32 %v87
  %v93 = vsel %vm92, %v87, %v91
  %v94 = vmul.f32 %v86, %v93
  %v95 = vsub.f32 %v62, %v94
  %v96 = vsub.f32 %v65, %v94
  %v97 = vsub.f32 %v68, %v94
  %v98 = vsub.f32 %v71, %v94
  %v99 = vmul.f32 %v95, %v95
  %v100 = vmul.f32 %v96, %v96
  %v101 = vmul.f32 %v97, %v97
  %v102 = vmul.f32 %v98, %v98
  %v103 = vsel %vm73, %v99, 0.0
  %v104 = vsel %vm73, %v100, 0.0
  %v105 = vadd.f32 %v103, %v104
  %v106 = vsel %vm73, %v101, 0.0
  %v107 = vadd.f32 %v105, %v106
  %v108 = vsel %vm73, %v102, 0.0
  %v109 = vadd.f32 %v107, %v108
  %v110 = vrot.slane %v109, 4
  %v111 = vadd.f32 %v109, %v110
  %v112 = vrot.slane %v111, 2
  %v113 = vadd.f32 %v111, %v112
  %v114 = vrot.slane %v113, 1
  %v115 = vadd.f32 %v113, %v114
  %v116 = vmul.f32 %v115, %v93
  %v117 = vadd.f32 %v116, 1e-05
  %v118 = vrsqrt.pop %v117
  %v119 = vmul.f32 %v118, %v117
  %v120 = vmul.f32 %v119, %v118
  %v121 = vmul.f32 0.5, %v120
  %v122 = vsub.f32 1.5, %v121
  %v123 = vmul.f32 %v118, %v122
  %vm124 = vweird.f32 %v117
  %vm125 = vweird.f32 %v118
  %vm126 = vmor %vm124, %vm125
  %v127 = vsel %vm126, %v118, %v123
  %v128 = vmul.f32 %v95, %v127
  %v129 = vmul.f32 %v96, %v127
  %v130 = vmul.f32 %v97, %v127
  %v131 = vmul.f32 %v98, %v127
  %v132 = vld [vmem:[%s0] sm:$0x1]
  %v134 = vperm.slane %v132, 0
  %v136 = vmul.f32 %v128, %v134
  %v137 = vmul.f32 %v129, %v134
  %v138 = vmul.f32 %v130, %v134
  %v139 = vmul.f32 %v131, %v134
  %140 = vst.msk [vmem:[%s3] sm:$0xff] %vm73, %v136
  %141 = vst.msk [vmem:[%s3 + $0x8] sm:$0xff] %vm73, %v137
  %142 = vst.msk [vmem:[%s3 + $0x10] sm:$0xff] %vm73, %v138
  %143 = vst.msk [vmem:[%s3 + $0x18] sm:$0xff] %vm73, %v139
  // Predicated region
  $region14: #{forward.102} parent=0 // pred_check
    _
  $region15: #{forward.102} parent=0 // pred_check_branch
    %145 = sbr.rel (0) target = $region17
  $region16: #{forward.102} parent=0 // pred_region
    _
  $region17: #{forward.102} parent=0 // pred_fallthru
    _
  // Predicated region
  $region18: #{forward.102} parent=0 // pred_check
    _
  $region19: #{forward.102} parent=0 // pred_check_branch
    %147 = sbr.rel (0) target = $region21
  $region20: #{forward.102} parent=0 // pred_region
    _
  $region21: #{forward.102} parent=0 // pred_fallthru
    _

// kernel: forward.79
$region0: #{forward.79}
  #allocation0 [shape = 'u32[]', space=smem, size = 0x4, offset = 0x4, fixed_abs, tag = 'smem constant byte address 0x4 - core index']
  #allocation1 [shape = 'u32[72,128]{1,0:T(1,128)}', space=vmem, size = 0x9000, scoped, tag = 'internal scratch']
  %s0 = inlined_call_operand.vmem [shape: f32[1,2], index: 0, kind: input, shape index: {}]
  %s1 = inlined_call_operand.vmem [shape: f32[9,128,2], index: 1, kind: input, shape index: {}]
  %s2 = inlined_call_operand.vmem [shape: f32[128,2], index: 2, kind: output, shape index: {}]
  %s3 = sld [smem:[#allocation0]]
  $region18: #{forward.79} parent=0
    _
  %s5 = ssub.s32 1, %s3
  %s6 = scalar_select 0, %s5, %s3
  // Predicated region
  $region2: #{forward.79} parent=0 // pred_check
    _
  $region3: #{forward.79} parent=0 // pred_check_branch
    %8 = sbr.rel (0) target = $region5
  $region4: #{forward.79} parent=0 // pred_region
    _
  $region5: #{forward.79} parent=0 // pred_fallthru
    _
  // Predicated region
  $region6: #{forward.79} parent=0 // pred_check
    _
  $region7: #{forward.79} parent=0 // pred_check_branch
    %10 = sbr.rel (0) target = $region9
  $region8: #{forward.79} parent=0 // pred_region
    _
  $region9: #{forward.79} parent=0 // pred_fallthru
    _
  %v11 = vld [vmem:[%s1] sm:$0xff]
  %v12 = vld [vmem:[%s1 + $0x8] sm:$0xff]
  %v13 = vld [vmem:[%s1 + $0x10] sm:$0xff]
  %v14 = vld [vmem:[%s1 + $0x18] sm:$0xff]
  %v15 = vld [vmem:[%s1 + $0x20] sm:$0xff]
  %v16 = vld [vmem:[%s1 + $0x28] sm:$0xff]
  %v17 = vld [vmem:[%s1 + $0x30] sm:$0xff]
  %v18 = vld [vmem:[%s1 + $0x38] sm:$0xff]
  %v19 = vld [vmem:[%s1 + $0x40] sm:$0xff]
  %v20 = vld [vmem:[%s1 + $0x48] sm:$0xff]
  %v21 = vld [vmem:[%s1 + $0x50] sm:$0xff]
  %v22 = vld [vmem:[%s1 + $0x58] sm:$0xff]
  %v23 = vld [vmem:[%s1 + $0x60] sm:$0xff]
  %v24 = vld [vmem:[%s1 + $0x68] sm:$0xff]
  %v25 = vld [vmem:[%s1 + $0x70] sm:$0xff]
  %v26 = vld [vmem:[%s1 + $0x78] sm:$0xff]
  %s27 = scalar_lea.vmem %s1, 128
  %v28 = vld [vmem:[%s27] sm:$0xff]
  %v29 = vld [vmem:[%s27 + $0x8] sm:$0xff]
  %v30 = vld [vmem:[%s27 + $0x10] sm:$0xff]
  %v31 = vld [vmem:[%s27 + $0x18] sm:$0xff]
  %v32 = vld [vmem:[%s27 + $0x20] sm:$0xff]
  %v33 = vld [vmem:[%s27 + $0x28] sm:$0xff]
  %v34 = vld [vmem:[%s27 + $0x30] sm:$0xff]
  %v35 = vld [vmem:[%s27 + $0x38] sm:$0xff]
  %v36 = vld [vmem:[%s27 + $0x40] sm:$0xff]
  %v37 = vld [vmem:[%s27 + $0x48] sm:$0xff]
  %v38 = vld [vmem:[%s27 + $0x50] sm:$0xff]
  %v39 = vld [vmem:[%s27 + $0x58] sm:$0xff]
  %v40 = vld [vmem:[%s27 + $0x60] sm:$0xff]
  %v41 = vld [vmem:[%s27 + $0x68] sm:$0xff]
  %v42 = vld [vmem:[%s27 + $0x70] sm:$0xff]
  %v43 = vld [vmem:[%s27 + $0x78] sm:$0xff]
  %v44 = vmax.f32 %v11, %v28
  %v45 = vmax.f32 %v12, %v29
  %v46 = vmax.f32 %v13, %v30
  %v47 = vmax.f32 %v14, %v31
  %v48 = vmax.f32 %v15, %v32
  %v49 = vmax.f32 %v16, %v33
  %v50 = vmax.f32 %v17, %v34
  %v51 = vmax.f32 %v18, %v35
  %v52 = vmax.f32 %v19, %v36
  %v53 = vmax.f32 %v20, %v37
  %v54 = vmax.f32 %v21, %v38
  %v55 = vmax.f32 %v22, %v39
  %v56 = vmax.f32 %v23, %v40
  %v57 = vmax.f32 %v24, %v41
  %v58 = vmax.f32 %v25, %v42
  %v59 = vmax.f32 %v26, %v43
  %s60 = scalar_lea.vmem %s1, 256
  %v61 = vld [vmem:[%s60] sm:$0xff]
  %v62 = vld [vmem:[%s60 + $0x8] sm:$0xff]
  %v63 = vld [vmem:[%s60 + $0x10] sm:$0xff]
  %v64 = vld [vmem:[%s60 + $0x18] sm:$0xff]
  %v65 = vld [vmem:[%s60 + $0x20] sm:$0xff]
  %v66 = vld [vmem:[%s60 + $0x28] sm:$0xff]
  %v67 = vld [vmem:[%s60 + $0x30] sm:$0xff]
  %v68 = vld [vmem:[%s60 + $0x38] sm:$0xff]
  %v69 = vld [vmem:[%s60 + $0x40] sm:$0xff]
  %v70 = vld [vmem:[%s60 + $0x48] sm:$0xff]
  %v71 = vld [vmem:[%s60 + $0x50] sm:$0xff]
  %v72 = vld [vmem:[%s60 + $0x58] sm:$0xff]
  %v73 = vld [vmem:[%s60 + $0x60] sm:$0xff]
  %v74 = vld [vmem:[%s60 + $0x68] sm:$0xff]
  %v75 = vld [vmem:[%s60 + $0x70] sm:$0xff]
  %v76 = vld [vmem:[%s60 + $0x78] sm:$0xff]
  %v77 = vmax.f32 %v44, %v61
  %v78 = vmax.f32 %v45, %v62
  %v79 = vmax.f32 %v46, %v63
  %v80 = vmax.f32 %v47, %v64
  %v81 = vmax.f32 %v48, %v65
  %v82 = vmax.f32 %v49, %v66
  %v83 = vmax.f32 %v50, %v67
  %v84 = vmax.f32 %v51, %v68
  %v85 = vmax.f32 %v52, %v69
  %v86 = vmax.f32 %v53, %v70
  %v87 = vmax.f32 %v54, %v71
  %v88 = vmax.f32 %v55, %v72
  %v89 = vmax.f32 %v56, %v73
  %v90 = vmax.f32 %v57, %v74
  %v91 = vmax.f32 %v58, %v75
  %v92 = vmax.f32 %v59, %v76
  %s93 = scalar_lea.vmem %s1, 384
  %v94 = vld [vmem:[%s93] sm:$0xff]
  %v95 = vld [vmem:[%s93 + $0x8] sm:$0xff]
  %v96 = vld [vmem:[%s93 + $0x10] sm:$0xff]
  %v97 = vld [vmem:[%s93 + $0x18] sm:$0xff]
  %v98 = vld [vmem:[%s93 + $0x20] sm:$0xff]
  %v99 = vld [vmem:[%s93 + $0x28] sm:$0xff]
  %v100 = vld [vmem:[%s93 + $0x30] sm:$0xff]
  %v101 = vld [vmem:[%s93 + $0x38] sm:$0xff]
  %v102 = vld [vmem:[%s93 + $0x40] sm:$0xff]
  %v103 = vld [vmem:[%s93 + $0x48] sm:$0xff]
  %v104 = vld [vmem:[%s93 + $0x50] sm:$0xff]
  %v105 = vld [vmem:[%s93 + $0x58] sm:$0xff]
  %v106 = vld [vmem:[%s93 + $0x60] sm:$0xff]
  %v107 = vld [vmem:[%s93 + $0x68] sm:$0xff]
  %v108 = vld [vmem:[%s93 + $0x70] sm:$0xff]
  %v109 = vld [vmem:[%s93 + $0x78] sm:$0xff]
  %v110 = vmax.f32 %v77, %v94
  %v111 = vmax.f32 %v78, %v95
  %v112 = vmax.f32 %v79, %v96
  %v113 = vmax.f32 %v80, %v97
  %v114 = vmax.f32 %v81, %v98
  %v115 = vmax.f32 %v82, %v99
  %v116 = vmax.f32 %v83, %v100
  %v117 = vmax.f32 %v84, %v101
  %v118 = vmax.f32 %v85, %v102
  %v119 = vmax.f32 %v86, %v103
  %v120 = vmax.f32 %v87, %v104
  %v121 = vmax.f32 %v88, %v105
  %v122 = vmax.f32 %v89, %v106
  %v123 = vmax.f32 %v90, %v107
  %v124 = vmax.f32 %v91, %v108
  %v125 = vmax.f32 %v92, %v109
  %s126 = scalar_lea.vmem %s1, 512
  %v127 = vld [vmem:[%s126] sm:$0xff]
  %v128 = vld [vmem:[%s126 + $0x8] sm:$0xff]
  %v129 = vld [vmem:[%s126 + $0x10] sm:$0xff]
  %v130 = vld [vmem:[%s126 + $0x18] sm:$0xff]
  %v131 = vld [vmem:[%s126 + $0x20] sm:$0xff]
  %v132 = vld [vmem:[%s126 + $0x28] sm:$0xff]
  %v133 = vld [vmem:[%s126 + $0x30] sm:$0xff]
  %v134 = vld [vmem:[%s126 + $0x38] sm:$0xff]
  %v135 = vld [vmem:[%s126 + $0x40] sm:$0xff]
  %v136 = vld [vmem:[%s126 + $0x48] sm:$0xff]
  %v137 = vld [vmem:[%s126 + $0x50] sm:$0xff]
  %v138 = vld [vmem:[%s126 + $0x58] sm:$0xff]
  %v139 = vld [vmem:[%s126 + $0x60] sm:$0xff]
  %v140 = vld [vmem:[%s126 + $0x68] sm:$0xff]
  %v141 = vld [vmem:[%s126 + $0x70] sm:$0xff]
  %v142 = vld [vmem:[%s126 + $0x78] sm:$0xff]
  %v143 = vmax.f32 %v110, %v127
  %v144 = vmax.f32 %v111, %v128
  %v145 = vmax.f32 %v112, %v129
  %v146 = vmax.f32 %v113, %v130
  %v147 = vmax.f32 %v114, %v131
  %v148 = vmax.f32 %v115, %v132
  %v149 = vmax.f32 %v116, %v133
  %v150 = vmax.f32 %v117, %v134
  %v151 = vmax.f32 %v118, %v135
  %v152 = vmax.f32 %v119, %v136
  %v153 = vmax.f32 %v120, %v137
  %v154 = vmax.f32 %v121, %v138
  %v155 = vmax.f32 %v122, %v139
  %v156 = vmax.f32 %v123, %v140
  %v157 = vmax.f32 %v124, %v141
  %v158 = vmax.f32 %v125, %v142
  %s159 = scalar_lea.vmem %s1, 640
  %v160 = vld [vmem:[%s159] sm:$0xff]
  %v161 = vld [vmem:[%s159 + $0x8] sm:$0xff]
  %v162 = vld [vmem:[%s159 + $0x10] sm:$0xff]
  %v163 = vld [vmem:[%s159 + $0x18] sm:$0xff]
  %v164 = vld [vmem:[%s159 + $0x20] sm:$0xff]
  %v165 = vld [vmem:[%s159 + $0x28] sm:$0xff]
  %v166 = vld [vmem:[%s159 + $0x30] sm:$0xff]
  %v167 = vld [vmem:[%s159 + $0x38] sm:$0xff]
  %v168 = vld [vmem:[%s159 + $0x40] sm:$0xff]
  %v169 = vld [vmem:[%s159 + $0x48] sm:$0xff]
  %v170 = vld [vmem:[%s159 + $0x50] sm:$0xff]
  %v171 = vld [vmem:[%s159 + $0x58] sm:$0xff]
  %v172 = vld [vmem:[%s159 + $0x60] sm:$0xff]
  %v173 = vld [vmem:[%s159 + $0x68] sm:$0xff]
  %v174 = vld [vmem:[%s159 + $0x70] sm:$0xff]
  %v175 = vld [vmem:[%s159 + $0x78] sm:$0xff]
  %v176 = vmax.f32 %v143, %v160
  %v177 = vmax.f32 %v144, %v161
  %v178 = vmax.f32 %v145, %v162
  %v179 = vmax.f32 %v146, %v163
  %v180 = vmax.f32 %v147, %v164
  %v181 = vmax.f32 %v148, %v165
  %v182 = vmax.f32 %v149, %v166
  %v183 = vmax.f32 %v150, %v167
  %v184 = vmax.f32 %v151, %v168
  %v185 = vmax.f32 %v152, %v169
  %v186 = vmax.f32 %v153, %v170
  %v187 = vmax.f32 %v154, %v171
  %v188 = vmax.f32 %v155, %v172
  %v189 = vmax.f32 %v156, %v173
  %v190 = vmax.f32 %v157, %v174
  %v191 = vmax.f32 %v158, %v175
  %s192 = scalar_lea.vmem %s1, 768
  %v193 = vld [vmem:[%s192] sm:$0xff]
  %v194 = vld [vmem:[%s192 + $0x8] sm:$0xff]
  %v195 = vld [vmem:[%s192 + $0x10] sm:$0xff]
  %v196 = vld [vmem:[%s192 + $0x18] sm:$0xff]
  %v197 = vld [vmem:[%s192 + $0x20] sm:$0xff]
  %v198 = vld [vmem:[%s192 + $0x28] sm:$0xff]
  %v199 = vld [vmem:[%s192 + $0x30] sm:$0xff]
  %v200 = vld [vmem:[%s192 + $0x38] sm:$0xff]
  %v201 = vld [vmem:[%s192 + $0x40] sm:$0xff]
  %v202 = vld [vmem:[%s192 + $0x48] sm:$0xff]
  %v203 = vld [vmem:[%s192 + $0x50] sm:$0xff]
  %v204 = vld [vmem:[%s192 + $0x58] sm:$0xff]
  %v205 = vld [vmem:[%s192 + $0x60] sm:$0xff]
  %v206 = vld [vmem:[%s192 + $0x68] sm:$0xff]
  %v207 = vld [vmem:[%s192 + $0x70] sm:$0xff]
  %v208 = vld [vmem:[%s192 + $0x78] sm:$0xff]
  %v209 = vmax.f32 %v176, %v193
  %v210 = vmax.f32 %v177, %v194
  %v211 = vmax.f32 %v178, %v195
  %v212 = vmax.f32 %v179, %v196
  %v213 = vmax.f32 %v180, %v197
  %v214 = vmax.f32 %v181, %v198
  %v215 = vmax.f32 %v182, %v199
  %v216 = vmax.f32 %v183, %v200
  %v217 = vmax.f32 %v184, %v201
  %v218 = vmax.f32 %v185, %v202
  %v219 = vmax.f32 %v186, %v203
  %v220 = vmax.f32 %v187, %v204
  %v221 = vmax.f32 %v188, %v205
  %v222 = vmax.f32 %v189, %v206
  %v223 = vmax.f32 %v190, %v207
  %v224 = vmax.f32 %v191, %v208
  %s225 = scalar_lea.vmem %s1, 896
  %v226 = vld [vmem:[%s225] sm:$0xff]
  %v227 = vld [vmem:[%s225 + $0x8] sm:$0xff]
  %v228 = vld [vmem:[%s225 + $0x10] sm:$0xff]
  %v229 = vld [vmem:[%s225 + $0x18] sm:$0xff]
  %v230 = vld [vmem:[%s225 + $0x20] sm:$0xff]
  %v231 = vld [vmem:[%s225 + $0x28] sm:$0xff]
  %v232 = vld [vmem:[%s225 + $0x30] sm:$0xff]
  %v233 = vld [vmem:[%s225 + $0x38] sm:$0xff]
  %v234 = vld [vmem:[%s225 + $0x40] sm:$0xff]
  %v235 = vld [vmem:[%s225 + $0x48] sm:$0xff]
  %v236 = vld [vmem:[%s225 + $0x50] sm:$0xff]
  %v237 = vld [vmem:[%s225 + $0x58] sm:$0xff]
  %v238 = vld [vmem:[%s225 + $0x60] sm:$0xff]
  %v239 = vld [vmem:[%s225 + $0x68] sm:$0xff]
  %v240 = vld [vmem:[%s225 + $0x70] sm:$0xff]
  %v241 = vld [vmem:[%s225 + $0x78] sm:$0xff]
  %v242 = vmax.f32 %v209, %v226
  %v243 = vmax.f32 %v210, %v227
  %v244 = vmax.f32 %v211, %v228
  %v245 = vmax.f32 %v212, %v229
  %v246 = vmax.f32 %v213, %v230
  %v247 = vmax.f32 %v214, %v231
  %v248 = vmax.f32 %v215, %v232
  %v249 = vmax.f32 %v216, %v233
  %v250 = vmax.f32 %v217, %v234
  %v251 = vmax.f32 %v218, %v235
  %v252 = vmax.f32 %v219, %v236
  %v253 = vmax.f32 %v220, %v237
  %v254 = vmax.f32 %v221, %v238
  %v255 = vmax.f32 %v222, %v239
  %v256 = vmax.f32 %v223, %v240
  %v257 = vmax.f32 %v224, %v241
  %s258 = scalar_lea.vmem %s1, 1024
  %v259 = vld [vmem:[%s258] sm:$0xff]
  %v260 = vld [vmem:[%s258 + $0x8] sm:$0xff]
  %v261 = vld [vmem:[%s258 + $0x10] sm:$0xff]
  %v262 = vld [vmem:[%s258 + $0x18] sm:$0xff]
  %v263 = vld [vmem:[%s258 + $0x20] sm:$0xff]
  %v264 = vld [vmem:[%s258 + $0x28] sm:$0xff]
  %v265 = vld [vmem:[%s258 + $0x30] sm:$0xff]
  %v266 = vld [vmem:[%s258 + $0x38] sm:$0xff]
  %v267 = vld [vmem:[%s258 + $0x40] sm:$0xff]
  %v268 = vld [vmem:[%s258 + $0x48] sm:$0xff]
  %v269 = vld [vmem:[%s258 + $0x50] sm:$0xff]
  %v270 = vld [vmem:[%s258 + $0x58] sm:$0xff]
  %v271 = vld [vmem:[%s258 + $0x60] sm:$0xff]
  %v272 = vld [vmem:[%s258 + $0x68] sm:$0xff]
  %v273 = vld [vmem:[%s258 + $0x70] sm:$0xff]
  %v274 = vld [vmem:[%s258 + $0x78] sm:$0xff]
  %v275 = vmax.f32 %v242, %v259
  %v276 = vmax.f32 %v243, %v260
  %v277 = vmax.f32 %v244, %v261
  %v278 = vmax.f32 %v245, %v262
  %v279 = vmax.f32 %v246, %v263
  %v280 = vmax.f32 %v247, %v264
  %v281 = vmax.f32 %v248, %v265
  %v282 = vmax.f32 %v249, %v266
  %v283 = vmax.f32 %v250, %v267
  %v284 = vmax.f32 %v251, %v268
  %v285 = vmax.f32 %v252, %v269
  %v286 = vmax.f32 %v253, %v270
  %v287 = vmax.f32 %v254, %v271
  %v288 = vmax.f32 %v255, %v272
  %v289 = vmax.f32 %v256, %v273
  %v290 = vmax.f32 %v257, %v274
  %vm291 = vcmask 15360
  %v292 = vsel %vm291, %v275, 0.0
  %v293 = vsel %vm291, %v276, 0.0
  %v294 = vadd.f32 %v292, %v293
  %v295 = vsel %vm291, %v277, 0.0
  %v296 = vadd.f32 %v294, %v295
  %v297 = vsel %vm291, %v278, 0.0
  %v298 = vadd.f32 %v296, %v297
  %v299 = vsel %vm291, %v279, 0.0
  %v300 = vadd.f32 %v298, %v299
  %v301 = vsel %vm291, %v280, 0.0
  %v302 = vadd.f32 %v300, %v301
  %v303 = vsel %vm291, %v281, 0.0
  %v304 = vadd.f32 %v302, %v303
  %v305 = vsel %vm291, %v282, 0.0
  %v306 = vadd.f32 %v304, %v305
  %v307 = vsel %vm291, %v283, 0.0
  %v308 = vadd.f32 %v306, %v307
  %v309 = vsel %vm291, %v284, 0.0
  %v310 = vadd.f32 %v308, %v309
  %v311 = vsel %vm291, %v285, 0.0
  %v312 = vadd.f32 %v310, %v311
  %v313 = vsel %vm291, %v286, 0.0
  %v314 = vadd.f32 %v312, %v313
  %v315 = vsel %vm291, %v287, 0.0
  %v316 = vadd.f32 %v314, %v315
  %v317 = vsel %vm291, %v288, 0.0
  %v318 = vadd.f32 %v316, %v317
  %v319 = vsel %vm291, %v289, 0.0
  %v320 = vadd.f32 %v318, %v319
  %v321 = vsel %vm291, %v290, 0.0
  %v322 = vadd.f32 %v320, %v321
  %v323 = vrot.slane %v322, 4
  %v324 = vadd.f32 %v322, %v323
  %v325 = vrot.slane %v324, 2
  %v326 = vadd.f32 %v324, %v325
  %v327 = vrot.slane %v326, 1
  %v328 = vadd.f32 %v326, %v327
  %v329 = vrcp.pop 128.0
  %v330 = vmul.f32 128.0, %v329
  %v331 = vsub.f32 1.0, %v330
  %v332 = vmul.f32 %v329, %v331
  %v333 = vadd.f32 %v329, %v332
  %vm334 = vweird.f32 %v329
  %v335 = vsel %vm334, %v329, %v333
  %v336 = vmul.f32 %v328, %v335
  %v337 = vsub.f32 %v275, %v336
  %v338 = vsub.f32 %v276, %v336
  %v339 = vsub.f32 %v277, %v336
  %v340 = vsub.f32 %v278, %v336
  %v341 = vsub.f32 %v279, %v336
  %v342 = vsub.f32 %v280, %v336
  %v343 = vsub.f32 %v281, %v336
  %v344 = vsub.f32 %v282, %v336
  %v345 = vsub.f32 %v283, %v336
  %v346 = vsub.f32 %v284, %v336
  %v347 = vsub.f32 %v285, %v336
  %v348 = vsub.f32 %v286, %v336
  %v349 = vsub.f32 %v287, %v336
  %v350 = vsub.f32 %v288, %v336
  %v351 = vsub.f32 %v289, %v336
  %v352 = vsub.f32 %v290, %v336
  %v353 = vmul.f32 %v337, %v337
  %v354 = vmul.f32 %v338, %v338
  %v355 = vmul.f32 %v339, %v339
  %v356 = vmul.f32 %v340, %v340
  %v357 = vmul.f32 %v341, %v341
  %v358 = vmul.f32 %v342, %v342
  %v359 = vmul.f32 %v343, %v343
  %v360 = vmul.f32 %v344, %v344
  %v361 = vmul.f32 %v345, %v345
  %v362 = vmul.f32 %v346, %v346
  %v363 = vmul.f32 %v347, %v347
  %v364 = vmul.f32 %v348, %v348
  %v365 = vmul.f32 %v349, %v349
  %v366 = vmul.f32 %v350, %v350
  %v367 = vmul.f32 %v351, %v351
  %v368 = vmul.f32 %v352, %v352
  %v369 = vsel %vm291, %v353, 0.0
  %v370 = vsel %vm291, %v354, 0.0
  %v371 = vadd.f32 %v369, %v370
  %v372 = vsel %vm291, %v355, 0.0
  %v373 = vadd.f32 %v371, %v372
  %v374 = vsel %vm291, %v356, 0.0
  %v375 = vadd.f32 %v373, %v374
  %v376 = vsel %vm291, %v357, 0.0
  %v377 = vadd.f32 %v375, %v376
  %v378 = vsel %vm291, %v358, 0.0
  %v379 = vadd.f32 %v377, %v378
  %v380 = vsel %vm291, %v359, 0.0
  %v381 = vadd.f32 %v379, %v380
  %v382 = vsel %vm291, %v360, 0.0
  %v383 = vadd.f32 %v381, %v382
  %v384 = vsel %vm291, %v361, 0.0
  %v385 = vadd.f32 %v383, %v384
  %v386 = vsel %vm291, %v362, 0.0
  %v387 = vadd.f32 %v385, %v386
  %v388 = vsel %vm291, %v363, 0.0
  %v389 = vadd.f32 %v387, %v388
  %v390 = vsel %vm291, %v364, 0.0
  %v391 = vadd.f32 %v389, %v390
  %v392 = vsel %vm291, %v365, 0.0
  %v393 = vadd.f32 %v391, %v392
  %v394 = vsel %vm291, %v366, 0.0
  %v395 = vadd.f32 %v393, %v394
  %v396 = vsel %vm291, %v367, 0.0
  %v397 = vadd.f32 %v395, %v396
  %v398 = vsel %vm291, %v368, 0.0
  %v399 = vadd.f32 %v397, %v398
  %v400 = vrot.slane %v399, 4
  %v401 = vadd.f32 %v399, %v400
  %v402 = vrot.slane %v401, 2
  %v403 = vadd.f32 %v401, %v402
  %v404 = vrot.slane %v403, 1
  %v405 = vadd.f32 %v403, %v404
  %v406 = vmul.f32 %v405, %v335
  %v407 = vadd.f32 %v406, 1e-05
  %v408 = vrsqrt.pop %v407
  %v409 = vmul.f32 %v408, %v407
  %v410 = vmul.f32 %v409, %v408
  %v411 = vmul.f32 0.5, %v410
  %v412 = vsub.f32 1.5, %v411
  %v413 = vmul.f32 %v408, %v412
  %vm414 = vweird.f32 %v407
  %vm415 = vweird.f32 %v408
  %vm416 = vmor %vm414, %vm415
  %v417 = vsel %vm416, %v408, %v413
  %v418 = vmul.f32 %v337, %v417
  %v419 = vmul.f32 %v338, %v417
  %v420 = vmul.f32 %v339, %v417
  %v421 = vmul.f32 %v340, %v417
  %v422 = vmul.f32 %v341, %v417
  %v423 = vmul.f32 %v342, %v417
  %v424 = vmul.f32 %v343, %v417
  %v425 = vmul.f32 %v344, %v417
  %v426 = vmul.f32 %v345, %v417
  %v427 = vmul.f32 %v346, %v417
  %v428 = vmul.f32 %v347, %v417
  %v429 = vmul.f32 %v348, %v417
  %v430 = vmul.f32 %v349, %v417
  %v431 = vmul.f32 %v350, %v417
  %v432 = vmul.f32 %v351, %v417
  %v433 = vmul.f32 %v352, %v417
  %v434 = vld [vmem:[%s0] sm:$0x1]
  %v436 = vperm.slane %v434, 0
  %v438 = vmul.f32 %v418, %v436
  %v439 = vmul.f32 %v419, %v436
  %v440 = vmul.f32 %v420, %v436
  %v441 = vmul.f32 %v421, %v436
  %v442 = vmul.f32 %v422, %v436
  %v443 = vmul.f32 %v423, %v436
  %v444 = vmul.f32 %v424, %v436
  %v445 = vmul.f32 %v425, %v436
  %v446 = vmul.f32 %v426, %v436
  %v447 = vmul.f32 %v427, %v436
  %v448 = vmul.f32 %v428, %v436
  %v449 = vmul.f32 %v429, %v436
  %v450 = vmul.f32 %v430, %v436
  %v451 = vmul.f32 %v431, %v436
  %v452 = vmul.f32 %v432, %v436
  %v453 = vmul.f32 %v433, %v436
  %454 = vst.msk [vmem:[%s2] sm:$0xff] %vm291, %v438
  %455 = vst.msk [vmem:[%s2 + $0x8] sm:$0xff] %vm291, %v439
  %456 = vst.msk [vmem:[%s2 + $0x10] sm:$0xff] %vm291, %v440
  %457 = vst.msk [vmem:[%s2 + $0x18] sm:$0xff] %vm291, %v441
  %458 = vst.msk [vmem:[%s2 + $0x20] sm:$0xff] %vm291, %v442
  %459 = vst.msk [vmem:[%s2 + $0x28] sm:$0xff] %vm291, %v443
  %460 = vst.msk [vmem:[%s2 + $0x30] sm:$0xff] %vm291, %v444
  %461 = vst.msk [vmem:[%s2 + $0x38] sm:$0xff] %vm291, %v445
  %462 = vst.msk [vmem:[%s2 + $0x40] sm:$0xff] %vm291, %v446
  %463 = vst.msk [vmem:[%s2 + $0x48] sm:$0xff] %vm291, %v447
  %464 = vst.msk [vmem:[%s2 + $0x50] sm:$0xff] %vm291, %v448
  %465 = vst.msk [vmem:[%s2 + $0x58] sm:$0xff] %vm291, %v449
  %466 = vst.msk [vmem:[%s2 + $0x60] sm:$0xff] %vm291, %v450
  %467 = vst.msk [vmem:[%s2 + $0x68] sm:$0xff] %vm291, %v451
  %468 = vst.msk [vmem:[%s2 + $0x70] sm:$0xff] %vm291, %v452
  %469 = vst.msk [vmem:[%s2 + $0x78] sm:$0xff] %vm291, %v453
  // Predicated region
  $region10: #{forward.79} parent=0 // pred_check
    _
  $region11: #{forward.79} parent=0 // pred_check_branch
    %471 = sbr.rel (0) target = $region13
  $region12: #{forward.79} parent=0 // pred_region
    _
  $region13: #{forward.79} parent=0 // pred_fallthru
    _
  // Predicated region
  $region14: #{forward.79} parent=0 // pred_check
    _
  $region15: #{forward.79} parent=0 // pred_check_branch
    %473 = sbr.rel (0) target = $region17
  $region16: #{forward.79} parent=0 // pred_region
    _
  $region17: #{forward.79} parent=0 // pred_fallthru
    _

// kernel: forward.78
$region0: #{forward.78}
  #allocation0 [shape = 'u32[]', space=smem, size = 0x4, offset = 0x4, fixed_abs, tag = 'smem constant byte address 0x4 - core index']
  #allocation1 [shape = 'u32[72,128]{1,0:T(1,128)}', space=vmem, size = 0x9000, scoped, tag = 'internal scratch']
  %s0 = inlined_call_operand.vmem [shape: f32[1,2], index: 0, kind: input, shape index: {}]
  %s1 = inlined_call_operand.vmem [shape: f32[9,128,2], index: 1, kind: input, shape index: {}]
  %s2 = inlined_call_operand.vmem [shape: f32[128,2], index: 2, kind: input, shape index: {}]
  %s3 = inlined_call_operand.vmem [shape: f32[128,2], index: 3, kind: output, shape index: {}]
  %s4 = sld [smem:[#allocation0]]
  $region22: #{forward.78} parent=0
    _
  %s6 = ssub.s32 1, %s4
  %s7 = scalar_select 0, %s6, %s4
  // Predicated region
  $region2: #{forward.78} parent=0 // pred_check
    _
  $region3: #{forward.78} parent=0 // pred_check_branch
    %9 = sbr.rel (0) target = $region5
  $region4: #{forward.78} parent=0 // pred_region
    _
  $region5: #{forward.78} parent=0 // pred_fallthru
    _
  // Predicated region
  $region6: #{forward.78} parent=0 // pred_check
    _
  $region7: #{forward.78} parent=0 // pred_check_branch
    %11 = sbr.rel (0) target = $region9
  $region8: #{forward.78} parent=0 // pred_region
    _
  $region9: #{forward.78} parent=0 // pred_fallthru
    _
  // Predicated region
  $region10: #{forward.78} parent=0 // pred_check
    _
  $region11: #{forward.78} parent=0 // pred_check_branch
    %13 = sbr.rel (0) target = $region13
  $region12: #{forward.78} parent=0 // pred_region
    _
  $region13: #{forward.78} parent=0 // pred_fallthru
    _
  %v14 = vld [vmem:[%s1] sm:$0xff]
  %v15 = vld [vmem:[%s1 + $0x8] sm:$0xff]
  %v16 = vld [vmem:[%s1 + $0x10] sm:$0xff]
  %v17 = vld [vmem:[%s1 + $0x18] sm:$0xff]
  %v18 = vld [vmem:[%s1 + $0x20] sm:$0xff]
  %v19 = vld [vmem:[%s1 + $0x28] sm:$0xff]
  %v20 = vld [vmem:[%s1 + $0x30] sm:$0xff]
  %v21 = vld [vmem:[%s1 + $0x38] sm:$0xff]
  %v22 = vld [vmem:[%s1 + $0x40] sm:$0xff]
  %v23 = vld [vmem:[%s1 + $0x48] sm:$0xff]
  %v24 = vld [vmem:[%s1 + $0x50] sm:$0xff]
  %v25 = vld [vmem:[%s1 + $0x58] sm:$0xff]
  %v26 = vld [vmem:[%s1 + $0x60] sm:$0xff]
  %v27 = vld [vmem:[%s1 + $0x68] sm:$0xff]
  %v28 = vld [vmem:[%s1 + $0x70] sm:$0xff]
  %v29 = vld [vmem:[%s1 + $0x78] sm:$0xff]
  %s30 = scalar_lea.vmem %s1, 128
  %v31 = vld [vmem:[%s30] sm:$0xff]
  %v32 = vld [vmem:[%s30 + $0x8] sm:$0xff]
  %v33 = vld [vmem:[%s30 + $0x10] sm:$0xff]
  %v34 = vld [vmem:[%s30 + $0x18] sm:$0xff]
  %v35 = vld [vmem:[%s30 + $0x20] sm:$0xff]
  %v36 = vld [vmem:[%s30 + $0x28] sm:$0xff]
  %v37 = vld [vmem:[%s30 + $0x30] sm:$0xff]
  %v38 = vld [vmem:[%s30 + $0x38] sm:$0xff]
  %v39 = vld [vmem:[%s30 + $0x40] sm:$0xff]
  %v40 = vld [vmem:[%s30 + $0x48] sm:$0xff]
  %v41 = vld [vmem:[%s30 + $0x50] sm:$0xff]
  %v42 = vld [vmem:[%s30 + $0x58] sm:$0xff]
  %v43 = vld [vmem:[%s30 + $0x60] sm:$0xff]
  %v44 = vld [vmem:[%s30 + $0x68] sm:$0xff]
  %v45 = vld [vmem:[%s30 + $0x70] sm:$0xff]
  %v46 = vld [vmem:[%s30 + $0x78] sm:$0xff]
  %v47 = vadd.f32 %v14, %v31
  %v48 = vadd.f32 %v15, %v32
  %v49 = vadd.f32 %v16, %v33
  %v50 = vadd.f32 %v17, %v34
  %v51 = vadd.f32 %v18, %v35
  %v52 = vadd.f32 %v19, %v36
  %v53 = vadd.f32 %v20, %v37
  %v54 = vadd.f32 %v21, %v38
  %v55 = vadd.f32 %v22, %v39
  %v56 = vadd.f32 %v23, %v40
  %v57 = vadd.f32 %v24, %v41
  %v58 = vadd.f32 %v25, %v42
  %v59 = vadd.f32 %v26, %v43
  %v60 = vadd.f32 %v27, %v44
  %v61 = vadd.f32 %v28, %v45
  %v62 = vadd.f32 %v29, %v46
  %s63 = scalar_lea.vmem %s1, 256
  %v64 = vld [vmem:[%s63] sm:$0xff]
  %v65 = vld [vmem:[%s63 + $0x8] sm:$0xff]
  %v66 = vld [vmem:[%s63 + $0x10] sm:$0xff]
  %v67 = vld [vmem:[%s63 + $0x18] sm:$0xff]
  %v68 = vld [vmem:[%s63 + $0x20] sm:$0xff]
  %v69 = vld [vmem:[%s63 + $0x28] sm:$0xff]
  %v70 = vld [vmem:[%s63 + $0x30] sm:$0xff]
  %v71 = vld [vmem:[%s63 + $0x38] sm:$0xff]
  %v72 = vld [vmem:[%s63 + $0x40] sm:$0xff]
  %v73 = vld [vmem:[%s63 + $0x48] sm:$0xff]
  %v74 = vld [vmem:[%s63 + $0x50] sm:$0xff]
  %v75 = vld [vmem:[%s63 + $0x58] sm:$0xff]
  %v76 = vld [vmem:[%s63 + $0x60] sm:$0xff]
  %v77 = vld [vmem:[%s63 + $0x68] sm:$0xff]
  %v78 = vld [vmem:[%s63 + $0x70] sm:$0xff]
  %v79 = vld [vmem:[%s63 + $0x78] sm:$0xff]
  %v80 = vadd.f32 %v47, %v64
  %v81 = vadd.f32 %v48, %v65
  %v82 = vadd.f32 %v49, %v66
  %v83 = vadd.f32 %v50, %v67
  %v84 = vadd.f32 %v51, %v68
  %v85 = vadd.f32 %v52, %v69
  %v86 = vadd.f32 %v53, %v70
  %v87 = vadd.f32 %v54, %v71
  %v88 = vadd.f32 %v55, %v72
  %v89 = vadd.f32 %v56, %v73
  %v90 = vadd.f32 %v57, %v74
  %v91 = vadd.f32 %v58, %v75
  %v92 = vadd.f32 %v59, %v76
  %v93 = vadd.f32 %v60, %v77
  %v94 = vadd.f32 %v61, %v78
  %v95 = vadd.f32 %v62, %v79
  %s96 = scalar_lea.vmem %s1, 384
  %v97 = vld [vmem:[%s96] sm:$0xff]
  %v98 = vld [vmem:[%s96 + $0x8] sm:$0xff]
  %v99 = vld [vmem:[%s96 + $0x10] sm:$0xff]
  %v100 = vld [vmem:[%s96 + $0x18] sm:$0xff]
  %v101 = vld [vmem:[%s96 + $0x20] sm:$0xff]
  %v102 = vld [vmem:[%s96 + $0x28] sm:$0xff]
  %v103 = vld [vmem:[%s96 + $0x30] sm:$0xff]
  %v104 = vld [vmem:[%s96 + $0x38] sm:$0xff]
  %v105 = vld [vmem:[%s96 + $0x40] sm:$0xff]
  %v106 = vld [vmem:[%s96 + $0x48] sm:$0xff]
  %v107 = vld [vmem:[%s96 + $0x50] sm:$0xff]
  %v108 = vld [vmem:[%s96 + $0x58] sm:$0xff]
  %v109 = vld [vmem:[%s96 + $0x60] sm:$0xff]
  %v110 = vld [vmem:[%s96 + $0x68] sm:$0xff]
  %v111 = vld [vmem:[%s96 + $0x70] sm:$0xff]
  %v112 = vld [vmem:[%s96 + $0x78] sm:$0xff]
  %v113 = vadd.f32 %v80, %v97
  %v114 = vadd.f32 %v81, %v98
  %v115 = vadd.f32 %v82, %v99
  %v116 = vadd.f32 %v83, %v100
  %v117 = vadd.f32 %v84, %v101
  %v118 = vadd.f32 %v85, %v102
  %v119 = vadd.f32 %v86, %v103
  %v120 = vadd.f32 %v87, %v104
  %v121 = vadd.f32 %v88, %v105
  %v122 = vadd.f32 %v89, %v106
  %v123 = vadd.f32 %v90, %v107
  %v124 = vadd.f32 %v91, %v108
  %v125 = vadd.f32 %v92, %v109
  %v126 = vadd.f32 %v93, %v110
  %v127 = vadd.f32 %v94, %v111
  %v128 = vadd.f32 %v95, %v112
  %s129 = scalar_lea.vmem %s1, 512
  %v130 = vld [vmem:[%s129] sm:$0xff]
  %v131 = vld [vmem:[%s129 + $0x8] sm:$0xff]
  %v132 = vld [vmem:[%s129 + $0x10] sm:$0xff]
  %v133 = vld [vmem:[%s129 + $0x18] sm:$0xff]
  %v134 = vld [vmem:[%s129 + $0x20] sm:$0xff]
  %v135 = vld [vmem:[%s129 + $0x28] sm:$0xff]
  %v136 = vld [vmem:[%s129 + $0x30] sm:$0xff]
  %v137 = vld [vmem:[%s129 + $0x38] sm:$0xff]
  %v138 = vld [vmem:[%s129 + $0x40] sm:$0xff]
  %v139 = vld [vmem:[%s129 + $0x48] sm:$0xff]
  %v140 = vld [vmem:[%s129 + $0x50] sm:$0xff]
  %v141 = vld [vmem:[%s129 + $0x58] sm:$0xff]
  %v142 = vld [vmem:[%s129 + $0x60] sm:$0xff]
  %v143 = vld [vmem:[%s129 + $0x68] sm:$0xff]
  %v144 = vld [vmem:[%s129 + $0x70] sm:$0xff]
  %v145 = vld [vmem:[%s129 + $0x78] sm:$0xff]
  %v146 = vadd.f32 %v113, %v130
  %v147 = vadd.f32 %v114, %v131
  %v148 = vadd.f32 %v115, %v132
  %v149 = vadd.f32 %v116, %v133
  %v150 = vadd.f32 %v117, %v134
  %v151 = vadd.f32 %v118, %v135
  %v152 = vadd.f32 %v119, %v136
  %v153 = vadd.f32 %v120, %v137
  %v154 = vadd.f32 %v121, %v138
  %v155 = vadd.f32 %v122, %v139
  %v156 = vadd.f32 %v123, %v140
  %v157 = vadd.f32 %v124, %v141
  %v158 = vadd.f32 %v125, %v142
  %v159 = vadd.f32 %v126, %v143
  %v160 = vadd.f32 %v127, %v144
  %v161 = vadd.f32 %v128, %v145
  %s162 = scalar_lea.vmem %s1, 640
  %v163 = vld [vmem:[%s162] sm:$0xff]
  %v164 = vld [vmem:[%s162 + $0x8] sm:$0xff]
  %v165 = vld [vmem:[%s162 + $0x10] sm:$0xff]
  %v166 = vld [vmem:[%s162 + $0x18] sm:$0xff]
  %v167 = vld [vmem:[%s162 + $0x20] sm:$0xff]
  %v168 = vld [vmem:[%s162 + $0x28] sm:$0xff]
  %v169 = vld [vmem:[%s162 + $0x30] sm:$0xff]
  %v170 = vld [vmem:[%s162 + $0x38] sm:$0xff]
  %v171 = vld [vmem:[%s162 + $0x40] sm:$0xff]
  %v172 = vld [vmem:[%s162 + $0x48] sm:$0xff]
  %v173 = vld [vmem:[%s162 + $0x50] sm:$0xff]
  %v174 = vld [vmem:[%s162 + $0x58] sm:$0xff]
  %v175 = vld [vmem:[%s162 + $0x60] sm:$0xff]
  %v176 = vld [vmem:[%s162 + $0x68] sm:$0xff]
  %v177 = vld [vmem:[%s162 + $0x70] sm:$0xff]
  %v178 = vld [vmem:[%s162 + $0x78] sm:$0xff]
  %v179 = vadd.f32 %v146, %v163
  %v180 = vadd.f32 %v147, %v164
  %v181 = vadd.f32 %v148, %v165
  %v182 = vadd.f32 %v149, %v166
  %v183 = vadd.f32 %v150, %v167
  %v184 = vadd.f32 %v151, %v168
  %v185 = vadd.f32 %v152, %v169
  %v186 = vadd.f32 %v153, %v170
  %v187 = vadd.f32 %v154, %v171
  %v188 = vadd.f32 %v155, %v172
  %v189 = vadd.f32 %v156, %v173
  %v190 = vadd.f32 %v157, %v174
  %v191 = vadd.f32 %v158, %v175
  %v192 = vadd.f32 %v159, %v176
  %v193 = vadd.f32 %v160, %v177
  %v194 = vadd.f32 %v161, %v178
  %s195 = scalar_lea.vmem %s1, 768
  %v196 = vld [vmem:[%s195] sm:$0xff]
  %v197 = vld [vmem:[%s195 + $0x8] sm:$0xff]
  %v198 = vld [vmem:[%s195 + $0x10] sm:$0xff]
  %v199 = vld [vmem:[%s195 + $0x18] sm:$0xff]
  %v200 = vld [vmem:[%s195 + $0x20] sm:$0xff]
  %v201 = vld [vmem:[%s195 + $0x28] sm:$0xff]
  %v202 = vld [vmem:[%s195 + $0x30] sm:$0xff]
  %v203 = vld [vmem:[%s195 + $0x38] sm:$0xff]
  %v204 = vld [vmem:[%s195 + $0x40] sm:$0xff]
  %v205 = vld [vmem:[%s195 + $0x48] sm:$0xff]
  %v206 = vld [vmem:[%s195 + $0x50] sm:$0xff]
  %v207 = vld [vmem:[%s195 + $0x58] sm:$0xff]
  %v208 = vld [vmem:[%s195 + $0x60] sm:$0xff]
  %v209 = vld [vmem:[%s195 + $0x68] sm:$0xff]
  %v210 = vld [vmem:[%s195 + $0x70] sm:$0xff]
  %v211 = vld [vmem:[%s195 + $0x78] sm:$0xff]
  %v212 = vadd.f32 %v179, %v196
  %v213 = vadd.f32 %v180, %v197
  %v214 = vadd.f32 %v181, %v198
  %v215 = vadd.f32 %v182, %v199
  %v216 = vadd.f32 %v183, %v200
  %v217 = vadd.f32 %v184, %v201
  %v218 = vadd.f32 %v185, %v202
  %v219 = vadd.f32 %v186, %v203
  %v220 = vadd.f32 %v187, %v204
  %v221 = vadd.f32 %v188, %v205
  %v222 = vadd.f32 %v189, %v206
  %v223 = vadd.f32 %v190, %v207
  %v224 = vadd.f32 %v191, %v208
  %v225 = vadd.f32 %v192, %v209
  %v226 = vadd.f32 %v193, %v210
  %v227 = vadd.f32 %v194, %v211
  %s228 = scalar_lea.vmem %s1, 896
  %v229 = vld [vmem:[%s228] sm:$0xff]
  %v230 = vld [vmem:[%s228 + $0x8] sm:$0xff]
  %v231 = vld [vmem:[%s228 + $0x10] sm:$0xff]
  %v232 = vld [vmem:[%s228 + $0x18] sm:$0xff]
  %v233 = vld [vmem:[%s228 + $0x20] sm:$0xff]
  %v234 = vld [vmem:[%s228 + $0x28] sm:$0xff]
  %v235 = vld [vmem:[%s228 + $0x30] sm:$0xff]
  %v236 = vld [vmem:[%s228 + $0x38] sm:$0xff]
  %v237 = vld [vmem:[%s228 + $0x40] sm:$0xff]
  %v238 = vld [vmem:[%s228 + $0x48] sm:$0xff]
  %v239 = vld [vmem:[%s228 + $0x50] sm:$0xff]
  %v240 = vld [vmem:[%s228 + $0x58] sm:$0xff]
  %v241 = vld [vmem:[%s228 + $0x60] sm:$0xff]
  %v242 = vld [vmem:[%s228 + $0x68] sm:$0xff]
  %v243 = vld [vmem:[%s228 + $0x70] sm:$0xff]
  %v244 = vld [vmem:[%s228 + $0x78] sm:$0xff]
  %v245 = vadd.f32 %v212, %v229
  %v246 = vadd.f32 %v213, %v230
  %v247 = vadd.f32 %v214, %v231
  %v248 = vadd.f32 %v215, %v232
  %v249 = vadd.f32 %v216, %v233
  %v250 = vadd.f32 %v217, %v234
  %v251 = vadd.f32 %v218, %v235
  %v252 = vadd.f32 %v219, %v236
  %v253 = vadd.f32 %v220, %v237
  %v254 = vadd.f32 %v221, %v238
  %v255 = vadd.f32 %v222, %v239
  %v256 = vadd.f32 %v223, %v240
  %v257 = vadd.f32 %v224, %v241
  %v258 = vadd.f32 %v225, %v242
  %v259 = vadd.f32 %v226, %v243
  %v260 = vadd.f32 %v227, %v244
  %s261 = scalar_lea.vmem %s1, 1024
  %v262 = vld [vmem:[%s261] sm:$0xff]
  %v263 = vld [vmem:[%s261 + $0x8] sm:$0xff]
  %v264 = vld [vmem:[%s261 + $0x10] sm:$0xff]
  %v265 = vld [vmem:[%s261 + $0x18] sm:$0xff]
  %v266 = vld [vmem:[%s261 + $0x20] sm:$0xff]
  %v267 = vld [vmem:[%s261 + $0x28] sm:$0xff]
  %v268 = vld [vmem:[%s261 + $0x30] sm:$0xff]
  %v269 = vld [vmem:[%s261 + $0x38] sm:$0xff]
  %v270 = vld [vmem:[%s261 + $0x40] sm:$0xff]
  %v271 = vld [vmem:[%s261 + $0x48] sm:$0xff]
  %v272 = vld [vmem:[%s261 + $0x50] sm:$0xff]
  %v273 = vld [vmem:[%s261 + $0x58] sm:$0xff]
  %v274 = vld [vmem:[%s261 + $0x60] sm:$0xff]
  %v275 = vld [vmem:[%s261 + $0x68] sm:$0xff]
  %v276 = vld [vmem:[%s261 + $0x70] sm:$0xff]
  %v277 = vld [vmem:[%s261 + $0x78] sm:$0xff]
  %v278 = vadd.f32 %v245, %v262
  %v279 = vadd.f32 %v246, %v263
  %v280 = vadd.f32 %v247, %v264
  %v281 = vadd.f32 %v248, %v265
  %v282 = vadd.f32 %v249, %v266
  %v283 = vadd.f32 %v250, %v267
  %v284 = vadd.f32 %v251, %v268
  %v285 = vadd.f32 %v252, %v269
  %v286 = vadd.f32 %v253, %v270
  %v287 = vadd.f32 %v254, %v271
  %v288 = vadd.f32 %v255, %v272
  %v289 = vadd.f32 %v256, %v273
  %v290 = vadd.f32 %v257, %v274
  %v291 = vadd.f32 %v258, %v275
  %v292 = vadd.f32 %v259, %v276
  %v293 = vadd.f32 %v260, %v277
  %v294 = vld [vmem:[%s2] sm:$0xff]
  %v295 = vld [vmem:[%s2 + $0x8] sm:$0xff]
  %v296 = vld [vmem:[%s2 + $0x10] sm:$0xff]
  %v297 = vld [vmem:[%s2 + $0x18] sm:$0xff]
  %v298 = vld [vmem:[%s2 + $0x20] sm:$0xff]
  %v299 = vld [vmem:[%s2 + $0x28] sm:$0xff]
  %v300 = vld [vmem:[%s2 + $0x30] sm:$0xff]
  %v301 = vld [vmem:[%s2 + $0x38] sm:$0xff]
  %v302 = vld [vmem:[%s2 + $0x40] sm:$0xff]
  %v303 = vld [vmem:[%s2 + $0x48] sm:$0xff]
  %v304 = vld [vmem:[%s2 + $0x50] sm:$0xff]
  %v305 = vld [vmem:[%s2 + $0x58] sm:$0xff]
  %v306 = vld [vmem:[%s2 + $0x60] sm:$0xff]
  %v307 = vld [vmem:[%s2 + $0x68] sm:$0xff]
  %v308 = vld [vmem:[%s2 + $0x70] sm:$0xff]
  %v309 = vld [vmem:[%s2 + $0x78] sm:$0xff]
  %v310 = vmul.f32 %v278, %v294
  %v311 = vmul.f32 %v279, %v295
  %v312 = vmul.f32 %v280, %v296
  %v313 = vmul.f32 %v281, %v297
  %v314 = vmul.f32 %v282, %v298
  %v315 = vmul.f32 %v283, %v299
  %v316 = vmul.f32 %v284, %v300
  %v317 = vmul.f32 %v285, %v301
  %v318 = vmul.f32 %v286, %v302
  %v319 = vmul.f32 %v287, %v303
  %v320 = vmul.f32 %v288, %v304
  %v321 = vmul.f32 %v289, %v305
  %v322 = vmul.f32 %v290, %v306
  %v323 = vmul.f32 %v291, %v307
  %v324 = vmul.f32 %v292, %v308
  %v325 = vmul.f32 %v293, %v309
  %vm326 = vcmask 15360
  %v327 = vsel %vm326, %v310, 0.0
  %v328 = vsel %vm326, %v311, 0.0
  %v329 = vadd.f32 %v327, %v328
  %v330 = vsel %vm326, %v312, 0.0
  %v331 = vadd.f32 %v329, %v330
  %v332 = vsel %vm326, %v313, 0.0
  %v333 = vadd.f32 %v331, %v332
  %v334 = vsel %vm326, %v314, 0.0
  %v335 = vadd.f32 %v333, %v334
  %v336 = vsel %vm326, %v315, 0.0
  %v337 = vadd.f32 %v335, %v336
  %v338 = vsel %vm326, %v316, 0.0
  %v339 = vadd.f32 %v337, %v338
  %v340 = vsel %vm326, %v317, 0.0
  %v341 = vadd.f32 %v339, %v340
  %v342 = vsel %vm326, %v318, 0.0
  %v343 = vadd.f32 %v341, %v342
  %v344 = vsel %vm326, %v319, 0.0
  %v345 = vadd.f32 %v343, %v344
  %v346 = vsel %vm326, %v320, 0.0
  %v347 = vadd.f32 %v345, %v346
  %v348 = vsel %vm326, %v321, 0.0
  %v349 = vadd.f32 %v347, %v348
  %v350 = vsel %vm326, %v322, 0.0
  %v351 = vadd.f32 %v349, %v350
  %v352 = vsel %vm326, %v323, 0.0
  %v353 = vadd.f32 %v351, %v352
  %v354 = vsel %vm326, %v324, 0.0
  %v355 = vadd.f32 %v353, %v354
  %v356 = vsel %vm326, %v325, 0.0
  %v357 = vadd.f32 %v355, %v356
  %v358 = vrot.slane %v357, 4
  %v359 = vadd.f32 %v357, %v358
  %v360 = vrot.slane %v359, 2
  %v361 = vadd.f32 %v359, %v360
  %v362 = vrot.slane %v361, 1
  %v363 = vadd.f32 %v361, %v362
  %v364 = vrcp.pop 128.0
  %v365 = vmul.f32 128.0, %v364
  %v366 = vsub.f32 1.0, %v365
  %v367 = vmul.f32 %v364, %v366
  %v368 = vadd.f32 %v364, %v367
  %vm369 = vweird.f32 %v364
  %v370 = vsel %vm369, %v364, %v368
  %v371 = vmul.f32 %v363, %v370
  %v372 = vsub.f32 %v310, %v371
  %v373 = vsub.f32 %v311, %v371
  %v374 = vsub.f32 %v312, %v371
  %v375 = vsub.f32 %v313, %v371
  %v376 = vsub.f32 %v314, %v371
  %v377 = vsub.f32 %v315, %v371
  %v378 = vsub.f32 %v316, %v371
  %v379 = vsub.f32 %v317, %v371
  %v380 = vsub.f32 %v318, %v371
  %v381 = vsub.f32 %v319, %v371
  %v382 = vsub.f32 %v320, %v371
  %v383 = vsub.f32 %v321, %v371
  %v384 = vsub.f32 %v322, %v371
  %v385 = vsub.f32 %v323, %v371
  %v386 = vsub.f32 %v324, %v371
  %v387 = vsub.f32 %v325, %v371
  %v388 = vmul.f32 %v372, %v372
  %v389 = vmul.f32 %v373, %v373
  %v390 = vmul.f32 %v374, %v374
  %v391 = vmul.f32 %v375, %v375
  %v392 = vmul.f32 %v376, %v376
  %v393 = vmul.f32 %v377, %v377
  %v394 = vmul.f32 %v378, %v378
  %v395 = vmul.f32 %v379, %v379
  %v396 = vmul.f32 %v380, %v380
  %v397 = vmul.f32 %v381, %v381
  %v398 = vmul.f32 %v382, %v382
  %v399 = vmul.f32 %v383, %v383
  %v400 = vmul.f32 %v384, %v384
  %v401 = vmul.f32 %v385, %v385
  %v402 = vmul.f32 %v386, %v386
  %v403 = vmul.f32 %v387, %v387
  %v404 = vsel %vm326, %v388, 0.0
  %v405 = vsel %vm326, %v389, 0.0
  %v406 = vadd.f32 %v404, %v405
  %v407 = vsel %vm326, %v390, 0.0
  %v408 = vadd.f32 %v406, %v407
  %v409 = vsel %vm326, %v391, 0.0
  %v410 = vadd.f32 %v408, %v409
  %v411 = vsel %vm326, %v392, 0.0
  %v412 = vadd.f32 %v410, %v411
  %v413 = vsel %vm326, %v393, 0.0
  %v414 = vadd.f32 %v412, %v413
  %v415 = vsel %vm326, %v394, 0.0
  %v416 = vadd.f32 %v414, %v415
  %v417 = vsel %vm326, %v395, 0.0
  %v418 = vadd.f32 %v416, %v417
  %v419 = vsel %vm326, %v396, 0.0
  %v420 = vadd.f32 %v418, %v419
  %v421 = vsel %vm326, %v397, 0.0
  %v422 = vadd.f32 %v420, %v421
  %v423 = vsel %vm326, %v398, 0.0
  %v424 = vadd.f32 %v422, %v423
  %v425 = vsel %vm326, %v399, 0.0
  %v426 = vadd.f32 %v424, %v425
  %v427 = vsel %vm326, %v400, 0.0
  %v428 = vadd.f32 %v426, %v427
  %v429 = vsel %vm326, %v401, 0.0
  %v430 = vadd.f32 %v428, %v429
  %v431 = vsel %vm326, %v402, 0.0
  %v432 = vadd.f32 %v430, %v431
  %v433 = vsel %vm326, %v403, 0.0
  %v434 = vadd.f32 %v432, %v433
  %v435 = vrot.slane %v434, 4
  %v436 = vadd.f32 %v434, %v435
  %v437 = vrot.slane %v436, 2
  %v438 = vadd.f32 %v436, %v437
  %v439 = vrot.slane %v438, 1
  %v440 = vadd.f32 %v438, %v439
  %v441 = vmul.f32 %v440, %v370
  %v442 = vadd.f32 %v441, 1e-05
  %v443 = vrsqrt.pop %v442
  %v444 = vmul.f32 %v443, %v442
  %v445 = vmul.f32 %v444, %v443
  %v446 = vmul.f32 0.5, %v445
  %v447 = vsub.f32 1.5, %v446
  %v448 = vmul.f32 %v443, %v447
  %vm449 = vweird.f32 %v442
  %vm450 = vweird.f32 %v443
  %vm451 = vmor %vm449, %vm450
  %v452 = vsel %vm451, %v443, %v448
  %v453 = vmul.f32 %v372, %v452
  %v454 = vmul.f32 %v373, %v452
  %v455 = vmul.f32 %v374, %v452
  %v456 = vmul.f32 %v375, %v452
  %v457 = vmul.f32 %v376, %v452
  %v458 = vmul.f32 %v377, %v452
  %v459 = vmul.f32 %v378, %v452
  %v460 = vmul.f32 %v379, %v452
  %v461 = vmul.f32 %v380, %v452
  %v462 = vmul.f32 %v381, %v452
  %v463 = vmul.f32 %v382, %v452
  %v464 = vmul.f32 %v383, %v452
  %v465 = vmul.f32 %v384, %v452
  %v466 = vmul.f32 %v385, %v452
  %v467 = vmul.f32 %v386, %v452
  %v468 = vmul.f32 %v387, %v452
  %v469 = vld [vmem:[%s0] sm:$0x1]
  %v471 = vperm.slane %v469, 0
  %v473 = vmul.f32 %v453, %v471
  %v474 = vmul.f32 %v454, %v471
  %v475 = vmul.f32 %v455, %v471
  %v476 = vmul.f32 %v456, %v471
  %v477 = vmul.f32 %v457, %v471
  %v478 = vmul.f32 %v458, %v471
  %v479 = vmul.f32 %v459, %v471
  %v480 = vmul.f32 %v460, %v471
  %v481 = vmul.f32 %v461, %v471
  %v482 = vmul.f32 %v462, %v471
  %v483 = vmul.f32 %v463, %v471
  %v484 = vmul.f32 %v464, %v471
  %v485 = vmul.f32 %v465, %v471
  %v486 = vmul.f32 %v466, %v471
  %v487 = vmul.f32 %v467, %v471
  %v488 = vmul.f32 %v468, %v471
  %489 = vst.msk [vmem:[%s3] sm:$0xff] %vm326, %v473
  %490 = vst.msk [vmem:[%s3 + $0x8] sm:$0xff] %vm326, %v474
  %491 = vst.msk [vmem:[%s3 + $0x10] sm:$0xff] %vm326, %v475
  %492 = vst.msk [vmem:[%s3 + $0x18] sm:$0xff] %vm326, %v476
  %493 = vst.msk [vmem:[%s3 + $0x20] sm:$0xff] %vm326, %v477
  %494 = vst.msk [vmem:[%s3 + $0x28] sm:$0xff] %vm326, %v478
  %495 = vst.msk [vmem:[%s3 + $0x30] sm:$0xff] %vm326, %v479
  %496 = vst.msk [vmem:[%s3 + $0x38] sm:$0xff] %vm326, %v480
  %497 = vst.msk [vmem:[%s3 + $0x40] sm:$0xff] %vm326, %v481
  %498 = vst.msk [vmem:[%s3 + $0x48] sm:$0xff] %vm326, %v482
  %499 = vst.msk [vmem:[%s3 + $0x50] sm:$0xff] %vm326, %v483
  %500 = vst.msk [vmem:[%s3 + $0x58] sm:$0xff] %vm326, %v484
  %501 = vst.msk [vmem:[%s3 + $0x60] sm:$0xff] %vm326, %v485
  %502 = vst.msk [vmem:[%s3 + $0x68] sm:$0xff] %vm326, %v486
  %503 = vst.msk [vmem:[%s3 + $0x70] sm:$0xff] %vm326, %v487
  %504 = vst.msk [vmem:[%s3 + $0x78] sm:$0xff] %vm326, %v488
  // Predicated region
  $region14: #{forward.78} parent=0 // pred_check
    _
  $region15: #{forward.78} parent=0 // pred_check_branch
    %506 = sbr.rel (0) target = $region17
  $region16: #{forward.78} parent=0 // pred_region
    _
  $region17: #{forward.78} parent=0 // pred_fallthru
    _
  // Predicated region
  $region18: #{forward.78} parent=0 // pred_check
    _
  $region19: #{forward.78} parent=0 // pred_check_branch
    %508 = sbr.rel (0) target = $region21
  $region20: #{forward.78} parent=0 // pred_region
    _
  $region21: #{forward.78} parent=0 // pred_fallthru
    _

// kernel: forward.110
$region0: #{forward.110}
  #allocation0 [shape = 'u32[]', space=smem, size = 0x4, offset = 0x4, fixed_abs, tag = 'smem constant byte address 0x4 - core index']
  #allocation1 [shape = 'u32[72,128]{1,0:T(1,128)}', space=vmem, size = 0x9000, scoped, tag = 'internal scratch']
  %s0 = inlined_call_operand.vmem [shape: f32[1,16], index: 0, kind: input, shape index: {}]
  %s1 = inlined_call_operand.vmem [shape: f32[32,16], index: 1, kind: input, shape index: {}]
  %s2 = inlined_call_operand.vmem [shape: f32[16,16], index: 2, kind: input, shape index: {}]
  %s3 = inlined_call_operand.vmem [shape: f32[32,16], index: 3, kind: output, shape index: {}]
  %s4 = sld [smem:[#allocation0]]
  $region22: #{forward.110} parent=0
    _
  %s6 = ssub.s32 1, %s4
  %s7 = scalar_select 0, %s6, %s4
  // Predicated region
  $region2: #{forward.110} parent=0 // pred_check
    _
  $region3: #{forward.110} parent=0 // pred_check_branch
    %9 = sbr.rel (0) target = $region5
  $region4: #{forward.110} parent=0 // pred_region
    _
  $region5: #{forward.110} parent=0 // pred_fallthru
    _
  // Predicated region
  $region6: #{forward.110} parent=0 // pred_check
    _
  $region7: #{forward.110} parent=0 // pred_check_branch
    %11 = sbr.rel (0) target = $region9
  $region8: #{forward.110} parent=0 // pred_region
    _
  $region9: #{forward.110} parent=0 // pred_fallthru
    _
  // Predicated region
  $region10: #{forward.110} parent=0 // pred_check
    _
  $region11: #{forward.110} parent=0 // pred_check_branch
    %13 = sbr.rel (0) target = $region13
  $region12: #{forward.110} parent=0 // pred_region
    _
  $region13: #{forward.110} parent=0 // pred_fallthru
    _
  %v14 = vld [vmem:[%s1] sm:$0xff]
  %v15 = vld [vmem:[%s1 + $0x8] sm:$0xff]
  %v16 = vld [vmem:[%s1 + $0x10] sm:$0xff]
  %v17 = vld [vmem:[%s1 + $0x18] sm:$0xff]
  %v18 = vmax.f32 %v14, 0.0
  %v19 = vmax.f32 %v15, 0.0
  %v20 = vmax.f32 %v16, 0.0
  %v21 = vmax.f32 %v17, 0.0
  %v22 = vld [vmem:[%s2] sm:$0xff]
  %v23 = vld [vmem:[%s2 + $0x8] sm:$0xff]
  %vm24 = vcmask 130048
  %v26 = vsel %vm24, %v18, 0
  %v29 = vsel %vm24, %v19, 0
  %v32 = vsel %vm24, %v20, 0
  %v35 = vsel %vm24, %v21, 0
  %37 = vmatpush.msra.mxu0 0.0
  %38 = vmatpush.msra.mxu0 0.0
  %39 = vmatpush.msra.mxu0 0.0
  %40 = vmatpush.msra.mxu0 0.0
  %41 = vmatpush.msra.mxu0 0.0
  %42 = vmatpush.msra.mxu0 0.0
  %43 = vmatpush.msra.mxu0 0.0
  %44 = vmatpush.msra.mxu0 0.0
  %45 = vmatpush.msra.mxu0 0.0
  %46 = vmatpush.msra.mxu0 0.0
  %47 = vmatpush.msra.mxu0 0.0
  %48 = vmatpush.msra.mxu0 0.0
  %49 = vmatpush.msra.mxu0 0.0
  %50 = vmatpush.msra.mxu0 0.0
  %51 = vmatpush.msra.mxu0 %v23
  %52 = vmatpush.msra.mxu0 %v22
  %53 = vmatmul.f32.gmra.mxu0 %v26
  %v54 = vpop.f32.mrf.mxu0
  %v55 = vadd.f32 0.0, %v54
  %56 = vmatmul.f32.gmra.mxu0 %v29
  %v57 = vpop.f32.mrf.mxu0
  %v58 = vadd.f32 0.0, %v57
  %59 = vmatmul.f32.gmra.mxu0 %v32
  %v60 = vpop.f32.mrf.mxu0
  %v61 = vadd.f32 0.0, %v60
  %62 = vmatmul.f32.gmra.mxu0 %v35
  %v63 = vpop.f32.mrf.mxu0
  %v64 = vadd.f32 0.0, %v63
  %65 = vdwg.mxu0
  %v66 = vsel %vm24, %v55, 0.0
  %v67 = vsel %vm24, %v58, 0.0
  %v68 = vadd.f32 %v66, %v67
  %v69 = vsel %vm24, %v61, 0.0
  %v70 = vadd.f32 %v68, %v69
  %v71 = vsel %vm24, %v64, 0.0
  %v72 = vadd.f32 %v70, %v71
  %v73 = vrot.slane %v72, 4
  %v74 = vadd.f32 %v72, %v73
  %v75 = vrot.slane %v74, 2
  %v76 = vadd.f32 %v74, %v75
  %v77 = vrot.slane %v76, 1
  %v78 = vadd.f32 %v76, %v77
  %v79 = vrcp.pop 32.0
  %v80 = vmul.f32 32.0, %v79
  %v81 = vsub.f32 1.0, %v80
  %v82 = vmul.f32 %v79, %v81
  %v83 = vadd.f32 %v79, %v82
  %vm84 = vweird.f32 %v79
  %v85 = vsel %vm84, %v79, %v83
  %v86 = vmul.f32 %v78, %v85
  %v87 = vsub.f32 %v55, %v86
  %v88 = vsub.f32 %v58, %v86
  %v89 = vsub.f32 %v61, %v86
  %v90 = vsub.f32 %v64, %v86
  %v91 = vmul.f32 %v87, %v87
  %v92 = vmul.f32 %v88, %v88
  %v93 = vmul.f32 %v89, %v89
  %v94 = vmul.f32 %v90, %v90
  %v95 = vsel %vm24, %v91, 0.0
  %v96 = vsel %vm24, %v92, 0.0
  %v97 = vadd.f32 %v95, %v96
  %v98 = vsel %vm24, %v93, 0.0
  %v99 = vadd.f32 %v97, %v98
  %v100 = vsel %vm24, %v94, 0.0
  %v101 = vadd.f32 %v99, %v100
  %v102 = vrot.slane %v101, 4
  %v103 = vadd.f32 %v101, %v102
  %v104 = vrot.slane %v103, 2
  %v105 = vadd.f32 %v103, %v104
  %v106 = vrot.slane %v105, 1
  %v107 = vadd.f32 %v105, %v106
  %v108 = vmul.f32 %v107, %v85
  %v109 = vadd.f32 %v108, 1e-05
  %v110 = vrsqrt.pop %v109
  %v111 = vmul.f32 %v110, %v109
  %v112 = vmul.f32 %v111, %v110
  %v113 = vmul.f32 0.5, %v112
  %v114 = vsub.f32 1.5, %v113
  %v115 = vmul.f32 %v110, %v114
  %vm116 = vweird.f32 %v109
  %vm117 = vweird.f32 %v110
  %vm118 = vmor %vm116, %vm117
  %v119 = vsel %vm118, %v110, %v115
  %v120 = vmul.f32 %v87, %v119
  %v121 = vmul.f32 %v88, %v119
  %v122 = vmul.f32 %v89, %v119
  %v123 = vmul.f32 %v90, %v119
  %v124 = vld [vmem:[%s0] sm:$0x1]
  %v126 = vperm.slane %v124, 0
  %v128 = vmul.f32 %v120, %v126
  %v129 = vmul.f32 %v121, %v126
  %v130 = vmul.f32 %v122, %v126
  %v131 = vmul.f32 %v123, %v126
  %132 = vst.msk [vmem:[%s3] sm:$0xff] %vm24, %v128
  %133 = vst.msk [vmem:[%s3 + $0x8] sm:$0xff] %vm24, %v129
  %134 = vst.msk [vmem:[%s3 + $0x10] sm:$0xff] %vm24, %v130
  %135 = vst.msk [vmem:[%s3 + $0x18] sm:$0xff] %vm24, %v131
  // Predicated region
  $region14: #{forward.110} parent=0 // pred_check
    _
  $region15: #{forward.110} parent=0 // pred_check_branch
    %137 = sbr.rel (0) target = $region17
  $region16: #{forward.110} parent=0 // pred_region
    _
  $region17: #{forward.110} parent=0 // pred_fallthru
    _
  // Predicated region
  $region18: #{forward.110} parent=0 // pred_check
    _
  $region19: #{forward.110} parent=0 // pred_check_branch
    %139 = sbr.rel (0) target = $region21
  $region20: #{forward.110} parent=0 // pred_region
    _
  $region21: #{forward.110} parent=0 // pred_fallthru
    _

// kernel: forward.116
$region0: #{forward.116}
  #allocation0 [shape = 'u32[]', space=smem, size = 0x4, offset = 0x4, fixed_abs, tag = 'smem constant byte address 0x4 - core index']
  #allocation1 [shape = 'u32[72,128]{1,0:T(1,128)}', space=vmem, size = 0x9000, scoped, tag = 'internal scratch']
  %s0 = inlined_call_operand.vmem [shape: f32[1,8], index: 0, kind: input, shape index: {}]
  %s1 = inlined_call_operand.vmem [shape: f32[4,8,8], index: 1, kind: input, shape index: {}]
  %s2 = inlined_call_operand.vmem [shape: f32[8,8], index: 2, kind: output, shape index: {}]
  %s3 = sld [smem:[#allocation0]]
  $region18: #{forward.116} parent=0
    _
  %s5 = ssub.s32 1, %s3
  %s6 = scalar_select 0, %s5, %s3
  // Predicated region
  $region2: #{forward.116} parent=0 // pred_check
    _
  $region3: #{forward.116} parent=0 // pred_check_branch
    %8 = sbr.rel (0) target = $region5
  $region4: #{forward.116} parent=0 // pred_region
    _
  $region5: #{forward.116} parent=0 // pred_fallthru
    _
  // Predicated region
  $region6: #{forward.116} parent=0 // pred_check
    _
  $region7: #{forward.116} parent=0 // pred_check_branch
    %10 = sbr.rel (0) target = $region9
  $region8: #{forward.116} parent=0 // pred_region
    _
  $region9: #{forward.116} parent=0 // pred_fallthru
    _
  %v11 = vld [vmem:[%s1] sm:$0xff]
  %s12 = scalar_lea.vmem %s1, 8
  %v13 = vld [vmem:[%s12] sm:$0xff]
  %v14 = vmax.f32 %v11, %v13
  %s15 = scalar_lea.vmem %s1, 16
  %v16 = vld [vmem:[%s15] sm:$0xff]
  %v17 = vmax.f32 %v14, %v16
  %s18 = scalar_lea.vmem %s1, 24
  %v19 = vld [vmem:[%s18] sm:$0xff]
  %v20 = vmax.f32 %v17, %v19
  %v21 = vld [vmem:[%s0] sm:$0x1]
  %v23 = vperm.slane %v21, 0
  %v25 = vmul.f32 %v20, %v23
  %vm26 = vcmask 64512
  %27 = vst.msk [vmem:[%s2] sm:$0xff] %vm26, %v25
  // Predicated region
  $region10: #{forward.116} parent=0 // pred_check
    _
  $region11: #{forward.116} parent=0 // pred_check_branch
    %29 = sbr.rel (0) target = $region13
  $region12: #{forward.116} parent=0 // pred_region
    _
  $region13: #{forward.116} parent=0 // pred_fallthru
    _
  // Predicated region
  $region14: #{forward.116} parent=0 // pred_check
    _
  $region15: #{forward.116} parent=0 // pred_check_branch
    %31 = sbr.rel (0) target = $region17
  $region16: #{forward.116} parent=0 // pred_region
    _
  $region17: #{forward.116} parent=0 // pred_fallthru
    _

// kernel: forward.122
$region0: #{forward.122}
  #allocation0 [shape = 'u32[]', space=smem, size = 0x4, offset = 0x4, fixed_abs, tag = 'smem constant byte address 0x4 - core index']
  #allocation1 [shape = 'u32[72,128]{1,0:T(1,128)}', space=vmem, size = 0x9000, scoped, tag = 'internal scratch']
  %s0 = inlined_call_operand.vmem [shape: f32[1,8], index: 0, kind: input, shape index: {}]
  %s1 = inlined_call_operand.vmem [shape: f32[8,16], index: 1, kind: input, shape index: {}]
  %s2 = inlined_call_operand.vmem [shape: f32[16,8], index: 2, kind: input, shape index: {}]
  %s3 = inlined_call_operand.vmem [shape: f32[8,8], index: 3, kind: output, shape index: {}]
  %s4 = sld [smem:[#allocation0]]
  $region22: #{forward.122} parent=0
    _
  %s6 = ssub.s32 1, %s4
  %s7 = scalar_select 0, %s6, %s4
  // Predicated region
  $region2: #{forward.122} parent=0 // pred_check
    _
  $region3: #{forward.122} parent=0 // pred_check_branch
    %9 = sbr.rel (0) target = $region5
  $region4: #{forward.122} parent=0 // pred_region
    _
  $region5: #{forward.122} parent=0 // pred_fallthru
    _
  // Predicated region
  $region6: #{forward.122} parent=0 // pred_check
    _
  $region7: #{forward.122} parent=0 // pred_check_branch
    %11 = sbr.rel (0) target = $region9
  $region8: #{forward.122} parent=0 // pred_region
    _
  $region9: #{forward.122} parent=0 // pred_fallthru
    _
  // Predicated region
  $region10: #{forward.122} parent=0 // pred_check
    _
  $region11: #{forward.122} parent=0 // pred_check_branch
    %13 = sbr.rel (0) target = $region13
  $region12: #{forward.122} parent=0 // pred_region
    _
  $region13: #{forward.122} parent=0 // pred_fallthru
    _
  %v14 = vld [vmem:[%s1] sm:$0xff]
  %v15 = vmax.f32 %v14, 0.0
  %v16 = vld [vmem:[%s2] sm:$0xff]
  %v17 = vld [vmem:[%s2 + $0x8] sm:$0xff]
  %vm18 = vcmask 130048
  %v20 = vsel %vm18, %v15, 0
  %22 = vmatpush.msra.mxu0 0.0
  %23 = vmatpush.msra.mxu0 0.0
  %24 = vmatpush.msra.mxu0 0.0
  %25 = vmatpush.msra.mxu0 0.0
  %26 = vmatpush.msra.mxu0 0.0
  %27 = vmatpush.msra.mxu0 0.0
  %28 = vmatpush.msra.mxu0 0.0
  %29 = vmatpush.msra.mxu0 0.0
  %30 = vmatpush.msra.mxu0 0.0
  %31 = vmatpush.msra.mxu0 0.0
  %32 = vmatpush.msra.mxu0 0.0
  %33 = vmatpush.msra.mxu0 0.0
  %34 = vmatpush.msra.mxu0 0.0
  %35 = vmatpush.msra.mxu0 0.0
  %36 = vmatpush.msra.mxu0 %v17
  %37 = vmatpush.msra.mxu0 %v16
  %38 = vmatmul.f32.gmra.mxu0 %v20
  %v39 = vpop.f32.mrf.mxu0
  %v40 = vadd.f32 0.0, %v39
  %41 = vdwg.mxu0
  %vm42 = vcmask 64512
  %v43 = vsel %vm42, %v40, 0.0
  %v44 = vrot.slane %v43, 4
  %v45 = vadd.f32 %v43, %v44
  %v46 = vrot.slane %v45, 2
  %v47 = vadd.f32 %v45, %v46
  %v48 = vrot.slane %v47, 1
  %v49 = vadd.f32 %v47, %v48
  %v50 = vrcp.pop 8.0
  %v51 = vmul.f32 8.0, %v50
  %v52 = vsub.f32 1.0, %v51
  %v53 = vmul.f32 %v50, %v52
  %v54 = vadd.f32 %v50, %v53
  %vm55 = vweird.f32 %v50
  %v56 = vsel %vm55, %v50, %v54
  %v57 = vmul.f32 %v49, %v56
  %v58 = vsub.f32 %v40, %v57
  %v59 = vmul.f32 %v58, %v58
  %v60 = vsel %vm42, %v59, 0.0
  %v61 = vrot.slane %v60, 4
  %v62 = vadd.f32 %v60, %v61
  %v63 = vrot.slane %v62, 2
  %v64 = vadd.f32 %v62, %v63
  %v65 = vrot.slane %v64, 1
  %v66 = vadd.f32 %v64, %v65
  %v67 = vmul.f32 %v66, %v56
  %v68 = vadd.f32 %v67, 1e-05
  %v69 = vrsqrt.pop %v68
  %v70 = vmul.f32 %v69, %v68
  %v71 = vmul.f32 %v70, %v69
  %v72 = vmul.f32 0.5, %v71
  %v73 = vsub.f32 1.5, %v72
  %v74 = vmul.f32 %v69, %v73
  %vm75 = vweird.f32 %v68
  %vm76 = vweird.f32 %v69
  %vm77 = vmor %vm75, %vm76
  %v78 = vsel %vm77, %v69, %v74
  %v79 = vmul.f32 %v58, %v78
  %v80 = vld [vmem:[%s0] sm:$0x1]
  %v82 = vperm.slane %v80, 0
  %v84 = vmul.f32 %v79, %v82
  %85 = vst.msk [vmem:[%s3] sm:$0xff] %vm42, %v84
  // Predicated region
  $region14: #{forward.122} parent=0 // pred_check
    _
  $region15: #{forward.122} parent=0 // pred_check_branch
    %87 = sbr.rel (0) target = $region17
  $region16: #{forward.122} parent=0 // pred_region
    _
  $region17: #{forward.122} parent=0 // pred_fallthru
    _
  // Predicated region
  $region18: #{forward.122} parent=0 // pred_check
    _
  $region19: #{forward.122} parent=0 // pred_check_branch
    %89 = sbr.rel (0) target = $region21
  $region20: #{forward.122} parent=0 // pred_region
    _
  $region21: #{forward.122} parent=0 // pred_fallthru
    _

// kernel: forward.124
$region0: #{forward.124}
  #allocation0 [shape = 'u32[]', space=smem, size = 0x4, offset = 0x4, fixed_abs, tag = 'smem constant byte address 0x4 - core index']
  #allocation1 [shape = 'u32[72,128]{1,0:T(1,128)}', space=vmem, size = 0x9000, scoped, tag = 'internal scratch']
  %s0 = inlined_call_operand.vmem [shape: f32[1,8], index: 0, kind: input, shape index: {}]
  %s1 = inlined_call_operand.vmem [shape: f32[9,8,8], index: 1, kind: input, shape index: {}]
  %s2 = inlined_call_operand.vmem [shape: f32[8,8], index: 2, kind: output, shape index: {}]
  %s3 = sld [smem:[#allocation0]]
  $region18: #{forward.124} parent=0
    _
  %s5 = ssub.s32 1, %s3
  %s6 = scalar_select 0, %s5, %s3
  // Predicated region
  $region2: #{forward.124} parent=0 // pred_check
    _
  $region3: #{forward.124} parent=0 // pred_check_branch
    %8 = sbr.rel (0) target = $region5
  $region4: #{forward.124} parent=0 // pred_region
    _
  $region5: #{forward.124} parent=0 // pred_fallthru
    _
  // Predicated region
  $region6: #{forward.124} parent=0 // pred_check
    _
  $region7: #{forward.124} parent=0 // pred_check_branch
    %10 = sbr.rel (0) target = $region9
  $region8: #{forward.124} parent=0 // pred_region
    _
  $region9: #{forward.124} parent=0 // pred_fallthru
    _
  %v11 = vld [vmem:[%s1] sm:$0xff]
  %s12 = scalar_lea.vmem %s1, 8
  %v13 = vld [vmem:[%s12] sm:$0xff]
  %v14 = vmax.f32 %v11, %v13
  %s15 = scalar_lea.vmem %s1, 16
  %v16 = vld [vmem:[%s15] sm:$0xff]
  %v17 = vmax.f32 %v14, %v16
  %s18 = scalar_lea.vmem %s1, 24
  %v19 = vld [vmem:[%s18] sm:$0xff]
  %v20 = vmax.f32 %v17, %v19
  %s21 = scalar_lea.vmem %s1, 32
  %v22 = vld [vmem:[%s21] sm:$0xff]
  %v23 = vmax.f32 %v20, %v22
  %s24 = scalar_lea.vmem %s1, 40
  %v25 = vld [vmem:[%s24] sm:$0xff]
  %v26 = vmax.f32 %v23, %v25
  %s27 = scalar_lea.vmem %s1, 48
  %v28 = vld [vmem:[%s27] sm:$0xff]
  %v29 = vmax.f32 %v26, %v28
  %s30 = scalar_lea.vmem %s1, 56
  %v31 = vld [vmem:[%s30] sm:$0xff]
  %v32 = vmax.f32 %v29, %v31
  %s33 = scalar_lea.vmem %s1, 64
  %v34 = vld [vmem:[%s33] sm:$0xff]
  %v35 = vmax.f32 %v32, %v34
  %vm36 = vcmask 64512
  %v37 = vsel %vm36, %v35, 0.0
  %v38 = vrot.slane %v37, 4
  %v39 = vadd.f32 %v37, %v38
  %v40 = vrot.slane %v39, 2
  %v41 = vadd.f32 %v39, %v40
  %v42 = vrot.slane %v41, 1
  %v43 = vadd.f32 %v41, %v42
  %v44 = vrcp.pop 8.0
  %v45 = vmul.f32 8.0, %v44
  %v46 = vsub.f32 1.0, %v45
  %v47 = vmul.f32 %v44, %v46
  %v48 = vadd.f32 %v44, %v47
  %vm49 = vweird.f32 %v44
  %v50 = vsel %vm49, %v44, %v48
  %v51 = vmul.f32 %v43, %v50
  %v52 = vsub.f32 %v35, %v51
  %v53 = vmul.f32 %v52, %v52
  %v54 = vsel %vm36, %v53, 0.0
  %v55 = vrot.slane %v54, 4
  %v56 = vadd.f32 %v54, %v55
  %v57 = vrot.slane %v56, 2
  %v58 = vadd.f32 %v56, %v57
  %v59 = vrot.slane %v58, 1
  %v60 = vadd.f32 %v58, %v59
  %v61 = vmul.f32 %v60, %v50
  %v62 = vadd.f32 %v61, 1e-05
  %v63 = vrsqrt.pop %v62
  %v64 = vmul.f32 %v63, %v62
  %v65 = vmul.f32 %v64, %v63
  %v66 = vmul.f32 0.5, %v65
  %v67 = vsub.f32 1.5, %v66
  %v68 = vmul.f32 %v63, %v67
  %vm69 = vweird.f32 %v62
  %vm70 = vweird.f32 %v63
  %vm71 = vmor %vm69, %vm70
  %v72 = vsel %vm71, %v63, %v68
  %v73 = vmul.f32 %v52, %v72
  %v74 = vld [vmem:[%s0] sm:$0x1]
  %v76 = vperm.slane %v74, 0
  %v78 = vmul.f32 %v73, %v76
  %79 = vst.msk [vmem:[%s2] sm:$0xff] %vm36, %v78
  // Predicated region
  $region10: #{forward.124} parent=0 // pred_check
    _
  $region11: #{forward.124} parent=0 // pred_check_branch
    %81 = sbr.rel (0) target = $region13
  $region12: #{forward.124} parent=0 // pred_region
    _
  $region13: #{forward.124} parent=0 // pred_fallthru
    _
  // Predicated region
  $region14: #{forward.124} parent=0 // pred_check
    _
  $region15: #{forward.124} parent=0 // pred_check_branch
    %83 = sbr.rel (0) target = $region17
  $region16: #{forward.124} parent=0 // pred_region
    _
  $region17: #{forward.124} parent=0 // pred_fallthru
    _

// kernel: forward.123
$region0: #{forward.123}
  #allocation0 [shape = 'u32[]', space=smem, size = 0x4, offset = 0x4, fixed_abs, tag = 'smem constant byte address 0x4 - core index']
  #allocation1 [shape = 'u32[72,128]{1,0:T(1,128)}', space=vmem, size = 0x9000, scoped, tag = 'internal scratch']
  %s0 = inlined_call_operand.vmem [shape: f32[1,8], index: 0, kind: input, shape index: {}]
  %s1 = inlined_call_operand.vmem [shape: f32[9,8,8], index: 1, kind: input, shape index: {}]
  %s2 = inlined_call_operand.vmem [shape: f32[8,8], index: 2, kind: input, shape index: {}]
  %s3 = inlined_call_operand.vmem [shape: f32[8,8], index: 3, kind: output, shape index: {}]
  %s4 = sld [smem:[#allocation0]]
  $region22: #{forward.123} parent=0
    _
  %s6 = ssub.s32 1, %s4
  %s7 = scalar_select 0, %s6, %s4
  // Predicated region
  $region2: #{forward.123} parent=0 // pred_check
    _
  $region3: #{forward.123} parent=0 // pred_check_branch
    %9 = sbr.rel (0) target = $region5
  $region4: #{forward.123} parent=0 // pred_region
    _
  $region5: #{forward.123} parent=0 // pred_fallthru
    _
  // Predicated region
  $region6: #{forward.123} parent=0 // pred_check
    _
  $region7: #{forward.123} parent=0 // pred_check_branch
    %11 = sbr.rel (0) target = $region9
  $region8: #{forward.123} parent=0 // pred_region
    _
  $region9: #{forward.123} parent=0 // pred_fallthru
    _
  // Predicated region
  $region10: #{forward.123} parent=0 // pred_check
    _
  $region11: #{forward.123} parent=0 // pred_check_branch
    %13 = sbr.rel (0) target = $region13
  $region12: #{forward.123} parent=0 // pred_region
    _
  $region13: #{forward.123} parent=0 // pred_fallthru
    _
  %v14 = vld [vmem:[%s1] sm:$0xff]
  %s15 = scalar_lea.vmem %s1, 8
  %v16 = vld [vmem:[%s15] sm:$0xff]
  %v17 = vadd.f32 %v14, %v16
  %s18 = scalar_lea.vmem %s1, 16
  %v19 = vld [vmem:[%s18] sm:$0xff]
  %v20 = vadd.f32 %v17, %v19
  %s21 = scalar_lea.vmem %s1, 24
  %v22 = vld [vmem:[%s21] sm:$0xff]
  %v23 = vadd.f32 %v20, %v22
  %s24 = scalar_lea.vmem %s1, 32
  %v25 = vld [vmem:[%s24] sm:$0xff]
  %v26 = vadd.f32 %v23, %v25
  %s27 = scalar_lea.vmem %s1, 40
  %v28 = vld [vmem:[%s27] sm:$0xff]
  %v29 = vadd.f32 %v26, %v28
  %s30 = scalar_lea.vmem %s1, 48
  %v31 = vld [vmem:[%s30] sm:$0xff]
  %v32 = vadd.f32 %v29, %v31
  %s33 = scalar_lea.vmem %s1, 56
  %v34 = vld [vmem:[%s33] sm:$0xff]
  %v35 = vadd.f32 %v32, %v34
  %s36 = scalar_lea.vmem %s1, 64
  %v37 = vld [vmem:[%s36] sm:$0xff]
  %v38 = vadd.f32 %v35, %v37
  %v39 = vld [vmem:[%s2] sm:$0xff]
  %v40 = vmul.f32 %v38, %v39
  %vm41 = vcmask 64512
  %v42 = vsel %vm41, %v40, 0.0
  %v43 = vrot.slane %v42, 4
  %v44 = vadd.f32 %v42, %v43
  %v45 = vrot.slane %v44, 2
  %v46 = vadd.f32 %v44, %v45
  %v47 = vrot.slane %v46, 1
  %v48 = vadd.f32 %v46, %v47
  %v49 = vrcp.pop 8.0
  %v50 = vmul.f32 8.0, %v49
  %v51 = vsub.f32 1.0, %v50
  %v52 = vmul.f32 %v49, %v51
  %v53 = vadd.f32 %v49, %v52
  %vm54 = vweird.f32 %v49
  %v55 = vsel %vm54, %v49, %v53
  %v56 = vmul.f32 %v48, %v55
  %v57 = vsub.f32 %v40, %v56
  %v58 = vmul.f32 %v57, %v57
  %v59 = vsel %vm41, %v58, 0.0
  %v60 = vrot.slane %v59, 4
  %v61 = vadd.f32 %v59, %v60
  %v62 = vrot.slane %v61, 2
  %v63 = vadd.f32 %v61, %v62
  %v64 = vrot.slane %v63, 1
  %v65 = vadd.f32 %v63, %v64
  %v66 = vmul.f32 %v65, %v55
  %v67 = vadd.f32 %v66, 1e-05
  %v68 = vrsqrt.pop %v67
  %v69 = vmul.f32 %v68, %v67
  %v70 = vmul.f32 %v69, %v68
  %v71 = vmul.f32 0.5, %v70
  %v72 = vsub.f32 1.5, %v71
  %v73 = vmul.f32 %v68, %v72
  %vm74 = vweird.f32 %v67
  %vm75 = vweird.f32 %v68
  %vm76 = vmor %vm74, %vm75
  %v77 = vsel %vm76, %v68, %v73
  %v78 = vmul.f32 %v57, %v77
  %v79 = vld [vmem:[%s0] sm:$0x1]
  %v81 = vperm.slane %v79, 0
  %v83 = vmul.f32 %v78, %v81
  %84 = vst.msk [vmem:[%s3] sm:$0xff] %vm41, %v83
  // Predicated region
  $region14: #{forward.123} parent=0 // pred_check
    _
  $region15: #{forward.123} parent=0 // pred_check_branch
    %86 = sbr.rel (0) target = $region17
  $region16: #{forward.123} parent=0 // pred_region
    _
  $region17: #{forward.123} parent=0 // pred_fallthru
    _
  // Predicated region
  $region18: #{forward.123} parent=0 // pred_check
    _
  $region19: #{forward.123} parent=0 // pred_check_branch
    %88 = sbr.rel (0) target = $region21
  $region20: #{forward.123} parent=0 // pred_region
    _
  $region21: #{forward.123} parent=0 // pred_fallthru
    _

// kernel: forward.125
$region0: #{forward.125}
  #allocation0 [shape = 'u32[]', space=smem, size = 0x4, offset = 0x4, fixed_abs, tag = 'smem constant byte address 0x4 - core index']
  #allocation1 [shape = 'u32[72,128]{1,0:T(1,128)}', space=vmem, size = 0x9000, scoped, tag = 'internal scratch']
  %s0 = inlined_call_operand.vmem [shape: f32[1,8], index: 0, kind: input, shape index: {}]
  %s1 = inlined_call_operand.vmem [shape: f32[8,72], index: 1, kind: input, shape index: {}]
  %s2 = inlined_call_operand.vmem [shape: f32[72,8], index: 2, kind: input, shape index: {}]
  %s3 = inlined_call_operand.vmem [shape: f32[8,8], index: 3, kind: output, shape index: {}]
  %s4 = sld [smem:[#allocation0]]
  $region22: #{forward.125} parent=0
    _
  %s6 = ssub.s32 1, %s4
  %s7 = scalar_select 0, %s6, %s4
  // Predicated region
  $region2: #{forward.125} parent=0 // pred_check
    _
  $region3: #{forward.125} parent=0 // pred_check_branch
    %9 = sbr.rel (0) target = $region5
  $region4: #{forward.125} parent=0 // pred_region
    _
  $region5: #{forward.125} parent=0 // pred_fallthru
    _
  // Predicated region
  $region6: #{forward.125} parent=0 // pred_check
    _
  $region7: #{forward.125} parent=0 // pred_check_branch
    %11 = sbr.rel (0) target = $region9
  $region8: #{forward.125} parent=0 // pred_region
    _
  $region9: #{forward.125} parent=0 // pred_fallthru
    _
  // Predicated region
  $region10: #{forward.125} parent=0 // pred_check
    _
  $region11: #{forward.125} parent=0 // pred_check_branch
    %13 = sbr.rel (0) target = $region13
  $region12: #{forward.125} parent=0 // pred_region
    _
  $region13: #{forward.125} parent=0 // pred_fallthru
    _
  %v14 = vld [vmem:[%s1] sm:$0xff]
  %v15 = vmax.f32 %v14, 0.0
  %v16 = vld [vmem:[%s2] sm:$0xff]
  %v17 = vld [vmem:[%s2 + $0x8] sm:$0xff]
  %v18 = vld [vmem:[%s2 + $0x10] sm:$0xff]
  %v19 = vld [vmem:[%s2 + $0x18] sm:$0xff]
  %v20 = vld [vmem:[%s2 + $0x20] sm:$0xff]
  %v21 = vld [vmem:[%s2 + $0x28] sm:$0xff]
  %v22 = vld [vmem:[%s2 + $0x30] sm:$0xff]
  %v23 = vld [vmem:[%s2 + $0x38] sm:$0xff]
  %v24 = vld [vmem:[%s2 + $0x40] sm:$0xff]
  %vm25 = vcmask 588800
  %v27 = vsel %vm25, %v15, 0
  %29 = vmatpush.msra.mxu0 0.0
  %30 = vmatpush.msra.mxu0 0.0
  %31 = vmatpush.msra.mxu0 0.0
  %32 = vmatpush.msra.mxu0 0.0
  %33 = vmatpush.msra.mxu0 0.0
  %34 = vmatpush.msra.mxu0 0.0
  %35 = vmatpush.msra.mxu0 0.0
  %36 = vmatpush.msra.mxu0 %v24
  %37 = vmatpush.msra.mxu0 %v23
  %38 = vmatpush.msra.mxu0 %v22
  %39 = vmatpush.msra.mxu0 %v21
  %40 = vmatpush.msra.mxu0 %v20
  %41 = vmatpush.msra.mxu0 %v19
  %42 = vmatpush.msra.mxu0 %v18
  %43 = vmatpush.msra.mxu0 %v17
  %44 = vmatpush.msra.mxu0 %v16
  %45 = vmatmul.f32.gmra.mxu0 %v27
  %v46 = vpop.f32.mrf.mxu0
  %v47 = vadd.f32 0.0, %v46
  %48 = vdwg.mxu0
  %vm49 = vcmask 64512
  %v50 = vsel %vm49, %v47, 0.0
  %v51 = vrot.slane %v50, 4
  %v52 = vadd.f32 %v50, %v51
  %v53 = vrot.slane %v52, 2
  %v54 = vadd.f32 %v52, %v53
  %v55 = vrot.slane %v54, 1
  %v56 = vadd.f32 %v54, %v55
  %v57 = vrcp.pop 8.0
  %v58 = vmul.f32 8.0, %v57
  %v59 = vsub.f32 1.0, %v58
  %v60 = vmul.f32 %v57, %v59
  %v61 = vadd.f32 %v57, %v60
  %vm62 = vweird.f32 %v57
  %v63 = vsel %vm62, %v57, %v61
  %v64 = vmul.f32 %v56, %v63
  %v65 = vsub.f32 %v47, %v64
  %v66 = vmul.f32 %v65, %v65
  %v67 = vsel %vm49, %v66, 0.0
  %v68 = vrot.slane %v67, 4
  %v69 = vadd.f32 %v67, %v68
  %v70 = vrot.slane %v69, 2
  %v71 = vadd.f32 %v69, %v70
  %v72 = vrot.slane %v71, 1
  %v73 = vadd.f32 %v71, %v72
  %v74 = vmul.f32 %v73, %v63
  %v75 = vadd.f32 %v74, 1e-05
  %v76 = vrsqrt.pop %v75
  %v77 = vmul.f32 %v76, %v75
  %v78 = vmul.f32 %v77, %v76
  %v79 = vmul.f32 0.5, %v78
  %v80 = vsub.f32 1.5, %v79
  %v81 = vmul.f32 %v76, %v80
  %vm82 = vweird.f32 %v75
  %vm83 = vweird.f32 %v76
  %vm84 = vmor %vm82, %vm83
  %v85 = vsel %vm84, %v76, %v81
  %v86 = vmul.f32 %v65, %v85
  %v87 = vld [vmem:[%s0] sm:$0x1]
  %v89 = vperm.slane %v87, 0
  %v91 = vmul.f32 %v86, %v89
  %92 = vst.msk [vmem:[%s3] sm:$0xff] %vm49, %v91
  // Predicated region
  $region14: #{forward.125} parent=0 // pred_check
    _
  $region15: #{forward.125} parent=0 // pred_check_branch
    %94 = sbr.rel (0) target = $region17
  $region16: #{forward.125} parent=0 // pred_region
    _
  $region17: #{forward.125} parent=0 // pred_fallthru
    _
  // Predicated region
  $region18: #{forward.125} parent=0 // pred_check
    _
  $region19: #{forward.125} parent=0 // pred_check_branch
    %96 = sbr.rel (0) target = $region21
  $region20: #{forward.125} parent=0 // pred_region
    _
  $region21: #{forward.125} parent=0 // pred_fallthru
    _

// kernel: forward.133
$region0: #{forward.133}
  #allocation0 [shape = 'u32[]', space=smem, size = 0x4, offset = 0x4, fixed_abs, tag = 'smem constant byte address 0x4 - core index']
  #allocation1 [shape = 'u32[72,128]{1,0:T(1,128)}', space=vmem, size = 0x9000, scoped, tag = 'internal scratch']
  %s0 = inlined_call_operand.vmem [shape: f32[2,4,32], index: 0, kind: input, shape index: {}]
  %s1 = inlined_call_operand.vmem [shape: f32[32,2], index: 1, kind: input, shape index: {}]
  %s2 = inlined_call_operand.vmem [shape: f32[1,2], index: 2, kind: input, shape index: {}]
  %s3 = inlined_call_operand.hbm [shape: f32[2,2], index: 3, kind: output, shape index: {}]
  %s4 = sld [smem:[#allocation0]]
  $region22: #{forward.133} parent=0
    _
  %s6 = ssub.s32 1, %s4
  %s7 = scalar_select 0, %s6, %s4
  $region1: #{forward.133} parent=0
    #allocation2 [shape = 'u8[1024]{0}', space=vmem, size = 0x400, scoped, tag = 'output window, operand 0, single buffered']
    #allocation3 [shape = 's32[1]{0}', space=sflag, size = 0x4, scoped, tag = 'scoped memory for forward.133']
    %8 = vsyncpa [#allocation3], 0
    // Predicated region
    $region2: #{forward.133} parent=1 // pred_check
      _
    $region3: #{forward.133} parent=1 // pred_check_branch
      %10 = sbr.rel (0) target = $region5
    $region4: #{forward.133} parent=1 // pred_region
      _
    $region5: #{forward.133} parent=1 // pred_fallthru
      _
    // Predicated region
    $region6: #{forward.133} parent=1 // pred_check
      _
    $region7: #{forward.133} parent=1 // pred_check_branch
      %12 = sbr.rel (0) target = $region9
    $region8: #{forward.133} parent=1 // pred_region
      _
    $region9: #{forward.133} parent=1 // pred_fallthru
      _
    // Predicated region
    $region10: #{forward.133} parent=1 // pred_check
      _
    $region11: #{forward.133} parent=1 // pred_check_branch
      %14 = sbr.rel (0) target = $region13
    $region12: #{forward.133} parent=1 // pred_region
      _
    $region13: #{forward.133} parent=1 // pred_fallthru
      _
    %v15 = vld [vmem:[%s0] sm:$0xf]
    %v16 = vld [vmem:[%s0 + $0x4] sm:$0xf]
    %vm17 = vcmask 257024
    %v18 = vsel %vm17, %v15, 0.0
    %v19 = vrot.slane %v18, 4
    %v20 = vadd.f32 %v18, %v19
    %v21 = vrot.slane %v20, 2
    %v22 = vadd.f32 %v20, %v21
    %v23 = vrot.slane %v22, 1
    %v24 = vadd.f32 %v22, %v23
    %v25 = vsel %vm17, %v16, 0.0
    %v26 = vrot.slane %v25, 4
    %v27 = vadd.f32 %v25, %v26
    %v28 = vrot.slane %v27, 2
    %v29 = vadd.f32 %v27, %v28
    %v30 = vrot.slane %v29, 1
    %v31 = vadd.f32 %v29, %v30
    %v32 = vrcp.pop 4.0
    %v33 = vmul.f32 4.0, %v32
    %v34 = vsub.f32 1.0, %v33
    %v35 = vmul.f32 %v32, %v34
    %v36 = vadd.f32 %v32, %v35
    %vm37 = vweird.f32 %v32
    %v38 = vsel %vm37, %v32, %v36
    %v39 = vmul.f32 %v24, %v38
    %v40 = vmul.f32 %v31, %v38
    %v41 = vld [vmem:[%s1] sm:$0xff]
    %v42 = vld [vmem:[%s1 + $0x8] sm:$0xff]
    %v43 = vld [vmem:[%s1 + $0x10] sm:$0xff]
    %v44 = vld [vmem:[%s1 + $0x18] sm:$0xff]
    %v45 = vld [vmem:[%s2] sm:$0x1]
    %v47 = vperm.slane %v45, 0
    %vm51 = vcmask 1041409
    %v52 = vsel %vm51, %v40, %v39
    %vm53 = vcmask 261120
    %v54 = vsel %vm53, %v52, 0
    %56 = vmatpush.msra.mxu0 0.0
    %57 = vmatpush.msra.mxu0 0.0
    %58 = vmatpush.msra.mxu0 0.0
    %59 = vmatpush.msra.mxu0 0.0
    %60 = vmatpush.msra.mxu0 0.0
    %61 = vmatpush.msra.mxu0 0.0
    %62 = vmatpush.msra.mxu0 0.0
    %63 = vmatpush.msra.mxu0 0.0
    %64 = vmatpush.msra.mxu0 0.0
    %65 = vmatpush.msra.mxu0 0.0
    %66 = vmatpush.msra.mxu0 0.0
    %67 = vmatpush.msra.mxu0 0.0
    %68 = vmatpush.msra.mxu0 %v44
    %69 = vmatpush.msra.mxu0 %v43
    %70 = vmatpush.msra.mxu0 %v42
    %71 = vmatpush.msra.mxu0 %v41
    %72 = vmatmul.f32.gmra.mxu0 %v54
    %v73 = vpop.f32.mrf.mxu0
    %v74 = vadd.f32 %v47, %v73
    %75 = vdwg.mxu0
    %vm76 = vcmask 9216
    %77 = vst.msk [vmem:[#allocation2] sm:$0x3] %vm76, %v74
    // Predicated region
    $region14: #{forward.133} parent=1 // pred_check
      _
    $region15: #{forward.133} parent=1 // pred_check_branch
      %79 = sbr.rel (0) target = $region17
    $region16: #{forward.133} parent=1 // pred_region
      %81 = vsyncadd [#allocation3], 0
      %s83 = sshll.u32 [#allocation2], 4
      %s84 = int_to_ptr.vmem [resolvable:$true] %s83
      %s85 = sshll.u32 %s3, 4
      %s86 = int_to_ptr.hbm [resolvable:$true] %s85
      %88 = dma.vmem_to_hbm [thread:$0]  %s84, 32, %s86, [#allocation3]
    $region17: #{forward.133} parent=1 // pred_fallthru
      _
    // Predicated region
    $region18: #{forward.133} parent=1 // pred_check
      _
    $region19: #{forward.133} parent=1 // pred_check_branch
      %90 = sbr.rel (0) target = $region21
    $region20: #{forward.133} parent=1 // pred_region
      %92 = dma.done [#allocation3], 32
    $region21: #{forward.133} parent=1 // pred_fallthru
      _
    %93 = vsyncpa [#allocation3], 1

</llo_original>
